<compile_context>
chip_gen: v7x
topology: tpu7x:2x2x1
jax: 0.10.0
libtpu: 0.0.40
codegen_flags: <defaults>
</compile_context>

<pallas_src>
import functools
import numpy as np
import jax
import jax.numpy as jnp
from jax.experimental import pallas as pl
from jax.experimental.pallas import tpu as pltpu

EMB = 32           # emb_dim
FF = 64            # ff_dim
NHEAD = 4
HEAD_DIM = EMB // NHEAD
LN_EPS = 1e-5
NEG_MASK = -1e30   # additive mask value (key padding + cross-batch)

_PRECISION = jax.lax.Precision.DEFAULT   # pinned: single-pass bf16 MXU on all TPU gens


# ---------------------------------------------------------------------------
# In-kernel math helpers (traced inside the Pallas kernel body)
# ---------------------------------------------------------------------------
def _recip(x):
    # EUP approximate reciprocal + one Newton step -> ~f32 accuracy, no VALU divide.
    r = pl.reciprocal(x, approx=True)
    return r * (2.0 - x * r)


def _erf(x):
    # Abramowitz & Stegun 7.1.26, |err| < 1.5e-7. exp + reciprocal both land on the EUP.
    a1, a2, a3, a4, a5 = 0.254829592, -0.284496736, 1.421413741, -1.453152027, 1.061405429
    p = 0.3275911
    s = jnp.where(x >= 0.0, 1.0, -1.0)
    ax = jnp.abs(x)
    t = _recip(1.0 + p * ax)                       # EUP instead of VALU divide
    poly = ((((a5 * t + a4) * t + a3) * t + a2) * t + a1) * t
    return s * (1.0 - poly * jnp.exp(-ax * ax))


def _gelu_exact(x):
    # PyTorch nn.GELU() default (approximate='none'): 0.5*x*(1+erf(x/sqrt(2)))
    return 0.5 * x * (1.0 + _erf(x * np.float32(1.0 / np.sqrt(2.0))))


def _layernorm(z, g, b):
    mu = jnp.mean(z, axis=-1, keepdims=True)
    var = jnp.mean((z - mu) ** 2, axis=-1, keepdims=True)
    return (z - mu) * jax.lax.rsqrt(var + LN_EPS) * g + b


def _dot(a, b):
    return jnp.dot(a, b, preferred_element_type=jnp.float32, precision=_PRECISION)


# ---------------------------------------------------------------------------
# Pallas kernel: full TransformerCrossEncoderLayer in one invocation.
#   Activations are seq-major batch-flattened: x -> (Sx*B, E), y -> (Sy*B, E).
#   mxy / myx are precomputed additive attention masks (cross-batch + key padding).
#   Per-tensor fused QKV weights are stacked on a leading axis of size 2
#   (index 0 = applied to x, 1 = applied to y); all other per-side weights are
#   stacked on a leading axis of size 2 (0 = x path, 1 = y path).
# ---------------------------------------------------------------------------
def cross_encoder_kernel(x_ref, y_ref, mxy_ref, myx_ref,
                         wqkv_ref, bqkv_ref, wo_ref, bo_ref,
                         wd_ref, bd_ref, g1_ref, b1_ref,
                         wi_ref, bi_ref, wf_ref, bf_ref,
                         g2_ref, b2_ref,
                         ox_ref, oy_ref):
    x = x_ref[...]          # (Sx*B, E) f32
    y = y_ref[...]          # (Sy*B, E) f32

    # One fused, lane-dense (N=3E=96) projection per tensor:
    #   qkv_x = [Q for x->y attn | K for y->x attn | V for y->x attn]
    #   qkv_y = [Q for y->x attn | K for x->y attn | V for x->y attn]
    # 1/sqrt(head_dim) is already folded into the Q columns (weights and bias).
    qkv_x = _dot(x, wqkv_ref[0]) + bqkv_ref[0]      # (Sx*B, 3E)
    qkv_y = _dot(y, wqkv_ref[1]) + bqkv_ref[1]      # (Sy*B, 3E)

    def attend(q_all, kv_all, mask, wo, bo):
        # q_all: (nq, 3E) (Q in first E cols); kv_all: (nk, 3E) (K, V in last 2E cols)
        # mask : (nq, nk) additive f32, built once in the wrapper, reused across heads.
        heads = []
        for h in range(NHEAD):                      # static lane slices of the fused QKV
            qh = q_all[:, h * HEAD_DIM:(h + 1) * HEAD_DIM]                     # (nq, hd)
            kh = kv_all[:, EMB + h * HEAD_DIM: EMB + (h + 1) * HEAD_DIM]       # (nk, hd)
            vh = kv_all[:, 2 * EMB + h * HEAD_DIM: 2 * EMB + (h + 1) * HEAD_DIM]
            s = _dot(qh, kh.T) + mask                                          # (nq, nk)
            m = jnp.max(s, axis=-1, keepdims=True)
            e = jnp.exp(s - m)
            p = e * _recip(jnp.sum(e, axis=-1, keepdims=True))
            heads.append(_dot(p, vh))                                          # (nq, hd)
        ctx = jnp.concatenate(heads, axis=-1)       # lane concat -> (nq, E)
        return _dot(ctx, wo) + bo                   # single K=E output projection

    mxy = mxy_ref[...]      # mask for x attending to y   (Sx*B, Sy*B)
    myx = myx_ref[...]      # mask for y attending to x   (Sy*B, Sx*B)

    # cross attention (norm_first=False => norm_x/norm_y layers are unused)
    mha_x = attend(qkv_x, qkv_y, mxy, wo_ref[0], bo_ref[0])
    mha_y = attend(qkv_y, qkv_x, myx, wo_ref[1], bo_ref[1])

    # dense_x_to_y / dense_y_to_x: LayerNorm(residual + Linear(mha))
    attn_x = _layernorm(x + _dot(mha_x, wd_ref[0]) + bd_ref[0], g1_ref[0], b1_ref[0])
    attn_y = _layernorm(y + _dot(mha_y, wd_ref[1]) + bd_ref[1], g1_ref[1], b1_ref[1])

    # intermediate: GELU(Linear(emb->ff))
    inter_x = _gelu_exact(_dot(attn_x, wi_ref[0]) + bi_ref[0])
    inter_y = _gelu_exact(_dot(attn_y, wi_ref[1]) + bi_ref[1])

    # output: LayerNorm(residual + Linear(ff->emb))
    out_x = _layernorm(attn_x + _dot(inter_x, wf_ref[0]) + bf_ref[0], g2_ref[0], b2_ref[0])
    out_y = _layernorm(attn_y + _dot(inter_y, wf_ref[1]) + bf_ref[1], g2_ref[1], b2_ref[1])

    ox_ref[...] = out_x
    oy_ref[...] = out_y


# ---------------------------------------------------------------------------
# Parameter preparation (wrapper side, folds under jit)
# ---------------------------------------------------------------------------
_SIDE_WEIGHT_NAMES = ["wd", "bd", "g1", "b1", "wi", "bi", "wf", "bf", "g2", "b2"]


def prepare_kernel_params(params):
    """Builds the fused per-tensor QKV weights (scale folded into Q) + stacks the rest."""
    scale = np.float32(1.0 / np.sqrt(HEAD_DIM))
    wqkv = params["wqkv"]                 # (2, E, 3E)  (in, out) layout; side 0 = x->y MHA
    bqkv = params["bqkv"]                 # (2, 1, 3E)

    def fused(side_q, side_kv, arr):
        return jnp.concatenate([arr[side_q, :, :EMB] * scale,        # Q (scaled)
                                arr[side_kv, :, EMB:2 * EMB],        # K
                                arr[side_kv, :, 2 * EMB:]], axis=-1)  # V

    # Applied to x: Q of mha_x_to_y (side 0) + K,V of mha_y_to_x (side 1); y symmetric.
    wqkv_f = jnp.stack([fused(0, 1, wqkv), fused(1, 0, wqkv)])        # (2, E, 3E)
    bqkv_f = jnp.stack([fused(0, 1, bqkv), fused(1, 0, bqkv)])        # (2, 1, 3E)

    return [wqkv_f, bqkv_f, params["wo"], params["bo"]] + \
           [params[n] for n in _SIDE_WEIGHT_NAMES]


def _build_additive_mask(key_padding_mask, s_q, s_k, batch):
    """Additive mask for seq-major batch-flattened attention.

    Row r = query (q = r // batch, b = r % batch); col c = key (k = c // batch,
    b' = c % batch).  Masked (=NEG_MASK) iff b != b' (cross-batch) or key (b', k) padded.
    """
    n_q, n_k = s_q * batch, s_k * batch
    qb = jnp.arange(n_q, dtype=jnp.int32) % batch
    kb = jnp.arange(n_k, dtype=jnp.int32) % batch
    cross = qb[:, None] != kb[None, :]
    kpm_flat = jnp.transpose(key_padding_mask.astype(bool)).reshape(n_k)   # idx = k*B + b'
    bad = cross | kpm_flat[None, :]
    return jnp.where(bad, NEG_MASK, 0.0).astype(jnp.float32)


# ---------------------------------------------------------------------------
# Wrapper: PyTorch (seq, batch, emb) convention, flattened seq-major (free reshape)
# ---------------------------------------------------------------------------
def combined_encoder_layer(x_sbe, y_sbe, x_kpm, y_kpm, params):
    """x_sbe: (Sx, B, E), y_sbe: (Sy, B, E); *_kpm: (B, S) bool, True = padded key."""
    Sx, B, E = x_sbe.shape
    Sy = y_sbe.shape[0]
    assert E == EMB

    # (seq, batch, emb) -> (seq*batch, emb): contiguous reshape, no transpose, no copy.
    x2 = x_sbe.astype(jnp.float32).reshape(Sx * B, E)
    y2 = y_sbe.astype(jnp.float32).reshape(Sy * B, E)

    # Additive masks built once (tiny) and reused across all heads inside the kernel.
    mask_xy = _build_additive_mask(y_kpm, Sx, Sy, B)   # x queries attend to y keys
    mask_yx = _build_additive_mask(x_kpm, Sy, Sx, B)   # y queries attend to x keys

    w_args = prepare_kernel_params(params)
    operands = [x2, y2, mask_xy, mask_yx] + w_args

    def full_spec(a):
        nd = a.ndim
        return pl.BlockSpec(a.shape, lambda i, _nd=nd: (0,) * _nd)

    in_specs = [full_spec(a) for a in operands]
    out_specs = [
        pl.BlockSpec((Sx * B, E), lambda i: (0, 0)),
        pl.BlockSpec((Sy * B, E), lambda i: (0, 0)),
    ]
    out_shape = [
        jax.ShapeDtypeStruct((Sx * B, E), jnp.float32),
        jax.ShapeDtypeStruct((Sy * B, E), jnp.float32),
    ]

    ox2, oy2 = pl.pallas_call(
        cross_encoder_kernel,
        grid=(1,),
        in_specs=in_specs,
        out_specs=out_specs,
        out_shape=out_shape,
        compiler_params=pltpu.CompilerParams(dimension_semantics=("arbitrary",)),
    )(*operands)

    # back to (seq, batch, emb): again a free contiguous reshape
    return ox2.reshape(Sx, B, E), oy2.reshape(Sy, B, E)


# ---------------------------------------------------------------------------
# Pure-JAX reference (mirrors PyTorch semantics) for verification
# ---------------------------------------------------------------------------
def ref_forward(x_sbe, y_sbe, x_kpm, y_kpm, params):
    x = jnp.transpose(x_sbe, (1, 0, 2)).astype(jnp.float32)
    y = jnp.transpose(y_sbe, (1, 0, 2)).astype(jnp.float32)
    mx = jnp.where(x_kpm, NEG_MASK, 0.0)[:, None, None, :]
    my = jnp.where(y_kpm, NEG_MASK, 0.0)[:, None, None, :]

    def mha(q_in, kv_in, mask, s):
        wqkv = params["wqkv"][s]
        bqkv = params["bqkv"][s][0]
        q = q_in @ wqkv[:, :EMB] + bqkv[:EMB]
        k = kv_in @ wqkv[:, EMB:2 * EMB] + bqkv[EMB:2 * EMB]
        v = kv_in @ wqkv[:, 2 * EMB:] + bqkv[2 * EMB:]
        B, Sq, _ = q.shape
        Sk = k.shape[1]
        qh = q.reshape(B, Sq, NHEAD, HEAD_DIM).transpose(0, 2, 1, 3)
        kh = k.reshape(B, Sk, NHEAD, HEAD_DIM).transpose(0, 2, 1, 3)
        vh = v.reshape(B, Sk, NHEAD, HEAD_DIM).transpose(0, 2, 1, 3)
        sc = jnp.einsum("bhqd,bhkd->bhqk", qh, kh) / np.sqrt(HEAD_DIM) + mask
        p = jax.nn.softmax(sc, axis=-1)
        o = jnp.einsum("bhqk,bhkd->bhqd", p, vh).transpose(0, 2, 1, 3).reshape(B, Sq, EMB)
        return o @ params["wo"][s] + params["bo"][s][0]

    def ln(z, g, b):
        mu = z.mean(-1, keepdims=True)
        var = ((z - mu) ** 2).mean(-1, keepdims=True)
        return (z - mu) / jnp.sqrt(var + LN_EPS) * g + b

    mha_x = mha(x, y, my, 0)
    mha_y = mha(y, x, mx, 1)
    attn_x = ln(x + mha_x @ params["wd"][0] + params["bd"][0][0], params["g1"][0][0], params["b1"][0][0])
    attn_y = ln(y + mha_y @ params["wd"][1] + params["bd"][1][0], params["g1"][1][0], params["b1"][1][0])
    ix = jax.nn.gelu(attn_x @ params["wi"][0] + params["bi"][0][0], approximate=False)
    iy = jax.nn.gelu(attn_y @ params["wi"][1] + params["bi"][1][0], approximate=False)
    out_x = ln(attn_x + ix @ params["wf"][0] + params["bf"][0][0], params["g2"][0][0], params["b2"][0][0])
    out_y = ln(attn_y + iy @ params["wf"][1] + params["bf"][1][0], params["g2"][1][0], params["b2"][1][0])
    return jnp.transpose(out_x, (1, 0, 2)), jnp.transpose(out_y, (1, 0, 2))


# ---------------------------------------------------------------------------
if __name__ == "__main__":
    key = jax.random.PRNGKey(0)
    B, Sx, Sy = 2, 8, 16

    keys = jax.random.split(key, 20)
    _ki = iter(keys)

    def w(shape, scale=0.05):
        return jax.random.normal(next(_ki), shape, jnp.float32) * scale

    # Stacked parameters: leading axis = side (0: x->y path, 1: y->x path).
    # Linear weights are already transposed to (in, out); biases / LN params are (1, N).
    params = {
        "wqkv": w((2, EMB, 3 * EMB)),          # MHA in_proj (transposed)
        "bqkv": w((2, 1, 3 * EMB), 0.02),
        "wo":   w((2, EMB, EMB)),              # MHA out_proj
        "bo":   w((2, 1, EMB), 0.02),
        "wd":   w((2, EMB, EMB)),              # dense_x_to_y / dense_y_to_x linear
        "bd":   w((2, 1, EMB), 0.02),
        "g1":   1.0 + w((2, 1, EMB), 0.1),     # dense LayerNorm gamma
        "b1":   w((2, 1, EMB), 0.1),           # dense LayerNorm beta
        "wi":   w((2, EMB, FF)),               # intermediate1 / intermediate2 linear
        "bi":   w((2, 1, FF), 0.02),
        "wf":   w((2, FF, EMB)),               # output1 / output2 linear
        "bf":   w((2, 1, EMB), 0.02),
        "g2":   1.0 + w((2, 1, EMB), 0.1),     # output LayerNorm gamma
        "b2":   w((2, 1, EMB), 0.1),           # output LayerNorm beta
    }

    x = jax.random.normal(next(_ki), (Sx, B, EMB), jnp.float32)   # (seq, batch, emb)
    y = jax.random.normal(next(_ki), (Sy, B, EMB), jnp.float32)
    x_kpm = jnp.zeros((B, Sx), dtype=bool).at[1, -2:].set(True)   # True = padded key
    y_kpm = jnp.zeros((B, Sy), dtype=bool).at[0, -4:].set(True)

    fwd = jax.jit(combined_encoder_layer)
    ox, oy = fwd(x, y, x_kpm, y_kpm, params)
    jax.block_until_ready((ox, oy))

    rx, ry = ref_forward(x, y, x_kpm, y_kpm, params)
    np.testing.assert_allclose(np.asarray(ox), np.asarray(rx), rtol=2e-4, atol=2e-4)
    np.testing.assert_allclose(np.asarray(oy), np.asarray(ry), rtol=2e-4, atol=2e-4)

    # TODO(synk): if a row's key_padding_mask is all-True, PyTorch yields NaN attention;
    # the finite -1e30 mask here yields uniform weights instead (unreached in this test).

    print("KERNEL_OK")
</pallas_src>

<mosaic_0001>
module attributes {stable_mosaic.version = 11 : i64} {
  func.func @cross_encoder_kernel(%arg0: i32, %arg1: memref<16x32xf32, #tpu.memory_space<vmem>>, %arg2: memref<32x32xf32, #tpu.memory_space<vmem>>, %arg3: memref<16x32xf32, #tpu.memory_space<vmem>>, %arg4: memref<32x16xf32, #tpu.memory_space<vmem>>, %arg5: memref<2x32x96xf32, #tpu.memory_space<vmem>>, %arg6: memref<2x1x96xf32, #tpu.memory_space<vmem>>, %arg7: memref<2x32x32xf32, #tpu.memory_space<vmem>>, %arg8: memref<2x1x32xf32, #tpu.memory_space<vmem>>, %arg9: memref<2x32x32xf32, #tpu.memory_space<vmem>>, %arg10: memref<2x1x32xf32, #tpu.memory_space<vmem>>, %arg11: memref<2x1x32xf32, #tpu.memory_space<vmem>>, %arg12: memref<2x1x32xf32, #tpu.memory_space<vmem>>, %arg13: memref<2x32x64xf32, #tpu.memory_space<vmem>>, %arg14: memref<2x1x64xf32, #tpu.memory_space<vmem>>, %arg15: memref<2x64x32xf32, #tpu.memory_space<vmem>>, %arg16: memref<2x1x32xf32, #tpu.memory_space<vmem>>, %arg17: memref<2x1x32xf32, #tpu.memory_space<vmem>>, %arg18: memref<2x1x32xf32, #tpu.memory_space<vmem>>, %arg19: memref<16x32xf32, #tpu.memory_space<vmem>>, %arg20: memref<32x32xf32, #tpu.memory_space<vmem>>) attributes {dimension_semantics = [#tpu.dimension_semantics<arbitrary>], iteration_bounds = array<i64: 1>, scalar_prefetch = 0 : i64, scratch_operands = 0 : i64, tpu.core_type = #tpu.core_type<tc>, window_params = [{pipeline_mode = #tpu.pipeline_mode<synchronous>, transform_indices = @transform_0, window_bounds = array<i64: 16, 32>}, {pipeline_mode = #tpu.pipeline_mode<synchronous>, transform_indices = @transform_1, window_bounds = array<i64: 32, 32>}, {pipeline_mode = #tpu.pipeline_mode<synchronous>, transform_indices = @transform_2, window_bounds = array<i64: 16, 32>}, {pipeline_mode = #tpu.pipeline_mode<synchronous>, transform_indices = @transform_3, window_bounds = array<i64: 32, 16>}, {pipeline_mode = #tpu.pipeline_mode<synchronous>, transform_indices = @transform_4, window_bounds = array<i64: 2, 32, 96>}, {pipeline_mode = #tpu.pipeline_mode<synchronous>, transform_indices = @transform_5, window_bounds = array<i64: 2, 1, 96>}, {pipeline_mode = #tpu.pipeline_mode<synchronous>, transform_indices = @transform_6, window_bounds = array<i64: 2, 32, 32>}, {pipeline_mode = #tpu.pipeline_mode<synchronous>, transform_indices = @transform_7, window_bounds = array<i64: 2, 1, 32>}, {pipeline_mode = #tpu.pipeline_mode<synchronous>, transform_indices = @transform_8, window_bounds = array<i64: 2, 32, 32>}, {pipeline_mode = #tpu.pipeline_mode<synchronous>, transform_indices = @transform_9, window_bounds = array<i64: 2, 1, 32>}, {pipeline_mode = #tpu.pipeline_mode<synchronous>, transform_indices = @transform_10, window_bounds = array<i64: 2, 1, 32>}, {pipeline_mode = #tpu.pipeline_mode<synchronous>, transform_indices = @transform_11, window_bounds = array<i64: 2, 1, 32>}, {pipeline_mode = #tpu.pipeline_mode<synchronous>, transform_indices = @transform_12, window_bounds = array<i64: 2, 32, 64>}, {pipeline_mode = #tpu.pipeline_mode<synchronous>, transform_indices = @transform_13, window_bounds = array<i64: 2, 1, 64>}, {pipeline_mode = #tpu.pipeline_mode<synchronous>, transform_indices = @transform_14, window_bounds = array<i64: 2, 64, 32>}, {pipeline_mode = #tpu.pipeline_mode<synchronous>, transform_indices = @transform_15, window_bounds = array<i64: 2, 1, 32>}, {pipeline_mode = #tpu.pipeline_mode<synchronous>, transform_indices = @transform_16, window_bounds = array<i64: 2, 1, 32>}, {pipeline_mode = #tpu.pipeline_mode<synchronous>, transform_indices = @transform_17, window_bounds = array<i64: 2, 1, 32>}, {pipeline_mode = #tpu.pipeline_mode<synchronous>, transform_indices = @transform_18, window_bounds = array<i64: 16, 32>}, {pipeline_mode = #tpu.pipeline_mode<synchronous>, transform_indices = @transform_19, window_bounds = array<i64: 32, 32>}]} {
    %c0 = arith.constant 0 : index
    %c0_0 = arith.constant 0 : index
    %0 = vector.load %arg1[%c0, %c0_0] : memref<16x32xf32, #tpu.memory_space<vmem>>, vector<16x32xf32>
    %c0_1 = arith.constant 0 : index
    %c0_2 = arith.constant 0 : index
    %1 = vector.load %arg2[%c0_1, %c0_2] : memref<32x32xf32, #tpu.memory_space<vmem>>, vector<32x32xf32>
    %c0_3 = arith.constant 0 : index
    %c0_4 = arith.constant 0 : index
    %c0_5 = arith.constant 0 : index
    %2 = vector.load %arg5[%c0_3, %c0_4, %c0_5] : memref<2x32x96xf32, #tpu.memory_space<vmem>>, vector<1x32x96xf32>
    %3 = vector.shape_cast %2 : vector<1x32x96xf32> to vector<32x96xf32>
    %cst = arith.constant dense<0.000000e+00> : vector<16x96xf32>
    %4 = tpu.matmul %0, %3, %cst {dimension_numbers = #tpu.dot_dimension_numbers<[1], [0], [0], [1], [0, 0, 1, 1], [], []>} : vector<16x32xf32>, vector<32x96xf32>, vector<16x96xf32> -> vector<16x96xf32>
    %c0_6 = arith.constant 0 : index
    %c0_7 = arith.constant 0 : index
    %c0_8 = arith.constant 0 : index
    %5 = vector.load %arg6[%c0_6, %c0_7, %c0_8] : memref<2x1x96xf32, #tpu.memory_space<vmem>>, vector<1x1x96xf32>
    %6 = vector.shape_cast %5 : vector<1x1x96xf32> to vector<1x96xf32>
    %7 = vector.broadcast %6 : vector<1x96xf32> to vector<16x96xf32>
    %8 = arith.addf %4, %7 : vector<16x96xf32>
    %c1 = arith.constant 1 : index
    %c0_9 = arith.constant 0 : index
    %c0_10 = arith.constant 0 : index
    %9 = vector.load %arg5[%c1, %c0_9, %c0_10] : memref<2x32x96xf32, #tpu.memory_space<vmem>>, vector<1x32x96xf32>
    %10 = vector.shape_cast %9 : vector<1x32x96xf32> to vector<32x96xf32>
    %cst_11 = arith.constant dense<0.000000e+00> : vector<32x96xf32>
    %11 = tpu.matmul %1, %10, %cst_11 {dimension_numbers = #tpu.dot_dimension_numbers<[1], [0], [0], [1], [0, 0, 1, 1], [], []>} : vector<32x32xf32>, vector<32x96xf32>, vector<32x96xf32> -> vector<32x96xf32>
    %c1_12 = arith.constant 1 : index
    %c0_13 = arith.constant 0 : index
    %c0_14 = arith.constant 0 : index
    %12 = vector.load %arg6[%c1_12, %c0_13, %c0_14] : memref<2x1x96xf32, #tpu.memory_space<vmem>>, vector<1x1x96xf32>
    %13 = vector.shape_cast %12 : vector<1x1x96xf32> to vector<1x96xf32>
    %14 = vector.broadcast %13 : vector<1x96xf32> to vector<32x96xf32>
    %15 = arith.addf %11, %14 : vector<32x96xf32>
    %c0_15 = arith.constant 0 : index
    %c0_16 = arith.constant 0 : index
    %16 = vector.load %arg3[%c0_15, %c0_16] : memref<16x32xf32, #tpu.memory_space<vmem>>, vector<16x32xf32>
    %c0_17 = arith.constant 0 : index
    %c0_18 = arith.constant 0 : index
    %17 = vector.load %arg4[%c0_17, %c0_18] : memref<32x16xf32, #tpu.memory_space<vmem>>, vector<32x16xf32>
    %c0_19 = arith.constant 0 : index
    %c0_20 = arith.constant 0 : index
    %c0_21 = arith.constant 0 : index
    %18 = vector.load %arg7[%c0_19, %c0_20, %c0_21] : memref<2x32x32xf32, #tpu.memory_space<vmem>>, vector<1x32x32xf32>
    %19 = vector.shape_cast %18 : vector<1x32x32xf32> to vector<32x32xf32>
    %c0_22 = arith.constant 0 : index
    %c0_23 = arith.constant 0 : index
    %c0_24 = arith.constant 0 : index
    %20 = vector.load %arg8[%c0_22, %c0_23, %c0_24] : memref<2x1x32xf32, #tpu.memory_space<vmem>>, vector<1x1x32xf32>
    %21 = vector.shape_cast %20 : vector<1x1x32xf32> to vector<1x32xf32>
    %22 = vector.extract_strided_slice %8 {offsets = [0, 0], sizes = [16, 8], strides = [1, 1]} : vector<16x96xf32> to vector<16x8xf32>
    %23 = vector.extract_strided_slice %15 {offsets = [0, 32], sizes = [32, 8], strides = [1, 1]} : vector<32x96xf32> to vector<32x8xf32>
    %24 = vector.extract_strided_slice %15 {offsets = [0, 64], sizes = [32, 8], strides = [1, 1]} : vector<32x96xf32> to vector<32x8xf32>
    %25 = tpu.transpose %23, [1, 0] : vector<32x8xf32> -> vector<8x32xf32>
    %cst_25 = arith.constant dense<0.000000e+00> : vector<16x32xf32>
    %26 = tpu.matmul %22, %25, %cst_25 {dimension_numbers = #tpu.dot_dimension_numbers<[1], [0], [0], [1], [0, 0, 1, 1], [], []>} : vector<16x8xf32>, vector<8x32xf32>, vector<16x32xf32> -> vector<16x32xf32>
    %27 = arith.addf %26, %16 : vector<16x32xf32>
    %cst_26 = arith.constant dense<0xFF800000> : vector<16xf32>
    %28 = vector.multi_reduction <maximumf>, %27, %cst_26 [1] : vector<16x32xf32> to vector<16xf32>
    %29 = vector.shape_cast %28 : vector<16xf32> to vector<16x1xf32>
    %30 = vector.broadcast %29 : vector<16x1xf32> to vector<16x32xf32>
    %31 = arith.subf %27, %30 : vector<16x32xf32>
    %32 = math.exp %31 : vector<16x32xf32>
    %cst_27 = arith.constant dense<0.000000e+00> : vector<16xf32>
    %33 = vector.multi_reduction <add>, %32, %cst_27 [1] : vector<16x32xf32> to vector<16xf32>
    %34 = vector.shape_cast %33 : vector<16xf32> to vector<16x1xf32>
    %35 = tpu.reciprocal %34 {approx = true} : vector<16x1xf32> -> vector<16x1xf32>
    %36 = arith.mulf %34, %35 : vector<16x1xf32>
    %cst_28 = arith.constant 2.000000e+00 : f32
    %37 = vector.broadcast %cst_28 : f32 to vector<16x1xf32>
    %38 = arith.subf %37, %36 : vector<16x1xf32>
    %39 = arith.mulf %35, %38 : vector<16x1xf32>
    %40 = vector.broadcast %39 : vector<16x1xf32> to vector<16x32xf32>
    %41 = arith.mulf %32, %40 : vector<16x32xf32>
    %cst_29 = arith.constant dense<0.000000e+00> : vector<16x8xf32>
    %42 = tpu.matmul %41, %24, %cst_29 {dimension_numbers = #tpu.dot_dimension_numbers<[1], [0], [0], [1], [0, 0, 1, 1], [], []>} : vector<16x32xf32>, vector<32x8xf32>, vector<16x8xf32> -> vector<16x8xf32>
    %43 = vector.extract_strided_slice %8 {offsets = [0, 8], sizes = [16, 8], strides = [1, 1]} : vector<16x96xf32> to vector<16x8xf32>
    %44 = vector.extract_strided_slice %15 {offsets = [0, 40], sizes = [32, 8], strides = [1, 1]} : vector<32x96xf32> to vector<32x8xf32>
    %45 = vector.extract_strided_slice %15 {offsets = [0, 72], sizes = [32, 8], strides = [1, 1]} : vector<32x96xf32> to vector<32x8xf32>
    %46 = tpu.transpose %44, [1, 0] : vector<32x8xf32> -> vector<8x32xf32>
    %cst_30 = arith.constant dense<0.000000e+00> : vector<16x32xf32>
    %47 = tpu.matmul %43, %46, %cst_30 {dimension_numbers = #tpu.dot_dimension_numbers<[1], [0], [0], [1], [0, 0, 1, 1], [], []>} : vector<16x8xf32>, vector<8x32xf32>, vector<16x32xf32> -> vector<16x32xf32>
    %48 = arith.addf %47, %16 : vector<16x32xf32>
    %cst_31 = arith.constant dense<0xFF800000> : vector<16xf32>
    %49 = vector.multi_reduction <maximumf>, %48, %cst_31 [1] : vector<16x32xf32> to vector<16xf32>
    %50 = vector.shape_cast %49 : vector<16xf32> to vector<16x1xf32>
    %51 = vector.broadcast %50 : vector<16x1xf32> to vector<16x32xf32>
    %52 = arith.subf %48, %51 : vector<16x32xf32>
    %53 = math.exp %52 : vector<16x32xf32>
    %cst_32 = arith.constant dense<0.000000e+00> : vector<16xf32>
    %54 = vector.multi_reduction <add>, %53, %cst_32 [1] : vector<16x32xf32> to vector<16xf32>
    %55 = vector.shape_cast %54 : vector<16xf32> to vector<16x1xf32>
    %56 = tpu.reciprocal %55 {approx = true} : vector<16x1xf32> -> vector<16x1xf32>
    %57 = arith.mulf %55, %56 : vector<16x1xf32>
    %cst_33 = arith.constant 2.000000e+00 : f32
    %58 = vector.broadcast %cst_33 : f32 to vector<16x1xf32>
    %59 = arith.subf %58, %57 : vector<16x1xf32>
    %60 = arith.mulf %56, %59 : vector<16x1xf32>
    %61 = vector.broadcast %60 : vector<16x1xf32> to vector<16x32xf32>
    %62 = arith.mulf %53, %61 : vector<16x32xf32>
    %cst_34 = arith.constant dense<0.000000e+00> : vector<16x8xf32>
    %63 = tpu.matmul %62, %45, %cst_34 {dimension_numbers = #tpu.dot_dimension_numbers<[1], [0], [0], [1], [0, 0, 1, 1], [], []>} : vector<16x32xf32>, vector<32x8xf32>, vector<16x8xf32> -> vector<16x8xf32>
    %64 = vector.extract_strided_slice %8 {offsets = [0, 16], sizes = [16, 8], strides = [1, 1]} : vector<16x96xf32> to vector<16x8xf32>
    %65 = vector.extract_strided_slice %15 {offsets = [0, 48], sizes = [32, 8], strides = [1, 1]} : vector<32x96xf32> to vector<32x8xf32>
    %66 = vector.extract_strided_slice %15 {offsets = [0, 80], sizes = [32, 8], strides = [1, 1]} : vector<32x96xf32> to vector<32x8xf32>
    %67 = tpu.transpose %65, [1, 0] : vector<32x8xf32> -> vector<8x32xf32>
    %cst_35 = arith.constant dense<0.000000e+00> : vector<16x32xf32>
    %68 = tpu.matmul %64, %67, %cst_35 {dimension_numbers = #tpu.dot_dimension_numbers<[1], [0], [0], [1], [0, 0, 1, 1], [], []>} : vector<16x8xf32>, vector<8x32xf32>, vector<16x32xf32> -> vector<16x32xf32>
    %69 = arith.addf %68, %16 : vector<16x32xf32>
    %cst_36 = arith.constant dense<0xFF800000> : vector<16xf32>
    %70 = vector.multi_reduction <maximumf>, %69, %cst_36 [1] : vector<16x32xf32> to vector<16xf32>
    %71 = vector.shape_cast %70 : vector<16xf32> to vector<16x1xf32>
    %72 = vector.broadcast %71 : vector<16x1xf32> to vector<16x32xf32>
    %73 = arith.subf %69, %72 : vector<16x32xf32>
    %74 = math.exp %73 : vector<16x32xf32>
    %cst_37 = arith.constant dense<0.000000e+00> : vector<16xf32>
    %75 = vector.multi_reduction <add>, %74, %cst_37 [1] : vector<16x32xf32> to vector<16xf32>
    %76 = vector.shape_cast %75 : vector<16xf32> to vector<16x1xf32>
    %77 = tpu.reciprocal %76 {approx = true} : vector<16x1xf32> -> vector<16x1xf32>
    %78 = arith.mulf %76, %77 : vector<16x1xf32>
    %cst_38 = arith.constant 2.000000e+00 : f32
    %79 = vector.broadcast %cst_38 : f32 to vector<16x1xf32>
    %80 = arith.subf %79, %78 : vector<16x1xf32>
    %81 = arith.mulf %77, %80 : vector<16x1xf32>
    %82 = vector.broadcast %81 : vector<16x1xf32> to vector<16x32xf32>
    %83 = arith.mulf %74, %82 : vector<16x32xf32>
    %cst_39 = arith.constant dense<0.000000e+00> : vector<16x8xf32>
    %84 = tpu.matmul %83, %66, %cst_39 {dimension_numbers = #tpu.dot_dimension_numbers<[1], [0], [0], [1], [0, 0, 1, 1], [], []>} : vector<16x32xf32>, vector<32x8xf32>, vector<16x8xf32> -> vector<16x8xf32>
    %85 = vector.extract_strided_slice %8 {offsets = [0, 24], sizes = [16, 8], strides = [1, 1]} : vector<16x96xf32> to vector<16x8xf32>
    %86 = vector.extract_strided_slice %15 {offsets = [0, 56], sizes = [32, 8], strides = [1, 1]} : vector<32x96xf32> to vector<32x8xf32>
    %87 = vector.extract_strided_slice %15 {offsets = [0, 88], sizes = [32, 8], strides = [1, 1]} : vector<32x96xf32> to vector<32x8xf32>
    %88 = tpu.transpose %86, [1, 0] : vector<32x8xf32> -> vector<8x32xf32>
    %cst_40 = arith.constant dense<0.000000e+00> : vector<16x32xf32>
    %89 = tpu.matmul %85, %88, %cst_40 {dimension_numbers = #tpu.dot_dimension_numbers<[1], [0], [0], [1], [0, 0, 1, 1], [], []>} : vector<16x8xf32>, vector<8x32xf32>, vector<16x32xf32> -> vector<16x32xf32>
    %90 = arith.addf %89, %16 : vector<16x32xf32>
    %cst_41 = arith.constant dense<0xFF800000> : vector<16xf32>
    %91 = vector.multi_reduction <maximumf>, %90, %cst_41 [1] : vector<16x32xf32> to vector<16xf32>
    %92 = vector.shape_cast %91 : vector<16xf32> to vector<16x1xf32>
    %93 = vector.broadcast %92 : vector<16x1xf32> to vector<16x32xf32>
    %94 = arith.subf %90, %93 : vector<16x32xf32>
    %95 = math.exp %94 : vector<16x32xf32>
    %cst_42 = arith.constant dense<0.000000e+00> : vector<16xf32>
    %96 = vector.multi_reduction <add>, %95, %cst_42 [1] : vector<16x32xf32> to vector<16xf32>
    %97 = vector.shape_cast %96 : vector<16xf32> to vector<16x1xf32>
    %98 = tpu.reciprocal %97 {approx = true} : vector<16x1xf32> -> vector<16x1xf32>
    %99 = arith.mulf %97, %98 : vector<16x1xf32>
    %cst_43 = arith.constant 2.000000e+00 : f32
    %100 = vector.broadcast %cst_43 : f32 to vector<16x1xf32>
    %101 = arith.subf %100, %99 : vector<16x1xf32>
    %102 = arith.mulf %98, %101 : vector<16x1xf32>
    %103 = vector.broadcast %102 : vector<16x1xf32> to vector<16x32xf32>
    %104 = arith.mulf %95, %103 : vector<16x32xf32>
    %cst_44 = arith.constant dense<0.000000e+00> : vector<16x8xf32>
    %105 = tpu.matmul %104, %87, %cst_44 {dimension_numbers = #tpu.dot_dimension_numbers<[1], [0], [0], [1], [0, 0, 1, 1], [], []>} : vector<16x32xf32>, vector<32x8xf32>, vector<16x8xf32> -> vector<16x8xf32>
    %106 = tpu.concatenate %42, %63, %84, %105 in 1 : vector<16x8xf32>, vector<16x8xf32>, vector<16x8xf32>, vector<16x8xf32> -> vector<16x32xf32>
    %cst_45 = arith.constant dense<0.000000e+00> : vector<16x32xf32>
    %107 = tpu.matmul %106, %19, %cst_45 {dimension_numbers = #tpu.dot_dimension_numbers<[1], [0], [0], [1], [0, 0, 1, 1], [], []>} : vector<16x32xf32>, vector<32x32xf32>, vector<16x32xf32> -> vector<16x32xf32>
    %108 = vector.broadcast %21 : vector<1x32xf32> to vector<16x32xf32>
    %109 = arith.addf %107, %108 : vector<16x32xf32>
    %c1_46 = arith.constant 1 : index
    %c0_47 = arith.constant 0 : index
    %c0_48 = arith.constant 0 : index
    %110 = vector.load %arg7[%c1_46, %c0_47, %c0_48] : memref<2x32x32xf32, #tpu.memory_space<vmem>>, vector<1x32x32xf32>
    %111 = vector.shape_cast %110 : vector<1x32x32xf32> to vector<32x32xf32>
    %c1_49 = arith.constant 1 : index
    %c0_50 = arith.constant 0 : index
    %c0_51 = arith.constant 0 : index
    %112 = vector.load %arg8[%c1_49, %c0_50, %c0_51] : memref<2x1x32xf32, #tpu.memory_space<vmem>>, vector<1x1x32xf32>
    %113 = vector.shape_cast %112 : vector<1x1x32xf32> to vector<1x32xf32>
    %114 = vector.extract_strided_slice %15 {offsets = [0, 0], sizes = [32, 8], strides = [1, 1]} : vector<32x96xf32> to vector<32x8xf32>
    %115 = vector.extract_strided_slice %8 {offsets = [0, 32], sizes = [16, 8], strides = [1, 1]} : vector<16x96xf32> to vector<16x8xf32>
    %116 = vector.extract_strided_slice %8 {offsets = [0, 64], sizes = [16, 8], strides = [1, 1]} : vector<16x96xf32> to vector<16x8xf32>
    %117 = tpu.transpose %115, [1, 0] : vector<16x8xf32> -> vector<8x16xf32>
    %cst_52 = arith.constant dense<0.000000e+00> : vector<32x16xf32>
    %118 = tpu.matmul %114, %117, %cst_52 {dimension_numbers = #tpu.dot_dimension_numbers<[1], [0], [0], [1], [0, 0, 1, 1], [], []>} : vector<32x8xf32>, vector<8x16xf32>, vector<32x16xf32> -> vector<32x16xf32>
    %119 = arith.addf %118, %17 : vector<32x16xf32>
    %cst_53 = arith.constant dense<0xFF800000> : vector<32xf32>
    %120 = vector.multi_reduction <maximumf>, %119, %cst_53 [1] : vector<32x16xf32> to vector<32xf32>
    %121 = vector.shape_cast %120 : vector<32xf32> to vector<32x1xf32>
    %122 = vector.broadcast %121 : vector<32x1xf32> to vector<32x16xf32>
    %123 = arith.subf %119, %122 : vector<32x16xf32>
    %124 = math.exp %123 : vector<32x16xf32>
    %cst_54 = arith.constant dense<0.000000e+00> : vector<32xf32>
    %125 = vector.multi_reduction <add>, %124, %cst_54 [1] : vector<32x16xf32> to vector<32xf32>
    %126 = vector.shape_cast %125 : vector<32xf32> to vector<32x1xf32>
    %127 = tpu.reciprocal %126 {approx = true} : vector<32x1xf32> -> vector<32x1xf32>
    %128 = arith.mulf %126, %127 : vector<32x1xf32>
    %cst_55 = arith.constant 2.000000e+00 : f32
    %129 = vector.broadcast %cst_55 : f32 to vector<32x1xf32>
    %130 = arith.subf %129, %128 : vector<32x1xf32>
    %131 = arith.mulf %127, %130 : vector<32x1xf32>
    %132 = vector.broadcast %131 : vector<32x1xf32> to vector<32x16xf32>
    %133 = arith.mulf %124, %132 : vector<32x16xf32>
    %cst_56 = arith.constant dense<0.000000e+00> : vector<32x8xf32>
    %134 = tpu.matmul %133, %116, %cst_56 {dimension_numbers = #tpu.dot_dimension_numbers<[1], [0], [0], [1], [0, 0, 1, 1], [], []>} : vector<32x16xf32>, vector<16x8xf32>, vector<32x8xf32> -> vector<32x8xf32>
    %135 = vector.extract_strided_slice %15 {offsets = [0, 8], sizes = [32, 8], strides = [1, 1]} : vector<32x96xf32> to vector<32x8xf32>
    %136 = vector.extract_strided_slice %8 {offsets = [0, 40], sizes = [16, 8], strides = [1, 1]} : vector<16x96xf32> to vector<16x8xf32>
    %137 = vector.extract_strided_slice %8 {offsets = [0, 72], sizes = [16, 8], strides = [1, 1]} : vector<16x96xf32> to vector<16x8xf32>
    %138 = tpu.transpose %136, [1, 0] : vector<16x8xf32> -> vector<8x16xf32>
    %cst_57 = arith.constant dense<0.000000e+00> : vector<32x16xf32>
    %139 = tpu.matmul %135, %138, %cst_57 {dimension_numbers = #tpu.dot_dimension_numbers<[1], [0], [0], [1], [0, 0, 1, 1], [], []>} : vector<32x8xf32>, vector<8x16xf32>, vector<32x16xf32> -> vector<32x16xf32>
    %140 = arith.addf %139, %17 : vector<32x16xf32>
    %cst_58 = arith.constant dense<0xFF800000> : vector<32xf32>
    %141 = vector.multi_reduction <maximumf>, %140, %cst_58 [1] : vector<32x16xf32> to vector<32xf32>
    %142 = vector.shape_cast %141 : vector<32xf32> to vector<32x1xf32>
    %143 = vector.broadcast %142 : vector<32x1xf32> to vector<32x16xf32>
    %144 = arith.subf %140, %143 : vector<32x16xf32>
    %145 = math.exp %144 : vector<32x16xf32>
    %cst_59 = arith.constant dense<0.000000e+00> : vector<32xf32>
    %146 = vector.multi_reduction <add>, %145, %cst_59 [1] : vector<32x16xf32> to vector<32xf32>
    %147 = vector.shape_cast %146 : vector<32xf32> to vector<32x1xf32>
    %148 = tpu.reciprocal %147 {approx = true} : vector<32x1xf32> -> vector<32x1xf32>
    %149 = arith.mulf %147, %148 : vector<32x1xf32>
    %cst_60 = arith.constant 2.000000e+00 : f32
    %150 = vector.broadcast %cst_60 : f32 to vector<32x1xf32>
    %151 = arith.subf %150, %149 : vector<32x1xf32>
    %152 = arith.mulf %148, %151 : vector<32x1xf32>
    %153 = vector.broadcast %152 : vector<32x1xf32> to vector<32x16xf32>
    %154 = arith.mulf %145, %153 : vector<32x16xf32>
    %cst_61 = arith.constant dense<0.000000e+00> : vector<32x8xf32>
    %155 = tpu.matmul %154, %137, %cst_61 {dimension_numbers = #tpu.dot_dimension_numbers<[1], [0], [0], [1], [0, 0, 1, 1], [], []>} : vector<32x16xf32>, vector<16x8xf32>, vector<32x8xf32> -> vector<32x8xf32>
    %156 = vector.extract_strided_slice %15 {offsets = [0, 16], sizes = [32, 8], strides = [1, 1]} : vector<32x96xf32> to vector<32x8xf32>
    %157 = vector.extract_strided_slice %8 {offsets = [0, 48], sizes = [16, 8], strides = [1, 1]} : vector<16x96xf32> to vector<16x8xf32>
    %158 = vector.extract_strided_slice %8 {offsets = [0, 80], sizes = [16, 8], strides = [1, 1]} : vector<16x96xf32> to vector<16x8xf32>
    %159 = tpu.transpose %157, [1, 0] : vector<16x8xf32> -> vector<8x16xf32>
    %cst_62 = arith.constant dense<0.000000e+00> : vector<32x16xf32>
    %160 = tpu.matmul %156, %159, %cst_62 {dimension_numbers = #tpu.dot_dimension_numbers<[1], [0], [0], [1], [0, 0, 1, 1], [], []>} : vector<32x8xf32>, vector<8x16xf32>, vector<32x16xf32> -> vector<32x16xf32>
    %161 = arith.addf %160, %17 : vector<32x16xf32>
    %cst_63 = arith.constant dense<0xFF800000> : vector<32xf32>
    %162 = vector.multi_reduction <maximumf>, %161, %cst_63 [1] : vector<32x16xf32> to vector<32xf32>
    %163 = vector.shape_cast %162 : vector<32xf32> to vector<32x1xf32>
    %164 = vector.broadcast %163 : vector<32x1xf32> to vector<32x16xf32>
    %165 = arith.subf %161, %164 : vector<32x16xf32>
    %166 = math.exp %165 : vector<32x16xf32>
    %cst_64 = arith.constant dense<0.000000e+00> : vector<32xf32>
    %167 = vector.multi_reduction <add>, %166, %cst_64 [1] : vector<32x16xf32> to vector<32xf32>
    %168 = vector.shape_cast %167 : vector<32xf32> to vector<32x1xf32>
    %169 = tpu.reciprocal %168 {approx = true} : vector<32x1xf32> -> vector<32x1xf32>
    %170 = arith.mulf %168, %169 : vector<32x1xf32>
    %cst_65 = arith.constant 2.000000e+00 : f32
    %171 = vector.broadcast %cst_65 : f32 to vector<32x1xf32>
    %172 = arith.subf %171, %170 : vector<32x1xf32>
    %173 = arith.mulf %169, %172 : vector<32x1xf32>
    %174 = vector.broadcast %173 : vector<32x1xf32> to vector<32x16xf32>
    %175 = arith.mulf %166, %174 : vector<32x16xf32>
    %cst_66 = arith.constant dense<0.000000e+00> : vector<32x8xf32>
    %176 = tpu.matmul %175, %158, %cst_66 {dimension_numbers = #tpu.dot_dimension_numbers<[1], [0], [0], [1], [0, 0, 1, 1], [], []>} : vector<32x16xf32>, vector<16x8xf32>, vector<32x8xf32> -> vector<32x8xf32>
    %177 = vector.extract_strided_slice %15 {offsets = [0, 24], sizes = [32, 8], strides = [1, 1]} : vector<32x96xf32> to vector<32x8xf32>
    %178 = vector.extract_strided_slice %8 {offsets = [0, 56], sizes = [16, 8], strides = [1, 1]} : vector<16x96xf32> to vector<16x8xf32>
    %179 = vector.extract_strided_slice %8 {offsets = [0, 88], sizes = [16, 8], strides = [1, 1]} : vector<16x96xf32> to vector<16x8xf32>
    %180 = tpu.transpose %178, [1, 0] : vector<16x8xf32> -> vector<8x16xf32>
    %cst_67 = arith.constant dense<0.000000e+00> : vector<32x16xf32>
    %181 = tpu.matmul %177, %180, %cst_67 {dimension_numbers = #tpu.dot_dimension_numbers<[1], [0], [0], [1], [0, 0, 1, 1], [], []>} : vector<32x8xf32>, vector<8x16xf32>, vector<32x16xf32> -> vector<32x16xf32>
    %182 = arith.addf %181, %17 : vector<32x16xf32>
    %cst_68 = arith.constant dense<0xFF800000> : vector<32xf32>
    %183 = vector.multi_reduction <maximumf>, %182, %cst_68 [1] : vector<32x16xf32> to vector<32xf32>
    %184 = vector.shape_cast %183 : vector<32xf32> to vector<32x1xf32>
    %185 = vector.broadcast %184 : vector<32x1xf32> to vector<32x16xf32>
    %186 = arith.subf %182, %185 : vector<32x16xf32>
    %187 = math.exp %186 : vector<32x16xf32>
    %cst_69 = arith.constant dense<0.000000e+00> : vector<32xf32>
    %188 = vector.multi_reduction <add>, %187, %cst_69 [1] : vector<32x16xf32> to vector<32xf32>
    %189 = vector.shape_cast %188 : vector<32xf32> to vector<32x1xf32>
    %190 = tpu.reciprocal %189 {approx = true} : vector<32x1xf32> -> vector<32x1xf32>
    %191 = arith.mulf %189, %190 : vector<32x1xf32>
    %cst_70 = arith.constant 2.000000e+00 : f32
    %192 = vector.broadcast %cst_70 : f32 to vector<32x1xf32>
    %193 = arith.subf %192, %191 : vector<32x1xf32>
    %194 = arith.mulf %190, %193 : vector<32x1xf32>
    %195 = vector.broadcast %194 : vector<32x1xf32> to vector<32x16xf32>
    %196 = arith.mulf %187, %195 : vector<32x16xf32>
    %cst_71 = arith.constant dense<0.000000e+00> : vector<32x8xf32>
    %197 = tpu.matmul %196, %179, %cst_71 {dimension_numbers = #tpu.dot_dimension_numbers<[1], [0], [0], [1], [0, 0, 1, 1], [], []>} : vector<32x16xf32>, vector<16x8xf32>, vector<32x8xf32> -> vector<32x8xf32>
    %198 = tpu.concatenate %134, %155, %176, %197 in 1 : vector<32x8xf32>, vector<32x8xf32>, vector<32x8xf32>, vector<32x8xf32> -> vector<32x32xf32>
    %cst_72 = arith.constant dense<0.000000e+00> : vector<32x32xf32>
    %199 = tpu.matmul %198, %111, %cst_72 {dimension_numbers = #tpu.dot_dimension_numbers<[1], [0], [0], [1], [0, 0, 1, 1], [], []>} : vector<32x32xf32>, vector<32x32xf32>, vector<32x32xf32> -> vector<32x32xf32>
    %200 = vector.broadcast %113 : vector<1x32xf32> to vector<32x32xf32>
    %201 = arith.addf %199, %200 : vector<32x32xf32>
    %c0_73 = arith.constant 0 : index
    %c0_74 = arith.constant 0 : index
    %c0_75 = arith.constant 0 : index
    %202 = vector.load %arg9[%c0_73, %c0_74, %c0_75] : memref<2x32x32xf32, #tpu.memory_space<vmem>>, vector<1x32x32xf32>
    %203 = vector.shape_cast %202 : vector<1x32x32xf32> to vector<32x32xf32>
    %cst_76 = arith.constant dense<0.000000e+00> : vector<16x32xf32>
    %204 = tpu.matmul %109, %203, %cst_76 {dimension_numbers = #tpu.dot_dimension_numbers<[1], [0], [0], [1], [0, 0, 1, 1], [], []>} : vector<16x32xf32>, vector<32x32xf32>, vector<16x32xf32> -> vector<16x32xf32>
    %205 = arith.addf %0, %204 : vector<16x32xf32>
    %c0_77 = arith.constant 0 : index
    %c0_78 = arith.constant 0 : index
    %c0_79 = arith.constant 0 : index
    %206 = vector.load %arg10[%c0_77, %c0_78, %c0_79] : memref<2x1x32xf32, #tpu.memory_space<vmem>>, vector<1x1x32xf32>
    %207 = vector.shape_cast %206 : vector<1x1x32xf32> to vector<1x32xf32>
    %208 = vector.broadcast %207 : vector<1x32xf32> to vector<16x32xf32>
    %209 = arith.addf %205, %208 : vector<16x32xf32>
    %c0_80 = arith.constant 0 : index
    %c0_81 = arith.constant 0 : index
    %c0_82 = arith.constant 0 : index
    %210 = vector.load %arg11[%c0_80, %c0_81, %c0_82] : memref<2x1x32xf32, #tpu.memory_space<vmem>>, vector<1x1x32xf32>
    %211 = vector.shape_cast %210 : vector<1x1x32xf32> to vector<1x32xf32>
    %c0_83 = arith.constant 0 : index
    %c0_84 = arith.constant 0 : index
    %c0_85 = arith.constant 0 : index
    %212 = vector.load %arg12[%c0_83, %c0_84, %c0_85] : memref<2x1x32xf32, #tpu.memory_space<vmem>>, vector<1x1x32xf32>
    %213 = vector.shape_cast %212 : vector<1x1x32xf32> to vector<1x32xf32>
    %cst_86 = arith.constant dense<0.000000e+00> : vector<16xf32>
    %214 = vector.multi_reduction <add>, %209, %cst_86 [1] : vector<16x32xf32> to vector<16xf32>
    %215 = vector.shape_cast %214 : vector<16xf32> to vector<16x1xf32>
    %cst_87 = arith.constant 3.200000e+01 : f32
    %216 = vector.broadcast %cst_87 : f32 to vector<16x1xf32>
    %217 = arith.divf %215, %216 : vector<16x1xf32>
    %218 = vector.broadcast %217 : vector<16x1xf32> to vector<16x32xf32>
    %219 = arith.subf %209, %218 : vector<16x32xf32>
    %220 = arith.mulf %219, %219 : vector<16x32xf32>
    %cst_88 = arith.constant dense<0.000000e+00> : vector<16xf32>
    %221 = vector.multi_reduction <add>, %220, %cst_88 [1] : vector<16x32xf32> to vector<16xf32>
    %222 = vector.shape_cast %221 : vector<16xf32> to vector<16x1xf32>
    %cst_89 = arith.constant 3.200000e+01 : f32
    %223 = vector.broadcast %cst_89 : f32 to vector<16x1xf32>
    %224 = arith.divf %222, %223 : vector<16x1xf32>
    %225 = vector.broadcast %217 : vector<16x1xf32> to vector<16x32xf32>
    %226 = arith.subf %209, %225 : vector<16x32xf32>
    %cst_90 = arith.constant 9.99999974E-6 : f32
    %227 = vector.broadcast %cst_90 : f32 to vector<16x1xf32>
    %228 = arith.addf %224, %227 : vector<16x1xf32>
    %229 = math.rsqrt %228 : vector<16x1xf32>
    %230 = vector.broadcast %229 : vector<16x1xf32> to vector<16x32xf32>
    %231 = arith.mulf %226, %230 : vector<16x32xf32>
    %232 = vector.broadcast %211 : vector<1x32xf32> to vector<16x32xf32>
    %233 = arith.mulf %231, %232 : vector<16x32xf32>
    %234 = vector.broadcast %213 : vector<1x32xf32> to vector<16x32xf32>
    %235 = arith.addf %233, %234 : vector<16x32xf32>
    %c1_91 = arith.constant 1 : index
    %c0_92 = arith.constant 0 : index
    %c0_93 = arith.constant 0 : index
    %236 = vector.load %arg9[%c1_91, %c0_92, %c0_93] : memref<2x32x32xf32, #tpu.memory_space<vmem>>, vector<1x32x32xf32>
    %237 = vector.shape_cast %236 : vector<1x32x32xf32> to vector<32x32xf32>
    %cst_94 = arith.constant dense<0.000000e+00> : vector<32x32xf32>
    %238 = tpu.matmul %201, %237, %cst_94 {dimension_numbers = #tpu.dot_dimension_numbers<[1], [0], [0], [1], [0, 0, 1, 1], [], []>} : vector<32x32xf32>, vector<32x32xf32>, vector<32x32xf32> -> vector<32x32xf32>
    %239 = arith.addf %1, %238 : vector<32x32xf32>
    %c1_95 = arith.constant 1 : index
    %c0_96 = arith.constant 0 : index
    %c0_97 = arith.constant 0 : index
    %240 = vector.load %arg10[%c1_95, %c0_96, %c0_97] : memref<2x1x32xf32, #tpu.memory_space<vmem>>, vector<1x1x32xf32>
    %241 = vector.shape_cast %240 : vector<1x1x32xf32> to vector<1x32xf32>
    %242 = vector.broadcast %241 : vector<1x32xf32> to vector<32x32xf32>
    %243 = arith.addf %239, %242 : vector<32x32xf32>
    %c1_98 = arith.constant 1 : index
    %c0_99 = arith.constant 0 : index
    %c0_100 = arith.constant 0 : index
    %244 = vector.load %arg11[%c1_98, %c0_99, %c0_100] : memref<2x1x32xf32, #tpu.memory_space<vmem>>, vector<1x1x32xf32>
    %245 = vector.shape_cast %244 : vector<1x1x32xf32> to vector<1x32xf32>
    %c1_101 = arith.constant 1 : index
    %c0_102 = arith.constant 0 : index
    %c0_103 = arith.constant 0 : index
    %246 = vector.load %arg12[%c1_101, %c0_102, %c0_103] : memref<2x1x32xf32, #tpu.memory_space<vmem>>, vector<1x1x32xf32>
    %247 = vector.shape_cast %246 : vector<1x1x32xf32> to vector<1x32xf32>
    %cst_104 = arith.constant dense<0.000000e+00> : vector<32xf32>
    %248 = vector.multi_reduction <add>, %243, %cst_104 [1] : vector<32x32xf32> to vector<32xf32>
    %249 = vector.shape_cast %248 : vector<32xf32> to vector<32x1xf32>
    %cst_105 = arith.constant 3.200000e+01 : f32
    %250 = vector.broadcast %cst_105 : f32 to vector<32x1xf32>
    %251 = arith.divf %249, %250 : vector<32x1xf32>
    %252 = vector.broadcast %251 : vector<32x1xf32> to vector<32x32xf32>
    %253 = arith.subf %243, %252 : vector<32x32xf32>
    %254 = arith.mulf %253, %253 : vector<32x32xf32>
    %cst_106 = arith.constant dense<0.000000e+00> : vector<32xf32>
    %255 = vector.multi_reduction <add>, %254, %cst_106 [1] : vector<32x32xf32> to vector<32xf32>
    %256 = vector.shape_cast %255 : vector<32xf32> to vector<32x1xf32>
    %cst_107 = arith.constant 3.200000e+01 : f32
    %257 = vector.broadcast %cst_107 : f32 to vector<32x1xf32>
    %258 = arith.divf %256, %257 : vector<32x1xf32>
    %259 = vector.broadcast %251 : vector<32x1xf32> to vector<32x32xf32>
    %260 = arith.subf %243, %259 : vector<32x32xf32>
    %cst_108 = arith.constant 9.99999974E-6 : f32
    %261 = vector.broadcast %cst_108 : f32 to vector<32x1xf32>
    %262 = arith.addf %258, %261 : vector<32x1xf32>
    %263 = math.rsqrt %262 : vector<32x1xf32>
    %264 = vector.broadcast %263 : vector<32x1xf32> to vector<32x32xf32>
    %265 = arith.mulf %260, %264 : vector<32x32xf32>
    %266 = vector.broadcast %245 : vector<1x32xf32> to vector<32x32xf32>
    %267 = arith.mulf %265, %266 : vector<32x32xf32>
    %268 = vector.broadcast %247 : vector<1x32xf32> to vector<32x32xf32>
    %269 = arith.addf %267, %268 : vector<32x32xf32>
    %c0_109 = arith.constant 0 : index
    %c0_110 = arith.constant 0 : index
    %c0_111 = arith.constant 0 : index
    %270 = vector.load %arg13[%c0_109, %c0_110, %c0_111] : memref<2x32x64xf32, #tpu.memory_space<vmem>>, vector<1x32x64xf32>
    %271 = vector.shape_cast %270 : vector<1x32x64xf32> to vector<32x64xf32>
    %cst_112 = arith.constant dense<0.000000e+00> : vector<16x64xf32>
    %272 = tpu.matmul %235, %271, %cst_112 {dimension_numbers = #tpu.dot_dimension_numbers<[1], [0], [0], [1], [0, 0, 1, 1], [], []>} : vector<16x32xf32>, vector<32x64xf32>, vector<16x64xf32> -> vector<16x64xf32>
    %c0_113 = arith.constant 0 : index
    %c0_114 = arith.constant 0 : index
    %c0_115 = arith.constant 0 : index
    %273 = vector.load %arg14[%c0_113, %c0_114, %c0_115] : memref<2x1x64xf32, #tpu.memory_space<vmem>>, vector<1x1x64xf32>
    %274 = vector.shape_cast %273 : vector<1x1x64xf32> to vector<1x64xf32>
    %275 = vector.broadcast %274 : vector<1x64xf32> to vector<16x64xf32>
    %276 = arith.addf %272, %275 : vector<16x64xf32>
    %cst_116 = arith.constant 5.000000e-01 : f32
    %277 = vector.broadcast %cst_116 : f32 to vector<16x64xf32>
    %278 = arith.mulf %277, %276 : vector<16x64xf32>
    %cst_117 = arith.constant 0.707106769 : f32
    %279 = vector.broadcast %cst_117 : f32 to vector<16x64xf32>
    %280 = arith.mulf %276, %279 : vector<16x64xf32>
    %cst_118 = arith.constant 0.000000e+00 : f32
    %281 = vector.broadcast %cst_118 : f32 to vector<16x64xf32>
    %282 = arith.cmpf oge, %280, %281 : vector<16x64xf32>
    %cst_119 = arith.constant 1.000000e+00 : f32
    %cst_120 = arith.constant -1.000000e+00 : f32
    %283 = vector.broadcast %cst_119 : f32 to vector<16x64xf32>
    %284 = vector.broadcast %cst_120 : f32 to vector<16x64xf32>
    %285 = arith.select %282, %283, %284 : vector<16x64xi1>, vector<16x64xf32>
    %286 = math.absf %280 : vector<16x64xf32>
    %cst_121 = arith.constant 0.327591091 : f32
    %287 = vector.broadcast %cst_121 : f32 to vector<16x64xf32>
    %288 = arith.mulf %287, %286 : vector<16x64xf32>
    %cst_122 = arith.constant 1.000000e+00 : f32
    %289 = vector.broadcast %cst_122 : f32 to vector<16x64xf32>
    %290 = arith.addf %289, %288 : vector<16x64xf32>
    %291 = tpu.reciprocal %290 {approx = true} : vector<16x64xf32> -> vector<16x64xf32>
    %292 = arith.mulf %290, %291 : vector<16x64xf32>
    %cst_123 = arith.constant 2.000000e+00 : f32
    %293 = vector.broadcast %cst_123 : f32 to vector<16x64xf32>
    %294 = arith.subf %293, %292 : vector<16x64xf32>
    %295 = arith.mulf %291, %294 : vector<16x64xf32>
    %cst_124 = arith.constant 1.06140542 : f32
    %296 = vector.broadcast %cst_124 : f32 to vector<16x64xf32>
    %297 = arith.mulf %296, %295 : vector<16x64xf32>
    %cst_125 = arith.constant -1.45315206 : f32
    %298 = vector.broadcast %cst_125 : f32 to vector<16x64xf32>
    %299 = arith.addf %297, %298 : vector<16x64xf32>
    %300 = arith.mulf %299, %295 : vector<16x64xf32>
    %cst_126 = arith.constant 1.42141378 : f32
    %301 = vector.broadcast %cst_126 : f32 to vector<16x64xf32>
    %302 = arith.addf %300, %301 : vector<16x64xf32>
    %303 = arith.mulf %302, %295 : vector<16x64xf32>
    %cst_127 = arith.constant -0.284496725 : f32
    %304 = vector.broadcast %cst_127 : f32 to vector<16x64xf32>
    %305 = arith.addf %303, %304 : vector<16x64xf32>
    %306 = arith.mulf %305, %295 : vector<16x64xf32>
    %cst_128 = arith.constant 0.254829586 : f32
    %307 = vector.broadcast %cst_128 : f32 to vector<16x64xf32>
    %308 = arith.addf %306, %307 : vector<16x64xf32>
    %309 = arith.mulf %308, %295 : vector<16x64xf32>
    %cst_129 = arith.constant 0.000000e+00 : f32
    %310 = vector.broadcast %cst_129 : f32 to vector<16x64xf32>
    %311 = arith.subf %310, %286 : vector<16x64xf32>
    %312 = arith.mulf %311, %286 : vector<16x64xf32>
    %313 = math.exp %312 : vector<16x64xf32>
    %314 = arith.mulf %309, %313 : vector<16x64xf32>
    %cst_130 = arith.constant 1.000000e+00 : f32
    %315 = vector.broadcast %cst_130 : f32 to vector<16x64xf32>
    %316 = arith.subf %315, %314 : vector<16x64xf32>
    %317 = arith.mulf %285, %316 : vector<16x64xf32>
    %cst_131 = arith.constant 1.000000e+00 : f32
    %318 = vector.broadcast %cst_131 : f32 to vector<16x64xf32>
    %319 = arith.addf %318, %317 : vector<16x64xf32>
    %320 = arith.mulf %278, %319 : vector<16x64xf32>
    %c1_132 = arith.constant 1 : index
    %c0_133 = arith.constant 0 : index
    %c0_134 = arith.constant 0 : index
    %321 = vector.load %arg13[%c1_132, %c0_133, %c0_134] : memref<2x32x64xf32, #tpu.memory_space<vmem>>, vector<1x32x64xf32>
    %322 = vector.shape_cast %321 : vector<1x32x64xf32> to vector<32x64xf32>
    %cst_135 = arith.constant dense<0.000000e+00> : vector<32x64xf32>
    %323 = tpu.matmul %269, %322, %cst_135 {dimension_numbers = #tpu.dot_dimension_numbers<[1], [0], [0], [1], [0, 0, 1, 1], [], []>} : vector<32x32xf32>, vector<32x64xf32>, vector<32x64xf32> -> vector<32x64xf32>
    %c1_136 = arith.constant 1 : index
    %c0_137 = arith.constant 0 : index
    %c0_138 = arith.constant 0 : index
    %324 = vector.load %arg14[%c1_136, %c0_137, %c0_138] : memref<2x1x64xf32, #tpu.memory_space<vmem>>, vector<1x1x64xf32>
    %325 = vector.shape_cast %324 : vector<1x1x64xf32> to vector<1x64xf32>
    %326 = vector.broadcast %325 : vector<1x64xf32> to vector<32x64xf32>
    %327 = arith.addf %323, %326 : vector<32x64xf32>
    %cst_139 = arith.constant 5.000000e-01 : f32
    %328 = vector.broadcast %cst_139 : f32 to vector<32x64xf32>
    %329 = arith.mulf %328, %327 : vector<32x64xf32>
    %cst_140 = arith.constant 0.707106769 : f32
    %330 = vector.broadcast %cst_140 : f32 to vector<32x64xf32>
    %331 = arith.mulf %327, %330 : vector<32x64xf32>
    %cst_141 = arith.constant 0.000000e+00 : f32
    %332 = vector.broadcast %cst_141 : f32 to vector<32x64xf32>
    %333 = arith.cmpf oge, %331, %332 : vector<32x64xf32>
    %cst_142 = arith.constant 1.000000e+00 : f32
    %cst_143 = arith.constant -1.000000e+00 : f32
    %334 = vector.broadcast %cst_142 : f32 to vector<32x64xf32>
    %335 = vector.broadcast %cst_143 : f32 to vector<32x64xf32>
    %336 = arith.select %333, %334, %335 : vector<32x64xi1>, vector<32x64xf32>
    %337 = math.absf %331 : vector<32x64xf32>
    %cst_144 = arith.constant 0.327591091 : f32
    %338 = vector.broadcast %cst_144 : f32 to vector<32x64xf32>
    %339 = arith.mulf %338, %337 : vector<32x64xf32>
    %cst_145 = arith.constant 1.000000e+00 : f32
    %340 = vector.broadcast %cst_145 : f32 to vector<32x64xf32>
    %341 = arith.addf %340, %339 : vector<32x64xf32>
    %342 = tpu.reciprocal %341 {approx = true} : vector<32x64xf32> -> vector<32x64xf32>
    %343 = arith.mulf %341, %342 : vector<32x64xf32>
    %cst_146 = arith.constant 2.000000e+00 : f32
    %344 = vector.broadcast %cst_146 : f32 to vector<32x64xf32>
    %345 = arith.subf %344, %343 : vector<32x64xf32>
    %346 = arith.mulf %342, %345 : vector<32x64xf32>
    %cst_147 = arith.constant 1.06140542 : f32
    %347 = vector.broadcast %cst_147 : f32 to vector<32x64xf32>
    %348 = arith.mulf %347, %346 : vector<32x64xf32>
    %cst_148 = arith.constant -1.45315206 : f32
    %349 = vector.broadcast %cst_148 : f32 to vector<32x64xf32>
    %350 = arith.addf %348, %349 : vector<32x64xf32>
    %351 = arith.mulf %350, %346 : vector<32x64xf32>
    %cst_149 = arith.constant 1.42141378 : f32
    %352 = vector.broadcast %cst_149 : f32 to vector<32x64xf32>
    %353 = arith.addf %351, %352 : vector<32x64xf32>
    %354 = arith.mulf %353, %346 : vector<32x64xf32>
    %cst_150 = arith.constant -0.284496725 : f32
    %355 = vector.broadcast %cst_150 : f32 to vector<32x64xf32>
    %356 = arith.addf %354, %355 : vector<32x64xf32>
    %357 = arith.mulf %356, %346 : vector<32x64xf32>
    %cst_151 = arith.constant 0.254829586 : f32
    %358 = vector.broadcast %cst_151 : f32 to vector<32x64xf32>
    %359 = arith.addf %357, %358 : vector<32x64xf32>
    %360 = arith.mulf %359, %346 : vector<32x64xf32>
    %cst_152 = arith.constant 0.000000e+00 : f32
    %361 = vector.broadcast %cst_152 : f32 to vector<32x64xf32>
    %362 = arith.subf %361, %337 : vector<32x64xf32>
    %363 = arith.mulf %362, %337 : vector<32x64xf32>
    %364 = math.exp %363 : vector<32x64xf32>
    %365 = arith.mulf %360, %364 : vector<32x64xf32>
    %cst_153 = arith.constant 1.000000e+00 : f32
    %366 = vector.broadcast %cst_153 : f32 to vector<32x64xf32>
    %367 = arith.subf %366, %365 : vector<32x64xf32>
    %368 = arith.mulf %336, %367 : vector<32x64xf32>
    %cst_154 = arith.constant 1.000000e+00 : f32
    %369 = vector.broadcast %cst_154 : f32 to vector<32x64xf32>
    %370 = arith.addf %369, %368 : vector<32x64xf32>
    %371 = arith.mulf %329, %370 : vector<32x64xf32>
    %c0_155 = arith.constant 0 : index
    %c0_156 = arith.constant 0 : index
    %c0_157 = arith.constant 0 : index
    %372 = vector.load %arg15[%c0_155, %c0_156, %c0_157] : memref<2x64x32xf32, #tpu.memory_space<vmem>>, vector<1x64x32xf32>
    %373 = vector.shape_cast %372 : vector<1x64x32xf32> to vector<64x32xf32>
    %cst_158 = arith.constant dense<0.000000e+00> : vector<16x32xf32>
    %374 = tpu.matmul %320, %373, %cst_158 {dimension_numbers = #tpu.dot_dimension_numbers<[1], [0], [0], [1], [0, 0, 1, 1], [], []>} : vector<16x64xf32>, vector<64x32xf32>, vector<16x32xf32> -> vector<16x32xf32>
    %375 = arith.addf %235, %374 : vector<16x32xf32>
    %c0_159 = arith.constant 0 : index
    %c0_160 = arith.constant 0 : index
    %c0_161 = arith.constant 0 : index
    %376 = vector.load %arg16[%c0_159, %c0_160, %c0_161] : memref<2x1x32xf32, #tpu.memory_space<vmem>>, vector<1x1x32xf32>
    %377 = vector.shape_cast %376 : vector<1x1x32xf32> to vector<1x32xf32>
    %378 = vector.broadcast %377 : vector<1x32xf32> to vector<16x32xf32>
    %379 = arith.addf %375, %378 : vector<16x32xf32>
    %c0_162 = arith.constant 0 : index
    %c0_163 = arith.constant 0 : index
    %c0_164 = arith.constant 0 : index
    %380 = vector.load %arg17[%c0_162, %c0_163, %c0_164] : memref<2x1x32xf32, #tpu.memory_space<vmem>>, vector<1x1x32xf32>
    %381 = vector.shape_cast %380 : vector<1x1x32xf32> to vector<1x32xf32>
    %c0_165 = arith.constant 0 : index
    %c0_166 = arith.constant 0 : index
    %c0_167 = arith.constant 0 : index
    %382 = vector.load %arg18[%c0_165, %c0_166, %c0_167] : memref<2x1x32xf32, #tpu.memory_space<vmem>>, vector<1x1x32xf32>
    %383 = vector.shape_cast %382 : vector<1x1x32xf32> to vector<1x32xf32>
    %cst_168 = arith.constant dense<0.000000e+00> : vector<16xf32>
    %384 = vector.multi_reduction <add>, %379, %cst_168 [1] : vector<16x32xf32> to vector<16xf32>
    %385 = vector.shape_cast %384 : vector<16xf32> to vector<16x1xf32>
    %cst_169 = arith.constant 3.200000e+01 : f32
    %386 = vector.broadcast %cst_169 : f32 to vector<16x1xf32>
    %387 = arith.divf %385, %386 : vector<16x1xf32>
    %388 = vector.broadcast %387 : vector<16x1xf32> to vector<16x32xf32>
    %389 = arith.subf %379, %388 : vector<16x32xf32>
    %390 = arith.mulf %389, %389 : vector<16x32xf32>
    %cst_170 = arith.constant dense<0.000000e+00> : vector<16xf32>
    %391 = vector.multi_reduction <add>, %390, %cst_170 [1] : vector<16x32xf32> to vector<16xf32>
    %392 = vector.shape_cast %391 : vector<16xf32> to vector<16x1xf32>
    %cst_171 = arith.constant 3.200000e+01 : f32
    %393 = vector.broadcast %cst_171 : f32 to vector<16x1xf32>
    %394 = arith.divf %392, %393 : vector<16x1xf32>
    %395 = vector.broadcast %387 : vector<16x1xf32> to vector<16x32xf32>
    %396 = arith.subf %379, %395 : vector<16x32xf32>
    %cst_172 = arith.constant 9.99999974E-6 : f32
    %397 = vector.broadcast %cst_172 : f32 to vector<16x1xf32>
    %398 = arith.addf %394, %397 : vector<16x1xf32>
    %399 = math.rsqrt %398 : vector<16x1xf32>
    %400 = vector.broadcast %399 : vector<16x1xf32> to vector<16x32xf32>
    %401 = arith.mulf %396, %400 : vector<16x32xf32>
    %402 = vector.broadcast %381 : vector<1x32xf32> to vector<16x32xf32>
    %403 = arith.mulf %401, %402 : vector<16x32xf32>
    %404 = vector.broadcast %383 : vector<1x32xf32> to vector<16x32xf32>
    %405 = arith.addf %403, %404 : vector<16x32xf32>
    %c1_173 = arith.constant 1 : index
    %c0_174 = arith.constant 0 : index
    %c0_175 = arith.constant 0 : index
    %406 = vector.load %arg15[%c1_173, %c0_174, %c0_175] : memref<2x64x32xf32, #tpu.memory_space<vmem>>, vector<1x64x32xf32>
    %407 = vector.shape_cast %406 : vector<1x64x32xf32> to vector<64x32xf32>
    %cst_176 = arith.constant dense<0.000000e+00> : vector<32x32xf32>
    %408 = tpu.matmul %371, %407, %cst_176 {dimension_numbers = #tpu.dot_dimension_numbers<[1], [0], [0], [1], [0, 0, 1, 1], [], []>} : vector<32x64xf32>, vector<64x32xf32>, vector<32x32xf32> -> vector<32x32xf32>
    %409 = arith.addf %269, %408 : vector<32x32xf32>
    %c1_177 = arith.constant 1 : index
    %c0_178 = arith.constant 0 : index
    %c0_179 = arith.constant 0 : index
    %410 = vector.load %arg16[%c1_177, %c0_178, %c0_179] : memref<2x1x32xf32, #tpu.memory_space<vmem>>, vector<1x1x32xf32>
    %411 = vector.shape_cast %410 : vector<1x1x32xf32> to vector<1x32xf32>
    %412 = vector.broadcast %411 : vector<1x32xf32> to vector<32x32xf32>
    %413 = arith.addf %409, %412 : vector<32x32xf32>
    %c1_180 = arith.constant 1 : index
    %c0_181 = arith.constant 0 : index
    %c0_182 = arith.constant 0 : index
    %414 = vector.load %arg17[%c1_180, %c0_181, %c0_182] : memref<2x1x32xf32, #tpu.memory_space<vmem>>, vector<1x1x32xf32>
    %415 = vector.shape_cast %414 : vector<1x1x32xf32> to vector<1x32xf32>
    %c1_183 = arith.constant 1 : index
    %c0_184 = arith.constant 0 : index
    %c0_185 = arith.constant 0 : index
    %416 = vector.load %arg18[%c1_183, %c0_184, %c0_185] : memref<2x1x32xf32, #tpu.memory_space<vmem>>, vector<1x1x32xf32>
    %417 = vector.shape_cast %416 : vector<1x1x32xf32> to vector<1x32xf32>
    %cst_186 = arith.constant dense<0.000000e+00> : vector<32xf32>
    %418 = vector.multi_reduction <add>, %413, %cst_186 [1] : vector<32x32xf32> to vector<32xf32>
    %419 = vector.shape_cast %418 : vector<32xf32> to vector<32x1xf32>
    %cst_187 = arith.constant 3.200000e+01 : f32
    %420 = vector.broadcast %cst_187 : f32 to vector<32x1xf32>
    %421 = arith.divf %419, %420 : vector<32x1xf32>
    %422 = vector.broadcast %421 : vector<32x1xf32> to vector<32x32xf32>
    %423 = arith.subf %413, %422 : vector<32x32xf32>
    %424 = arith.mulf %423, %423 : vector<32x32xf32>
    %cst_188 = arith.constant dense<0.000000e+00> : vector<32xf32>
    %425 = vector.multi_reduction <add>, %424, %cst_188 [1] : vector<32x32xf32> to vector<32xf32>
    %426 = vector.shape_cast %425 : vector<32xf32> to vector<32x1xf32>
    %cst_189 = arith.constant 3.200000e+01 : f32
    %427 = vector.broadcast %cst_189 : f32 to vector<32x1xf32>
    %428 = arith.divf %426, %427 : vector<32x1xf32>
    %429 = vector.broadcast %421 : vector<32x1xf32> to vector<32x32xf32>
    %430 = arith.subf %413, %429 : vector<32x32xf32>
    %cst_190 = arith.constant 9.99999974E-6 : f32
    %431 = vector.broadcast %cst_190 : f32 to vector<32x1xf32>
    %432 = arith.addf %428, %431 : vector<32x1xf32>
    %433 = math.rsqrt %432 : vector<32x1xf32>
    %434 = vector.broadcast %433 : vector<32x1xf32> to vector<32x32xf32>
    %435 = arith.mulf %430, %434 : vector<32x32xf32>
    %436 = vector.broadcast %415 : vector<1x32xf32> to vector<32x32xf32>
    %437 = arith.mulf %435, %436 : vector<32x32xf32>
    %438 = vector.broadcast %417 : vector<1x32xf32> to vector<32x32xf32>
    %439 = arith.addf %437, %438 : vector<32x32xf32>
    %c0_191 = arith.constant 0 : index
    %c0_192 = arith.constant 0 : index
    %440 = vector.load %arg19[%c0_191, %c0_192] : memref<16x32xf32, #tpu.memory_space<vmem>>, vector<16x32xf32>
    tpu.vector_store %arg19[%c0_191, %c0_192], %405 {strides = array<i32>} : memref<16x32xf32, #tpu.memory_space<vmem>>, vector<16x32xf32>,
    %c0_193 = arith.constant 0 : index
    %c0_194 = arith.constant 0 : index
    %441 = vector.load %arg20[%c0_193, %c0_194] : memref<32x32xf32, #tpu.memory_space<vmem>>, vector<32x32xf32>
    tpu.vector_store %arg20[%c0_193, %c0_194], %439 {strides = array<i32>} : memref<32x32xf32, #tpu.memory_space<vmem>>, vector<32x32xf32>,
    return
  }
  func.func @transform_0(%arg0: i32) -> (i32, i32) {
    %c0_i32 = arith.constant 0 : i32
    %c0_i32_0 = arith.constant 0 : i32
    %c0_i32_1 = arith.constant 0 : i32
    return %c0_i32, %c0_i32_0 : i32, i32
  }
  func.func @transform_1(%arg0: i32) -> (i32, i32) {
    %c0_i32 = arith.constant 0 : i32
    %c0_i32_0 = arith.constant 0 : i32
    %c0_i32_1 = arith.constant 0 : i32
    return %c0_i32, %c0_i32_0 : i32, i32
  }
  func.func @transform_2(%arg0: i32) -> (i32, i32) {
    %c0_i32 = arith.constant 0 : i32
    %c0_i32_0 = arith.constant 0 : i32
    %c0_i32_1 = arith.constant 0 : i32
    return %c0_i32, %c0_i32_0 : i32, i32
  }
  func.func @transform_3(%arg0: i32) -> (i32, i32) {
    %c0_i32 = arith.constant 0 : i32
    %c0_i32_0 = arith.constant 0 : i32
    %c0_i32_1 = arith.constant 0 : i32
    return %c0_i32, %c0_i32_0 : i32, i32
  }
  func.func @transform_4(%arg0: i32) -> (i32, i32, i32) {
    %c0_i32 = arith.constant 0 : i32
    %c0_i32_0 = arith.constant 0 : i32
    %c0_i32_1 = arith.constant 0 : i32
    %c0_i32_2 = arith.constant 0 : i32
    return %c0_i32, %c0_i32_0, %c0_i32_1 : i32, i32, i32
  }
  func.func @transform_5(%arg0: i32) -> (i32, i32, i32) {
    %c0_i32 = arith.constant 0 : i32
    %c0_i32_0 = arith.constant 0 : i32
    %c0_i32_1 = arith.constant 0 : i32
    %c0_i32_2 = arith.constant 0 : i32
    return %c0_i32, %c0_i32_0, %c0_i32_1 : i32, i32, i32
  }
  func.func @transform_6(%arg0: i32) -> (i32, i32, i32) {
    %c0_i32 = arith.constant 0 : i32
    %c0_i32_0 = arith.constant 0 : i32
    %c0_i32_1 = arith.constant 0 : i32
    %c0_i32_2 = arith.constant 0 : i32
    return %c0_i32, %c0_i32_0, %c0_i32_1 : i32, i32, i32
  }
  func.func @transform_7(%arg0: i32) -> (i32, i32, i32) {
    %c0_i32 = arith.constant 0 : i32
    %c0_i32_0 = arith.constant 0 : i32
    %c0_i32_1 = arith.constant 0 : i32
    %c0_i32_2 = arith.constant 0 : i32
    return %c0_i32, %c0_i32_0, %c0_i32_1 : i32, i32, i32
  }
  func.func @transform_8(%arg0: i32) -> (i32, i32, i32) {
    %c0_i32 = arith.constant 0 : i32
    %c0_i32_0 = arith.constant 0 : i32
    %c0_i32_1 = arith.constant 0 : i32
    %c0_i32_2 = arith.constant 0 : i32
    return %c0_i32, %c0_i32_0, %c0_i32_1 : i32, i32, i32
  }
  func.func @transform_9(%arg0: i32) -> (i32, i32, i32) {
    %c0_i32 = arith.constant 0 : i32
    %c0_i32_0 = arith.constant 0 : i32
    %c0_i32_1 = arith.constant 0 : i32
    %c0_i32_2 = arith.constant 0 : i32
    return %c0_i32, %c0_i32_0, %c0_i32_1 : i32, i32, i32
  }
  func.func @transform_10(%arg0: i32) -> (i32, i32, i32) {
    %c0_i32 = arith.constant 0 : i32
    %c0_i32_0 = arith.constant 0 : i32
    %c0_i32_1 = arith.constant 0 : i32
    %c0_i32_2 = arith.constant 0 : i32
    return %c0_i32, %c0_i32_0, %c0_i32_1 : i32, i32, i32
  }
  func.func @transform_11(%arg0: i32) -> (i32, i32, i32) {
    %c0_i32 = arith.constant 0 : i32
    %c0_i32_0 = arith.constant 0 : i32
    %c0_i32_1 = arith.constant 0 : i32
    %c0_i32_2 = arith.constant 0 : i32
    return %c0_i32, %c0_i32_0, %c0_i32_1 : i32, i32, i32
  }
  func.func @transform_12(%arg0: i32) -> (i32, i32, i32) {
    %c0_i32 = arith.constant 0 : i32
    %c0_i32_0 = arith.constant 0 : i32
    %c0_i32_1 = arith.constant 0 : i32
    %c0_i32_2 = arith.constant 0 : i32
    return %c0_i32, %c0_i32_0, %c0_i32_1 : i32, i32, i32
  }
  func.func @transform_13(%arg0: i32) -> (i32, i32, i32) {
    %c0_i32 = arith.constant 0 : i32
    %c0_i32_0 = arith.constant 0 : i32
    %c0_i32_1 = arith.constant 0 : i32
    %c0_i32_2 = arith.constant 0 : i32
    return %c0_i32, %c0_i32_0, %c0_i32_1 : i32, i32, i32
  }
  func.func @transform_14(%arg0: i32) -> (i32, i32, i32) {
    %c0_i32 = arith.constant 0 : i32
    %c0_i32_0 = arith.constant 0 : i32
    %c0_i32_1 = arith.constant 0 : i32
    %c0_i32_2 = arith.constant 0 : i32
    return %c0_i32, %c0_i32_0, %c0_i32_1 : i32, i32, i32
  }
  func.func @transform_15(%arg0: i32) -> (i32, i32, i32) {
    %c0_i32 = arith.constant 0 : i32
    %c0_i32_0 = arith.constant 0 : i32
    %c0_i32_1 = arith.constant 0 : i32
    %c0_i32_2 = arith.constant 0 : i32
    return %c0_i32, %c0_i32_0, %c0_i32_1 : i32, i32, i32
  }
  func.func @transform_16(%arg0: i32) -> (i32, i32, i32) {
    %c0_i32 = arith.constant 0 : i32
    %c0_i32_0 = arith.constant 0 : i32
    %c0_i32_1 = arith.constant 0 : i32
    %c0_i32_2 = arith.constant 0 : i32
    return %c0_i32, %c0_i32_0, %c0_i32_1 : i32, i32, i32
  }
  func.func @transform_17(%arg0: i32) -> (i32, i32, i32) {
    %c0_i32 = arith.constant 0 : i32
    %c0_i32_0 = arith.constant 0 : i32
    %c0_i32_1 = arith.constant 0 : i32
    %c0_i32_2 = arith.constant 0 : i32
    return %c0_i32, %c0_i32_0, %c0_i32_1 : i32, i32, i32
  }
  func.func @transform_18(%arg0: i32) -> (i32, i32) {
    %c0_i32 = arith.constant 0 : i32
    %c0_i32_0 = arith.constant 0 : i32
    %c0_i32_1 = arith.constant 0 : i32
    return %c0_i32, %c0_i32_0 : i32, i32
  }
  func.func @transform_19(%arg0: i32) -> (i32, i32) {
    %c0_i32 = arith.constant 0 : i32
    %c0_i32_0 = arith.constant 0 : i32
    %c0_i32_1 = arith.constant 0 : i32
    return %c0_i32, %c0_i32_0 : i32, i32
  }
}

</mosaic_0001>

<llo_original>
// kernel: combined_encoder_layer.1
$region0: #{combined_encoder_layer.1}
  #allocation0 [shape = 'u32[]', space=smem, size = 0x4, offset = 0x4, fixed_abs, tag = 'smem constant byte address 0x4 - core index']
  #allocation1 [shape = 'u32[144,128]{1,0:T(1,128)}', space=vmem, size = 0x12000, scoped, tag = 'internal scratch']
  %s0 = inlined_call_operand.vmem [shape: f32[16,32], index: 0, kind: input, shape index: {}]
  %s1 = inlined_call_operand.vmem [shape: f32[32,32], index: 1, kind: input, shape index: {}]
  %s2 = inlined_call_operand.vmem [shape: f32[16,32], index: 2, kind: input, shape index: {}]
  %s3 = inlined_call_operand.vmem [shape: f32[32,16], index: 3, kind: input, shape index: {}]
  %s4 = inlined_call_operand.vmem [shape: f32[2,32,96], index: 4, kind: input, shape index: {}]
  %s5 = inlined_call_operand.vmem [shape: f32[2,1,96], index: 5, kind: input, shape index: {}]
  %s6 = inlined_call_operand.vmem [shape: f32[2,32,32], index: 6, kind: input, shape index: {}]
  %s7 = inlined_call_operand.vmem [shape: f32[2,1,32], index: 7, kind: input, shape index: {}]
  %s8 = inlined_call_operand.vmem [shape: f32[2,32,32], index: 8, kind: input, shape index: {}]
  %s9 = inlined_call_operand.vmem [shape: f32[2,1,32], index: 9, kind: input, shape index: {}]
  %s10 = inlined_call_operand.vmem [shape: f32[2,1,32], index: 10, kind: input, shape index: {}]
  %s11 = inlined_call_operand.vmem [shape: f32[2,1,32], index: 11, kind: input, shape index: {}]
  %s12 = inlined_call_operand.vmem [shape: f32[2,32,64], index: 12, kind: input, shape index: {}]
  %s13 = inlined_call_operand.vmem [shape: f32[2,1,64], index: 13, kind: input, shape index: {}]
  %s14 = inlined_call_operand.vmem [shape: f32[2,64,32], index: 14, kind: input, shape index: {}]
  %s15 = inlined_call_operand.vmem [shape: f32[2,1,32], index: 15, kind: input, shape index: {}]
  %s16 = inlined_call_operand.vmem [shape: f32[2,1,32], index: 16, kind: input, shape index: {}]
  %s17 = inlined_call_operand.vmem [shape: f32[2,1,32], index: 17, kind: input, shape index: {}]
  %s18 = inlined_call_operand.hbm [shape: f32[16,32], index: 18, kind: output, shape index: {0}]
  %s19 = inlined_call_operand.hbm [shape: f32[32,32], index: 19, kind: output, shape index: {1}]
  %20 = xla_tuple %s18, %s19
  %s21 = sld [smem:[#allocation0]]
  $region90: #{combined_encoder_layer.1} parent=0
    _
  %s23 = ssub.s32 1, %s21
  %s24 = scalar_select 0, %s23, %s21
  $region1: #{combined_encoder_layer.1} parent=0
    #allocation2 [shape = 'u8[8192]{0}', space=vmem, size = 0x2000, scoped, tag = 'output window, operand 0, single buffered']
    #allocation3 [shape = 's32[1]{0}', space=sflag, size = 0x4, scoped, tag = 'scoped memory for combined_encoder_layer.1']
    #allocation4 [shape = 'u8[16384]{0}', space=vmem, size = 0x4000, scoped, tag = 'output window, operand 1, single buffered']
    #allocation5 [shape = 's32[1]{0}', space=sflag, size = 0x4, scoped, tag = 'scoped memory for combined_encoder_layer.1']
    %25 = vsyncpa [#allocation3], 0
    %26 = vsyncpa [#allocation5], 0
    // Predicated region
    $region2: #{combined_encoder_layer.1} parent=1 // pred_check
      _
    $region3: #{combined_encoder_layer.1} parent=1 // pred_check_branch
      %28 = sbr.rel (0) target = $region5
    $region4: #{combined_encoder_layer.1} parent=1 // pred_region
      _
    $region5: #{combined_encoder_layer.1} parent=1 // pred_fallthru
      _
    // Predicated region
    $region6: #{combined_encoder_layer.1} parent=1 // pred_check
      _
    $region7: #{combined_encoder_layer.1} parent=1 // pred_check_branch
      %30 = sbr.rel (0) target = $region9
    $region8: #{combined_encoder_layer.1} parent=1 // pred_region
      _
    $region9: #{combined_encoder_layer.1} parent=1 // pred_fallthru
      _
    // Predicated region
    $region10: #{combined_encoder_layer.1} parent=1 // pred_check
      _
    $region11: #{combined_encoder_layer.1} parent=1 // pred_check_branch
      %32 = sbr.rel (0) target = $region13
    $region12: #{combined_encoder_layer.1} parent=1 // pred_region
      _
    $region13: #{combined_encoder_layer.1} parent=1 // pred_fallthru
      _
    // Predicated region
    $region14: #{combined_encoder_layer.1} parent=1 // pred_check
      _
    $region15: #{combined_encoder_layer.1} parent=1 // pred_check_branch
      %34 = sbr.rel (0) target = $region17
    $region16: #{combined_encoder_layer.1} parent=1 // pred_region
      _
    $region17: #{combined_encoder_layer.1} parent=1 // pred_fallthru
      _
    // Predicated region
    $region18: #{combined_encoder_layer.1} parent=1 // pred_check
      _
    $region19: #{combined_encoder_layer.1} parent=1 // pred_check_branch
      %36 = sbr.rel (0) target = $region21
    $region20: #{combined_encoder_layer.1} parent=1 // pred_region
      _
    $region21: #{combined_encoder_layer.1} parent=1 // pred_fallthru
      _
    // Predicated region
    $region22: #{combined_encoder_layer.1} parent=1 // pred_check
      _
    $region23: #{combined_encoder_layer.1} parent=1 // pred_check_branch
      %38 = sbr.rel (0) target = $region25
    $region24: #{combined_encoder_layer.1} parent=1 // pred_region
      _
    $region25: #{combined_encoder_layer.1} parent=1 // pred_fallthru
      _
    // Predicated region
    $region26: #{combined_encoder_layer.1} parent=1 // pred_check
      _
    $region27: #{combined_encoder_layer.1} parent=1 // pred_check_branch
      %40 = sbr.rel (0) target = $region29
    $region28: #{combined_encoder_layer.1} parent=1 // pred_region
      _
    $region29: #{combined_encoder_layer.1} parent=1 // pred_fallthru
      _
    // Predicated region
    $region30: #{combined_encoder_layer.1} parent=1 // pred_check
      _
    $region31: #{combined_encoder_layer.1} parent=1 // pred_check_branch
      %42 = sbr.rel (0) target = $region33
    $region32: #{combined_encoder_layer.1} parent=1 // pred_region
      _
    $region33: #{combined_encoder_layer.1} parent=1 // pred_fallthru
      _
    // Predicated region
    $region34: #{combined_encoder_layer.1} parent=1 // pred_check
      _
    $region35: #{combined_encoder_layer.1} parent=1 // pred_check_branch
      %44 = sbr.rel (0) target = $region37
    $region36: #{combined_encoder_layer.1} parent=1 // pred_region
      _
    $region37: #{combined_encoder_layer.1} parent=1 // pred_fallthru
      _
    // Predicated region
    $region38: #{combined_encoder_layer.1} parent=1 // pred_check
      _
    $region39: #{combined_encoder_layer.1} parent=1 // pred_check_branch
      %46 = sbr.rel (0) target = $region41
    $region40: #{combined_encoder_layer.1} parent=1 // pred_region
      _
    $region41: #{combined_encoder_layer.1} parent=1 // pred_fallthru
      _
    // Predicated region
    $region42: #{combined_encoder_layer.1} parent=1 // pred_check
      _
    $region43: #{combined_encoder_layer.1} parent=1 // pred_check_branch
      %48 = sbr.rel (0) target = $region45
    $region44: #{combined_encoder_layer.1} parent=1 // pred_region
      _
    $region45: #{combined_encoder_layer.1} parent=1 // pred_fallthru
      _
    // Predicated region
    $region46: #{combined_encoder_layer.1} parent=1 // pred_check
      _
    $region47: #{combined_encoder_layer.1} parent=1 // pred_check_branch
      %50 = sbr.rel (0) target = $region49
    $region48: #{combined_encoder_layer.1} parent=1 // pred_region
      _
    $region49: #{combined_encoder_layer.1} parent=1 // pred_fallthru
      _
    // Predicated region
    $region50: #{combined_encoder_layer.1} parent=1 // pred_check
      _
    $region51: #{combined_encoder_layer.1} parent=1 // pred_check_branch
      %52 = sbr.rel (0) target = $region53
    $region52: #{combined_encoder_layer.1} parent=1 // pred_region
      _
    $region53: #{combined_encoder_layer.1} parent=1 // pred_fallthru
      _
    // Predicated region
    $region54: #{combined_encoder_layer.1} parent=1 // pred_check
      _
    $region55: #{combined_encoder_layer.1} parent=1 // pred_check_branch
      %54 = sbr.rel (0) target = $region57
    $region56: #{combined_encoder_layer.1} parent=1 // pred_region
      _
    $region57: #{combined_encoder_layer.1} parent=1 // pred_fallthru
      _
    // Predicated region
    $region58: #{combined_encoder_layer.1} parent=1 // pred_check
      _
    $region59: #{combined_encoder_layer.1} parent=1 // pred_check_branch
      %56 = sbr.rel (0) target = $region61
    $region60: #{combined_encoder_layer.1} parent=1 // pred_region
      _
    $region61: #{combined_encoder_layer.1} parent=1 // pred_fallthru
      _
    // Predicated region
    $region62: #{combined_encoder_layer.1} parent=1 // pred_check
      _
    $region63: #{combined_encoder_layer.1} parent=1 // pred_check_branch
      %58 = sbr.rel (0) target = $region65
    $region64: #{combined_encoder_layer.1} parent=1 // pred_region
      _
    $region65: #{combined_encoder_layer.1} parent=1 // pred_fallthru
      _
    // Predicated region
    $region66: #{combined_encoder_layer.1} parent=1 // pred_check
      _
    $region67: #{combined_encoder_layer.1} parent=1 // pred_check_branch
      %60 = sbr.rel (0) target = $region69
    $region68: #{combined_encoder_layer.1} parent=1 // pred_region
      _
    $region69: #{combined_encoder_layer.1} parent=1 // pred_fallthru
      _
    // Predicated region
    $region70: #{combined_encoder_layer.1} parent=1 // pred_check
      _
    $region71: #{combined_encoder_layer.1} parent=1 // pred_check_branch
      %62 = sbr.rel (0) target = $region73
    $region72: #{combined_encoder_layer.1} parent=1 // pred_region
      _
    $region73: #{combined_encoder_layer.1} parent=1 // pred_fallthru
      _
    %v63 = vld [vmem:[%s0] sm:$0xff]
    %v64 = vld [vmem:[%s0 + $0x8] sm:$0xff]
    %v65 = vld [vmem:[%s1] sm:$0xff]
    %v66 = vld [vmem:[%s1 + $0x8] sm:$0xff]
    %v67 = vld [vmem:[%s1 + $0x10] sm:$0xff]
    %v68 = vld [vmem:[%s1 + $0x18] sm:$0xff]
    %v69 = vld [vmem:[%s4] sm:$0xff]
    %v70 = vld [vmem:[%s4 + $0x8] sm:$0xff]
    %v71 = vld [vmem:[%s4 + $0x10] sm:$0xff]
    %v72 = vld [vmem:[%s4 + $0x18] sm:$0xff]
    %v73 = vld [vmem:[%s5] sm:$0x1]
    %v75 = vlaneseq
    %v76 = vshrl.u32 %v75, 7
    %v77 = vsub.s32 0, %v76
    %v78 = vrot.slane %v73, %v77
    %vm80 = vcmask 261120
    %v82 = vsel %vm80, %v63, 0
    %v85 = vsel %vm80, %v64, 0
    %87 = vmatprep.subr.mxu0 0.0
    %88 = vmatpush1.msra.mxu0 %v69
    %89 = vmatprep.subr.mxu0 0.0
    %90 = vmatpush1.msra.mxu0 %v70
    %91 = vmatprep.subr.mxu0 0.0
    %92 = vmatpush1.msra.mxu0 %v71
    %93 = vmatprep.subr.mxu0 0.0
    %94 = vmatpush1.msra.mxu0 %v72
    %95 = vmatprep.subr.mxu0 0.0
    %96 = vmatpush1.msra.mxu0 0.0
    %97 = vmatprep.subr.mxu0 0.0
    %98 = vmatpush1.msra.mxu0 0.0
    %99 = vmatprep.subr.mxu0 0.0
    %100 = vmatpush1.msra.mxu0 0.0
    %101 = vmatprep.subr.mxu0 0.0
    %102 = vmatpush1.msra.mxu0 0.0
    %103 = vmatprep.subr.mxu0 0.0
    %104 = vmatpush1.msra.mxu0 0.0
    %105 = vmatprep.subr.mxu0 0.0
    %106 = vmatpush1.msra.mxu0 0.0
    %107 = vmatprep.subr.mxu0 0.0
    %108 = vmatpush1.msra.mxu0 0.0
    %109 = vmatprep.subr.mxu0 0.0
    %110 = vmatpush1.msra.mxu0 0.0
    %111 = vmatprep.subr.mxu0 0.0
    %112 = vmatpush1.msra.mxu0 0.0
    %113 = vmatprep.subr.mxu0 0.0
    %114 = vmatpush1.msra.mxu0 0.0
    %115 = vmatprep.subr.mxu0 0.0
    %116 = vmatpush1.msra.mxu0 0.0
    %117 = vmatprep.subr.mxu0 0.0
    %118 = vmatpush1.msra.mxu0 0.0
    %119 = vmatprep.subr.mxu0 0.0
    %120 = vmatpush1.msra.mxu0 0.0
    %121 = vmatprep.subr.mxu0 0.0
    %122 = vmatpush1.msra.mxu0 0.0
    %123 = vmatprep.subr.mxu0 0.0
    %124 = vmatpush1.msra.mxu0 0.0
    %125 = vmatprep.subr.mxu0 0.0
    %126 = vmatpush1.msra.mxu0 0.0
    %127 = vmatprep.subr.mxu0 0.0
    %128 = vmatpush1.msra.mxu0 0.0
    %129 = vmatprep.subr.mxu0 0.0
    %130 = vmatpush1.msra.mxu0 0.0
    %131 = vmatprep.subr.mxu0 0.0
    %132 = vmatpush1.msra.mxu0 0.0
    %133 = vmatprep.subr.mxu0 0.0
    %134 = vmatpush1.msra.mxu0 0.0
    %135 = vmatprep.subr.mxu0 0.0
    %136 = vmatpush1.msra.mxu0 0.0
    %137 = vmatprep.subr.mxu0 0.0
    %138 = vmatpush1.msra.mxu0 0.0
    %139 = vmatprep.subr.mxu0 0.0
    %140 = vmatpush1.msra.mxu0 0.0
    %141 = vmatprep.subr.mxu0 0.0
    %142 = vmatpush1.msra.mxu0 0.0
    %143 = vmatprep.subr.mxu0 0.0
    %144 = vmatpush1.msra.mxu0 0.0
    %145 = vmatprep.subr.mxu0 0.0
    %146 = vmatpush1.msra.mxu0 0.0
    %147 = vmatprep.subr.mxu0 0.0
    %148 = vmatpush1.msra.mxu0 0.0
    %149 = vmatprep.subr.mxu0 0.0
    %150 = vmatpush1.msra.mxu0 0.0
    %151 = vmatprep.mubr.f32.mxu0 0.0
    %152 = vmatmul.mubr.f32.gmra.mrb[0].mxu0 %v82
    %v153 = vpop.f32.mrb[0].mxu0
    %v154 = vadd.f32 %v78, %v153
    %v155 = vpop.f32.mrb[0].mxu0
    %156 = vmatprep.mubr.f32.mxu0 0.0
    %157 = vmatmul.mubr.f32.gmra.mrb[0].mxu0 %v85
    %v158 = vpop.f32.mrb[0].mxu0
    %v159 = vadd.f32 %v78, %v158
    %v160 = vpop.f32.mrb[0].mxu0
    %161 = vdwg.mxu0
    %s162 = scalar_lea.vmem %s4, 32
    %v163 = vld [vmem:[%s162] sm:$0xff]
    %v164 = vld [vmem:[%s162 + $0x8] sm:$0xff]
    %v165 = vld [vmem:[%s162 + $0x10] sm:$0xff]
    %v166 = vld [vmem:[%s162 + $0x18] sm:$0xff]
    %s167 = scalar_lea.vmem %s5, 1
    %v168 = vld [vmem:[%s167] sm:$0x1]
    %v170 = vlaneseq
    %v171 = vshrl.u32 %v170, 7
    %v172 = vsub.s32 0, %v171
    %v173 = vrot.slane %v168, %v172
    %v176 = vsel %vm80, %v65, 0
    %v179 = vsel %vm80, %v66, 0
    %v182 = vsel %vm80, %v67, 0
    %v185 = vsel %vm80, %v68, 0
    %187 = vmatprep.subr.mxu0 0.0
    %188 = vmatpush1.msra.mxu0 %v163
    %189 = vmatprep.subr.mxu0 0.0
    %190 = vmatpush1.msra.mxu0 %v164
    %191 = vmatprep.subr.mxu0 0.0
    %192 = vmatpush1.msra.mxu0 %v165
    %193 = vmatprep.subr.mxu0 0.0
    %194 = vmatpush1.msra.mxu0 %v166
    %195 = vmatprep.subr.mxu0 0.0
    %196 = vmatpush1.msra.mxu0 0.0
    %197 = vmatprep.subr.mxu0 0.0
    %198 = vmatpush1.msra.mxu0 0.0
    %199 = vmatprep.subr.mxu0 0.0
    %200 = vmatpush1.msra.mxu0 0.0
    %201 = vmatprep.subr.mxu0 0.0
    %202 = vmatpush1.msra.mxu0 0.0
    %203 = vmatprep.subr.mxu0 0.0
    %204 = vmatpush1.msra.mxu0 0.0
    %205 = vmatprep.subr.mxu0 0.0
    %206 = vmatpush1.msra.mxu0 0.0
    %207 = vmatprep.subr.mxu0 0.0
    %208 = vmatpush1.msra.mxu0 0.0
    %209 = vmatprep.subr.mxu0 0.0
    %210 = vmatpush1.msra.mxu0 0.0
    %211 = vmatprep.subr.mxu0 0.0
    %212 = vmatpush1.msra.mxu0 0.0
    %213 = vmatprep.subr.mxu0 0.0
    %214 = vmatpush1.msra.mxu0 0.0
    %215 = vmatprep.subr.mxu0 0.0
    %216 = vmatpush1.msra.mxu0 0.0
    %217 = vmatprep.subr.mxu0 0.0
    %218 = vmatpush1.msra.mxu0 0.0
    %219 = vmatprep.subr.mxu0 0.0
    %220 = vmatpush1.msra.mxu0 0.0
    %221 = vmatprep.subr.mxu0 0.0
    %222 = vmatpush1.msra.mxu0 0.0
    %223 = vmatprep.subr.mxu0 0.0
    %224 = vmatpush1.msra.mxu0 0.0
    %225 = vmatprep.subr.mxu0 0.0
    %226 = vmatpush1.msra.mxu0 0.0
    %227 = vmatprep.subr.mxu0 0.0
    %228 = vmatpush1.msra.mxu0 0.0
    %229 = vmatprep.subr.mxu0 0.0
    %230 = vmatpush1.msra.mxu0 0.0
    %231 = vmatprep.subr.mxu0 0.0
    %232 = vmatpush1.msra.mxu0 0.0
    %233 = vmatprep.subr.mxu0 0.0
    %234 = vmatpush1.msra.mxu0 0.0
    %235 = vmatprep.subr.mxu0 0.0
    %236 = vmatpush1.msra.mxu0 0.0
    %237 = vmatprep.subr.mxu0 0.0
    %238 = vmatpush1.msra.mxu0 0.0
    %239 = vmatprep.subr.mxu0 0.0
    %240 = vmatpush1.msra.mxu0 0.0
    %241 = vmatprep.subr.mxu0 0.0
    %242 = vmatpush1.msra.mxu0 0.0
    %243 = vmatprep.subr.mxu0 0.0
    %244 = vmatpush1.msra.mxu0 0.0
    %245 = vmatprep.subr.mxu0 0.0
    %246 = vmatpush1.msra.mxu0 0.0
    %247 = vmatprep.subr.mxu0 0.0
    %248 = vmatpush1.msra.mxu0 0.0
    %249 = vmatprep.subr.mxu0 0.0
    %250 = vmatpush1.msra.mxu0 0.0
    %251 = vmatprep.mubr.f32.mxu0 0.0
    %252 = vmatmul.mubr.f32.gmra.mrb[0].mxu0 %v176
    %v253 = vpop.f32.mrb[0].mxu0
    %v254 = vadd.f32 %v173, %v253
    %v255 = vpop.f32.mrb[0].mxu0
    %256 = vmatprep.mubr.f32.mxu0 0.0
    %257 = vmatmul.mubr.f32.gmra.mrb[0].mxu0 %v179
    %v258 = vpop.f32.mrb[0].mxu0
    %v259 = vadd.f32 %v173, %v258
    %v260 = vpop.f32.mrb[0].mxu0
    %261 = vmatprep.mubr.f32.mxu0 0.0
    %262 = vmatmul.mubr.f32.gmra.mrb[0].mxu0 %v182
    %v263 = vpop.f32.mrb[0].mxu0
    %v264 = vadd.f32 %v173, %v263
    %v265 = vpop.f32.mrb[0].mxu0
    %266 = vmatprep.mubr.f32.mxu0 0.0
    %267 = vmatmul.mubr.f32.gmra.mrb[0].mxu0 %v185
    %v268 = vpop.f32.mrb[0].mxu0
    %v269 = vadd.f32 %v173, %v268
    %v270 = vpop.f32.mrb[0].mxu0
    %271 = vdwg.mxu0
    %v272 = vld [vmem:[%s2] sm:$0xff]
    %v273 = vld [vmem:[%s2 + $0x8] sm:$0xff]
    %v274 = vld [vmem:[%s3] sm:$0xff]
    %v275 = vld [vmem:[%s3 + $0x8] sm:$0xff]
    %v276 = vld [vmem:[%s3 + $0x10] sm:$0xff]
    %v277 = vld [vmem:[%s3 + $0x18] sm:$0xff]
    %v278 = vld [vmem:[%s6] sm:$0xff]
    %v279 = vld [vmem:[%s6 + $0x8] sm:$0xff]
    %v280 = vld [vmem:[%s6 + $0x10] sm:$0xff]
    %v281 = vld [vmem:[%s6 + $0x18] sm:$0xff]
    %v282 = vld [vmem:[%s7] sm:$0x1]
    %287 = vrot.lane.b32.xlu0 %v254, 96
    %v288 = vpop.permute.xlu0 %287
    %289 = vrot.lane.b32.xlu0 %v259, 96
    %v290 = vpop.permute.xlu0 %289
    %291 = vrot.lane.b32.xlu0 %v264, 96
    %v292 = vpop.permute.xlu0 %291
    %293 = vrot.lane.b32.xlu0 %v269, 96
    %v294 = vpop.permute.xlu0 %293
    %vm295 = vcmask 64512
    %v297 = vsel %vm295, %v154, 0
    %v300 = vsel %vm295, %v159, 0
    %v302 = vsel %vm295, %v288, 0
    %v304 = vsel %vm295, %v290, 0
    %v306 = vsel %vm295, %v292, 0
    %v308 = vsel %vm295, %v294, 0
    %310 = vmatprep.subr.mxu0 0.0
    %311 = vmatpush1.xpose.msra.mxu0 %v302
    %312 = vmatprep.subr.mxu0 0.0
    %313 = vmatpush1.xpose.msra.mxu0 %v304
    %314 = vmatprep.subr.mxu0 0.0
    %315 = vmatpush1.xpose.msra.mxu0 %v306
    %316 = vmatprep.subr.mxu0 0.0
    %317 = vmatpush1.xpose.msra.mxu0 %v308
    %318 = vmatprep.subr.mxu0 0.0
    %319 = vmatpush1.xpose.msra.mxu0 0.0
    %320 = vmatprep.subr.mxu0 0.0
    %321 = vmatpush1.xpose.msra.mxu0 0.0
    %322 = vmatprep.subr.mxu0 0.0
    %323 = vmatpush1.xpose.msra.mxu0 0.0
    %324 = vmatprep.subr.mxu0 0.0
    %325 = vmatpush1.xpose.msra.mxu0 0.0
    %326 = vmatprep.subr.mxu0 0.0
    %327 = vmatpush1.xpose.msra.mxu0 0.0
    %328 = vmatprep.subr.mxu0 0.0
    %329 = vmatpush1.xpose.msra.mxu0 0.0
    %330 = vmatprep.subr.mxu0 0.0
    %331 = vmatpush1.xpose.msra.mxu0 0.0
    %332 = vmatprep.subr.mxu0 0.0
    %333 = vmatpush1.xpose.msra.mxu0 0.0
    %334 = vmatprep.subr.mxu0 0.0
    %335 = vmatpush1.xpose.msra.mxu0 0.0
    %336 = vmatprep.subr.mxu0 0.0
    %337 = vmatpush1.xpose.msra.mxu0 0.0
    %338 = vmatprep.subr.mxu0 0.0
    %339 = vmatpush1.xpose.msra.mxu0 0.0
    %340 = vmatprep.subr.mxu0 0.0
    %341 = vmatpush1.xpose.msra.mxu0 0.0
    %342 = vmatprep.subr.mxu0 0.0
    %343 = vmatpush1.xpose.msra.mxu0 0.0
    %344 = vmatprep.subr.mxu0 0.0
    %345 = vmatpush1.xpose.msra.mxu0 0.0
    %346 = vmatprep.subr.mxu0 0.0
    %347 = vmatpush1.xpose.msra.mxu0 0.0
    %348 = vmatprep.subr.mxu0 0.0
    %349 = vmatpush1.xpose.msra.mxu0 0.0
    %350 = vmatprep.subr.mxu0 0.0
    %351 = vmatpush1.xpose.msra.mxu0 0.0
    %352 = vmatprep.subr.mxu0 0.0
    %353 = vmatpush1.xpose.msra.mxu0 0.0
    %354 = vmatprep.subr.mxu0 0.0
    %355 = vmatpush1.xpose.msra.mxu0 0.0
    %356 = vmatprep.subr.mxu0 0.0
    %357 = vmatpush1.xpose.msra.mxu0 0.0
    %358 = vmatprep.subr.mxu0 0.0
    %359 = vmatpush1.xpose.msra.mxu0 0.0
    %360 = vmatprep.subr.mxu0 0.0
    %361 = vmatpush1.xpose.msra.mxu0 0.0
    %362 = vmatprep.subr.mxu0 0.0
    %363 = vmatpush1.xpose.msra.mxu0 0.0
    %364 = vmatprep.subr.mxu0 0.0
    %365 = vmatpush1.xpose.msra.mxu0 0.0
    %366 = vmatprep.subr.mxu0 0.0
    %367 = vmatpush1.xpose.msra.mxu0 0.0
    %368 = vmatprep.subr.mxu0 0.0
    %369 = vmatpush1.xpose.msra.mxu0 0.0
    %370 = vmatprep.subr.mxu0 0.0
    %371 = vmatpush1.xpose.msra.mxu0 0.0
    %372 = vmatprep.subr.mxu0 0.0
    %373 = vmatpush1.xpose.msra.mxu0 0.0
    %374 = vmatprep.mubr.f32.mxu0 0.0
    %375 = vmatmul.mubr.f32.gmra.mrb[0].mxu0 %v297
    %v376 = vpop.f32.mrb[0].mxu0
    %v377 = vadd.f32 %v272, %v376
    %v378 = vpop.f32.mrb[0].mxu0
    %379 = vmatprep.mubr.f32.mxu0 0.0
    %380 = vmatmul.mubr.f32.gmra.mrb[0].mxu0 %v300
    %v381 = vpop.f32.mrb[0].mxu0
    %v382 = vadd.f32 %v273, %v381
    %v383 = vpop.f32.mrb[0].mxu0
    %384 = vdwg.mxu0
    %v385 = vsel %vm80, %v377, -inf
    %386 = vmax.xlane.f32.xlu0 %v385
    %v387 = vpop.xlane.xlu0 %386
    %v388 = vsel %vm80, %v382, -inf
    %389 = vmax.xlane.f32.xlu0 %v388
    %v390 = vpop.xlane.xlu0 %389
    %v391 = vsub.f32 %v377, %v387
    %v392 = vsub.f32 %v382, %v390
    %v393 = vmul.f32 %v391, 1.442695
    %v394 = vpow.pop %v393
    %v395 = vmul.f32 %v392, 1.442695
    %v396 = vpow.pop %v395
    %v397 = vsel %vm80, %v394, 0.0
    %398 = vadd.xlane.f32.xlu0 %v397
    %v399 = vpop.xlane.xlu0 %398
    %v400 = vsel %vm80, %v396, 0.0
    %401 = vadd.xlane.f32.xlu0 %v400
    %v402 = vpop.xlane.xlu0 %401
    %v403 = vrcp.pop %v399
    %v404 = vrcp.pop %v402
    %v405 = vmul.f32 %v399, %v403
    %v406 = vmul.f32 %v402, %v404
    %v407 = vsub.f32 2.0, %v405
    %v408 = vsub.f32 2.0, %v406
    %v409 = vmul.f32 %v403, %v407
    %v410 = vmul.f32 %v404, %v408
    %v411 = vmul.f32 %v394, %v409
    %v412 = vmul.f32 %v396, %v410
    %413 = vrot.lane.b32.xlu0 %v254, 64
    %v414 = vpop.permute.xlu0 %413
    %415 = vrot.lane.b32.xlu0 %v259, 64
    %v416 = vpop.permute.xlu0 %415
    %417 = vrot.lane.b32.xlu0 %v264, 64
    %v418 = vpop.permute.xlu0 %417
    %419 = vrot.lane.b32.xlu0 %v269, 64
    %v420 = vpop.permute.xlu0 %419
    %v426 = vsel %vm80, %v411, 0
    %v429 = vsel %vm80, %v412, 0
    %431 = vmatprep.subr.mxu0 0.0
    %432 = vmatpush1.msra.mxu0 %v414
    %433 = vmatprep.subr.mxu0 0.0
    %434 = vmatpush1.msra.mxu0 %v416
    %435 = vmatprep.subr.mxu0 0.0
    %436 = vmatpush1.msra.mxu0 %v418
    %437 = vmatprep.subr.mxu0 0.0
    %438 = vmatpush1.msra.mxu0 %v420
    %439 = vmatprep.subr.mxu0 0.0
    %440 = vmatpush1.msra.mxu0 0.0
    %441 = vmatprep.subr.mxu0 0.0
    %442 = vmatpush1.msra.mxu0 0.0
    %443 = vmatprep.subr.mxu0 0.0
    %444 = vmatpush1.msra.mxu0 0.0
    %445 = vmatprep.subr.mxu0 0.0
    %446 = vmatpush1.msra.mxu0 0.0
    %447 = vmatprep.subr.mxu0 0.0
    %448 = vmatpush1.msra.mxu0 0.0
    %449 = vmatprep.subr.mxu0 0.0
    %450 = vmatpush1.msra.mxu0 0.0
    %451 = vmatprep.subr.mxu0 0.0
    %452 = vmatpush1.msra.mxu0 0.0
    %453 = vmatprep.subr.mxu0 0.0
    %454 = vmatpush1.msra.mxu0 0.0
    %455 = vmatprep.subr.mxu0 0.0
    %456 = vmatpush1.msra.mxu0 0.0
    %457 = vmatprep.subr.mxu0 0.0
    %458 = vmatpush1.msra.mxu0 0.0
    %459 = vmatprep.subr.mxu0 0.0
    %460 = vmatpush1.msra.mxu0 0.0
    %461 = vmatprep.subr.mxu0 0.0
    %462 = vmatpush1.msra.mxu0 0.0
    %463 = vmatprep.subr.mxu0 0.0
    %464 = vmatpush1.msra.mxu0 0.0
    %465 = vmatprep.subr.mxu0 0.0
    %466 = vmatpush1.msra.mxu0 0.0
    %467 = vmatprep.subr.mxu0 0.0
    %468 = vmatpush1.msra.mxu0 0.0
    %469 = vmatprep.subr.mxu0 0.0
    %470 = vmatpush1.msra.mxu0 0.0
    %471 = vmatprep.subr.mxu0 0.0
    %472 = vmatpush1.msra.mxu0 0.0
    %473 = vmatprep.subr.mxu0 0.0
    %474 = vmatpush1.msra.mxu0 0.0
    %475 = vmatprep.subr.mxu0 0.0
    %476 = vmatpush1.msra.mxu0 0.0
    %477 = vmatprep.subr.mxu0 0.0
    %478 = vmatpush1.msra.mxu0 0.0
    %479 = vmatprep.subr.mxu0 0.0
    %480 = vmatpush1.msra.mxu0 0.0
    %481 = vmatprep.subr.mxu0 0.0
    %482 = vmatpush1.msra.mxu0 0.0
    %483 = vmatprep.subr.mxu0 0.0
    %484 = vmatpush1.msra.mxu0 0.0
    %485 = vmatprep.subr.mxu0 0.0
    %486 = vmatpush1.msra.mxu0 0.0
    %487 = vmatprep.subr.mxu0 0.0
    %488 = vmatpush1.msra.mxu0 0.0
    %489 = vmatprep.subr.mxu0 0.0
    %490 = vmatpush1.msra.mxu0 0.0
    %491 = vmatprep.subr.mxu0 0.0
    %492 = vmatpush1.msra.mxu0 0.0
    %493 = vmatprep.subr.mxu0 0.0
    %494 = vmatpush1.msra.mxu0 0.0
    %495 = vmatprep.mubr.f32.mxu0 0.0
    %496 = vmatmul.mubr.f32.gmra.mrb[0].mxu0 %v426
    %v497 = vpop.f32.mrb[0].mxu0
    %v498 = vadd.f32 0.0, %v497
    %v499 = vpop.f32.mrb[0].mxu0
    %500 = vmatprep.mubr.f32.mxu0 0.0
    %501 = vmatmul.mubr.f32.gmra.mrb[0].mxu0 %v429
    %v502 = vpop.f32.mrb[0].mxu0
    %v503 = vadd.f32 0.0, %v502
    %v504 = vpop.f32.mrb[0].mxu0
    %505 = vdwg.mxu0
    %506 = vrot.lane.b32.xlu0 %v154, 120
    %v507 = vpop.permute.xlu0 %506
    %508 = vrot.lane.b32.xlu0 %v159, 120
    %v509 = vpop.permute.xlu0 %508
    %510 = vrot.lane.b32.xlu0 %v254, 88
    %v511 = vpop.permute.xlu0 %510
    %512 = vrot.lane.b32.xlu0 %v259, 88
    %v513 = vpop.permute.xlu0 %512
    %514 = vrot.lane.b32.xlu0 %v264, 88
    %v515 = vpop.permute.xlu0 %514
    %516 = vrot.lane.b32.xlu0 %v269, 88
    %v517 = vpop.permute.xlu0 %516
    %v518 = vsel %vm295, %v507, 0
    %v520 = vsel %vm295, %v509, 0
    %v522 = vsel %vm295, %v511, 0
    %v524 = vsel %vm295, %v513, 0
    %v526 = vsel %vm295, %v515, 0
    %v528 = vsel %vm295, %v517, 0
    %530 = vmatprep.subr.mxu0 0.0
    %531 = vmatpush1.xpose.msra.mxu0 %v522
    %532 = vmatprep.subr.mxu0 0.0
    %533 = vmatpush1.xpose.msra.mxu0 %v524
    %534 = vmatprep.subr.mxu0 0.0
    %535 = vmatpush1.xpose.msra.mxu0 %v526
    %536 = vmatprep.subr.mxu0 0.0
    %537 = vmatpush1.xpose.msra.mxu0 %v528
    %538 = vmatprep.subr.mxu0 0.0
    %539 = vmatpush1.xpose.msra.mxu0 0.0
    %540 = vmatprep.subr.mxu0 0.0
    %541 = vmatpush1.xpose.msra.mxu0 0.0
    %542 = vmatprep.subr.mxu0 0.0
    %543 = vmatpush1.xpose.msra.mxu0 0.0
    %544 = vmatprep.subr.mxu0 0.0
    %545 = vmatpush1.xpose.msra.mxu0 0.0
    %546 = vmatprep.subr.mxu0 0.0
    %547 = vmatpush1.xpose.msra.mxu0 0.0
    %548 = vmatprep.subr.mxu0 0.0
    %549 = vmatpush1.xpose.msra.mxu0 0.0
    %550 = vmatprep.subr.mxu0 0.0
    %551 = vmatpush1.xpose.msra.mxu0 0.0
    %552 = vmatprep.subr.mxu0 0.0
    %553 = vmatpush1.xpose.msra.mxu0 0.0
    %554 = vmatprep.subr.mxu0 0.0
    %555 = vmatpush1.xpose.msra.mxu0 0.0
    %556 = vmatprep.subr.mxu0 0.0
    %557 = vmatpush1.xpose.msra.mxu0 0.0
    %558 = vmatprep.subr.mxu0 0.0
    %559 = vmatpush1.xpose.msra.mxu0 0.0
    %560 = vmatprep.subr.mxu0 0.0
    %561 = vmatpush1.xpose.msra.mxu0 0.0
    %562 = vmatprep.subr.mxu0 0.0
    %563 = vmatpush1.xpose.msra.mxu0 0.0
    %564 = vmatprep.subr.mxu0 0.0
    %565 = vmatpush1.xpose.msra.mxu0 0.0
    %566 = vmatprep.subr.mxu0 0.0
    %567 = vmatpush1.xpose.msra.mxu0 0.0
    %568 = vmatprep.subr.mxu0 0.0
    %569 = vmatpush1.xpose.msra.mxu0 0.0
    %570 = vmatprep.subr.mxu0 0.0
    %571 = vmatpush1.xpose.msra.mxu0 0.0
    %572 = vmatprep.subr.mxu0 0.0
    %573 = vmatpush1.xpose.msra.mxu0 0.0
    %574 = vmatprep.subr.mxu0 0.0
    %575 = vmatpush1.xpose.msra.mxu0 0.0
    %576 = vmatprep.subr.mxu0 0.0
    %577 = vmatpush1.xpose.msra.mxu0 0.0
    %578 = vmatprep.subr.mxu0 0.0
    %579 = vmatpush1.xpose.msra.mxu0 0.0
    %580 = vmatprep.subr.mxu0 0.0
    %581 = vmatpush1.xpose.msra.mxu0 0.0
    %582 = vmatprep.subr.mxu0 0.0
    %583 = vmatpush1.xpose.msra.mxu0 0.0
    %584 = vmatprep.subr.mxu0 0.0
    %585 = vmatpush1.xpose.msra.mxu0 0.0
    %586 = vmatprep.subr.mxu0 0.0
    %587 = vmatpush1.xpose.msra.mxu0 0.0
    %588 = vmatprep.subr.mxu0 0.0
    %589 = vmatpush1.xpose.msra.mxu0 0.0
    %590 = vmatprep.subr.mxu0 0.0
    %591 = vmatpush1.xpose.msra.mxu0 0.0
    %592 = vmatprep.subr.mxu0 0.0
    %593 = vmatpush1.xpose.msra.mxu0 0.0
    %594 = vmatprep.mubr.f32.mxu0 0.0
    %595 = vmatmul.mubr.f32.gmra.mrb[0].mxu0 %v518
    %v596 = vpop.f32.mrb[0].mxu0
    %v597 = vadd.f32 %v272, %v596
    %v598 = vpop.f32.mrb[0].mxu0
    %599 = vmatprep.mubr.f32.mxu0 0.0
    %600 = vmatmul.mubr.f32.gmra.mrb[0].mxu0 %v520
    %v601 = vpop.f32.mrb[0].mxu0
    %v602 = vadd.f32 %v273, %v601
    %v603 = vpop.f32.mrb[0].mxu0
    %604 = vdwg.mxu0
    %v605 = vsel %vm80, %v597, -inf
    %606 = vmax.xlane.f32.xlu0 %v605
    %v607 = vpop.xlane.xlu0 %606
    %v608 = vsel %vm80, %v602, -inf
    %609 = vmax.xlane.f32.xlu0 %v608
    %v610 = vpop.xlane.xlu0 %609
    %v611 = vsub.f32 %v597, %v607
    %v612 = vsub.f32 %v602, %v610
    %v613 = vmul.f32 %v611, 1.442695
    %v614 = vpow.pop %v613
    %v615 = vmul.f32 %v612, 1.442695
    %v616 = vpow.pop %v615
    %v617 = vsel %vm80, %v614, 0.0
    %618 = vadd.xlane.f32.xlu0 %v617
    %v619 = vpop.xlane.xlu0 %618
    %v620 = vsel %vm80, %v616, 0.0
    %621 = vadd.xlane.f32.xlu0 %v620
    %v622 = vpop.xlane.xlu0 %621
    %v623 = vrcp.pop %v619
    %v624 = vrcp.pop %v622
    %v625 = vmul.f32 %v619, %v623
    %v626 = vmul.f32 %v622, %v624
    %v627 = vsub.f32 2.0, %v625
    %v628 = vsub.f32 2.0, %v626
    %v629 = vmul.f32 %v623, %v627
    %v630 = vmul.f32 %v624, %v628
    %v631 = vmul.f32 %v614, %v629
    %v632 = vmul.f32 %v616, %v630
    %633 = vrot.lane.b32.xlu0 %v254, 56
    %v634 = vpop.permute.xlu0 %633
    %635 = vrot.lane.b32.xlu0 %v259, 56
    %v636 = vpop.permute.xlu0 %635
    %637 = vrot.lane.b32.xlu0 %v264, 56
    %v638 = vpop.permute.xlu0 %637
    %639 = vrot.lane.b32.xlu0 %v269, 56
    %v640 = vpop.permute.xlu0 %639
    %v646 = vsel %vm80, %v631, 0
    %v649 = vsel %vm80, %v632, 0
    %651 = vmatprep.subr.mxu0 0.0
    %652 = vmatpush1.msra.mxu0 %v634
    %653 = vmatprep.subr.mxu0 0.0
    %654 = vmatpush1.msra.mxu0 %v636
    %655 = vmatprep.subr.mxu0 0.0
    %656 = vmatpush1.msra.mxu0 %v638
    %657 = vmatprep.subr.mxu0 0.0
    %658 = vmatpush1.msra.mxu0 %v640
    %659 = vmatprep.subr.mxu0 0.0
    %660 = vmatpush1.msra.mxu0 0.0
    %661 = vmatprep.subr.mxu0 0.0
    %662 = vmatpush1.msra.mxu0 0.0
    %663 = vmatprep.subr.mxu0 0.0
    %664 = vmatpush1.msra.mxu0 0.0
    %665 = vmatprep.subr.mxu0 0.0
    %666 = vmatpush1.msra.mxu0 0.0
    %667 = vmatprep.subr.mxu0 0.0
    %668 = vmatpush1.msra.mxu0 0.0
    %669 = vmatprep.subr.mxu0 0.0
    %670 = vmatpush1.msra.mxu0 0.0
    %671 = vmatprep.subr.mxu0 0.0
    %672 = vmatpush1.msra.mxu0 0.0
    %673 = vmatprep.subr.mxu0 0.0
    %674 = vmatpush1.msra.mxu0 0.0
    %675 = vmatprep.subr.mxu0 0.0
    %676 = vmatpush1.msra.mxu0 0.0
    %677 = vmatprep.subr.mxu0 0.0
    %678 = vmatpush1.msra.mxu0 0.0
    %679 = vmatprep.subr.mxu0 0.0
    %680 = vmatpush1.msra.mxu0 0.0
    %681 = vmatprep.subr.mxu0 0.0
    %682 = vmatpush1.msra.mxu0 0.0
    %683 = vmatprep.subr.mxu0 0.0
    %684 = vmatpush1.msra.mxu0 0.0
    %685 = vmatprep.subr.mxu0 0.0
    %686 = vmatpush1.msra.mxu0 0.0
    %687 = vmatprep.subr.mxu0 0.0
    %688 = vmatpush1.msra.mxu0 0.0
    %689 = vmatprep.subr.mxu0 0.0
    %690 = vmatpush1.msra.mxu0 0.0
    %691 = vmatprep.subr.mxu0 0.0
    %692 = vmatpush1.msra.mxu0 0.0
    %693 = vmatprep.subr.mxu0 0.0
    %694 = vmatpush1.msra.mxu0 0.0
    %695 = vmatprep.subr.mxu0 0.0
    %696 = vmatpush1.msra.mxu0 0.0
    %697 = vmatprep.subr.mxu0 0.0
    %698 = vmatpush1.msra.mxu0 0.0
    %699 = vmatprep.subr.mxu0 0.0
    %700 = vmatpush1.msra.mxu0 0.0
    %701 = vmatprep.subr.mxu0 0.0
    %702 = vmatpush1.msra.mxu0 0.0
    %703 = vmatprep.subr.mxu0 0.0
    %704 = vmatpush1.msra.mxu0 0.0
    %705 = vmatprep.subr.mxu0 0.0
    %706 = vmatpush1.msra.mxu0 0.0
    %707 = vmatprep.subr.mxu0 0.0
    %708 = vmatpush1.msra.mxu0 0.0
    %709 = vmatprep.subr.mxu0 0.0
    %710 = vmatpush1.msra.mxu0 0.0
    %711 = vmatprep.subr.mxu0 0.0
    %712 = vmatpush1.msra.mxu0 0.0
    %713 = vmatprep.subr.mxu0 0.0
    %714 = vmatpush1.msra.mxu0 0.0
    %715 = vmatprep.mubr.f32.mxu0 0.0
    %716 = vmatmul.mubr.f32.gmra.mrb[0].mxu0 %v646
    %v717 = vpop.f32.mrb[0].mxu0
    %v718 = vadd.f32 0.0, %v717
    %v719 = vpop.f32.mrb[0].mxu0
    %720 = vmatprep.mubr.f32.mxu0 0.0
    %721 = vmatmul.mubr.f32.gmra.mrb[0].mxu0 %v649
    %v722 = vpop.f32.mrb[0].mxu0
    %v723 = vadd.f32 0.0, %v722
    %v724 = vpop.f32.mrb[0].mxu0
    %725 = vdwg.mxu0
    %726 = vrot.lane.b32.xlu0 %v154, 112
    %v727 = vpop.permute.xlu0 %726
    %728 = vrot.lane.b32.xlu0 %v159, 112
    %v729 = vpop.permute.xlu0 %728
    %730 = vrot.lane.b32.xlu0 %v254, 80
    %v731 = vpop.permute.xlu0 %730
    %732 = vrot.lane.b32.xlu0 %v259, 80
    %v733 = vpop.permute.xlu0 %732
    %734 = vrot.lane.b32.xlu0 %v264, 80
    %v735 = vpop.permute.xlu0 %734
    %736 = vrot.lane.b32.xlu0 %v269, 80
    %v737 = vpop.permute.xlu0 %736
    %v738 = vsel %vm295, %v727, 0
    %v740 = vsel %vm295, %v729, 0
    %v742 = vsel %vm295, %v731, 0
    %v744 = vsel %vm295, %v733, 0
    %v746 = vsel %vm295, %v735, 0
    %v748 = vsel %vm295, %v737, 0
    %750 = vmatprep.subr.mxu0 0.0
    %751 = vmatpush1.xpose.msra.mxu0 %v742
    %752 = vmatprep.subr.mxu0 0.0
    %753 = vmatpush1.xpose.msra.mxu0 %v744
    %754 = vmatprep.subr.mxu0 0.0
    %755 = vmatpush1.xpose.msra.mxu0 %v746
    %756 = vmatprep.subr.mxu0 0.0
    %757 = vmatpush1.xpose.msra.mxu0 %v748
    %758 = vmatprep.subr.mxu0 0.0
    %759 = vmatpush1.xpose.msra.mxu0 0.0
    %760 = vmatprep.subr.mxu0 0.0
    %761 = vmatpush1.xpose.msra.mxu0 0.0
    %762 = vmatprep.subr.mxu0 0.0
    %763 = vmatpush1.xpose.msra.mxu0 0.0
    %764 = vmatprep.subr.mxu0 0.0
    %765 = vmatpush1.xpose.msra.mxu0 0.0
    %766 = vmatprep.subr.mxu0 0.0
    %767 = vmatpush1.xpose.msra.mxu0 0.0
    %768 = vmatprep.subr.mxu0 0.0
    %769 = vmatpush1.xpose.msra.mxu0 0.0
    %770 = vmatprep.subr.mxu0 0.0
    %771 = vmatpush1.xpose.msra.mxu0 0.0
    %772 = vmatprep.subr.mxu0 0.0
    %773 = vmatpush1.xpose.msra.mxu0 0.0
    %774 = vmatprep.subr.mxu0 0.0
    %775 = vmatpush1.xpose.msra.mxu0 0.0
    %776 = vmatprep.subr.mxu0 0.0
    %777 = vmatpush1.xpose.msra.mxu0 0.0
    %778 = vmatprep.subr.mxu0 0.0
    %779 = vmatpush1.xpose.msra.mxu0 0.0
    %780 = vmatprep.subr.mxu0 0.0
    %781 = vmatpush1.xpose.msra.mxu0 0.0
    %782 = vmatprep.subr.mxu0 0.0
    %783 = vmatpush1.xpose.msra.mxu0 0.0
    %784 = vmatprep.subr.mxu0 0.0
    %785 = vmatpush1.xpose.msra.mxu0 0.0
    %786 = vmatprep.subr.mxu0 0.0
    %787 = vmatpush1.xpose.msra.mxu0 0.0
    %788 = vmatprep.subr.mxu0 0.0
    %789 = vmatpush1.xpose.msra.mxu0 0.0
    %790 = vmatprep.subr.mxu0 0.0
    %791 = vmatpush1.xpose.msra.mxu0 0.0
    %792 = vmatprep.subr.mxu0 0.0
    %793 = vmatpush1.xpose.msra.mxu0 0.0
    %794 = vmatprep.subr.mxu0 0.0
    %795 = vmatpush1.xpose.msra.mxu0 0.0
    %796 = vmatprep.subr.mxu0 0.0
    %797 = vmatpush1.xpose.msra.mxu0 0.0
    %798 = vmatprep.subr.mxu0 0.0
    %799 = vmatpush1.xpose.msra.mxu0 0.0
    %800 = vmatprep.subr.mxu0 0.0
    %801 = vmatpush1.xpose.msra.mxu0 0.0
    %802 = vmatprep.subr.mxu0 0.0
    %803 = vmatpush1.xpose.msra.mxu0 0.0
    %804 = vmatprep.subr.mxu0 0.0
    %805 = vmatpush1.xpose.msra.mxu0 0.0
    %806 = vmatprep.subr.mxu0 0.0
    %807 = vmatpush1.xpose.msra.mxu0 0.0
    %808 = vmatprep.subr.mxu0 0.0
    %809 = vmatpush1.xpose.msra.mxu0 0.0
    %810 = vmatprep.subr.mxu0 0.0
    %811 = vmatpush1.xpose.msra.mxu0 0.0
    %812 = vmatprep.subr.mxu0 0.0
    %813 = vmatpush1.xpose.msra.mxu0 0.0
    %814 = vmatprep.mubr.f32.mxu0 0.0
    %815 = vmatmul.mubr.f32.gmra.mrb[0].mxu0 %v738
    %v816 = vpop.f32.mrb[0].mxu0
    %v817 = vadd.f32 %v272, %v816
    %v818 = vpop.f32.mrb[0].mxu0
    %819 = vmatprep.mubr.f32.mxu0 0.0
    %820 = vmatmul.mubr.f32.gmra.mrb[0].mxu0 %v740
    %v821 = vpop.f32.mrb[0].mxu0
    %v822 = vadd.f32 %v273, %v821
    %v823 = vpop.f32.mrb[0].mxu0
    %824 = vdwg.mxu0
    %v825 = vsel %vm80, %v817, -inf
    %826 = vmax.xlane.f32.xlu0 %v825
    %v827 = vpop.xlane.xlu0 %826
    %v828 = vsel %vm80, %v822, -inf
    %829 = vmax.xlane.f32.xlu0 %v828
    %v830 = vpop.xlane.xlu0 %829
    %v831 = vsub.f32 %v817, %v827
    %v832 = vsub.f32 %v822, %v830
    %v833 = vmul.f32 %v831, 1.442695
    %v834 = vpow.pop %v833
    %v835 = vmul.f32 %v832, 1.442695
    %v836 = vpow.pop %v835
    %v837 = vsel %vm80, %v834, 0.0
    %838 = vadd.xlane.f32.xlu0 %v837
    %v839 = vpop.xlane.xlu0 %838
    %v840 = vsel %vm80, %v836, 0.0
    %841 = vadd.xlane.f32.xlu0 %v840
    %v842 = vpop.xlane.xlu0 %841
    %v843 = vrcp.pop %v839
    %v844 = vrcp.pop %v842
    %v845 = vmul.f32 %v839, %v843
    %v846 = vmul.f32 %v842, %v844
    %v847 = vsub.f32 2.0, %v845
    %v848 = vsub.f32 2.0, %v846
    %v849 = vmul.f32 %v843, %v847
    %v850 = vmul.f32 %v844, %v848
    %v851 = vmul.f32 %v834, %v849
    %v852 = vmul.f32 %v836, %v850
    %853 = vrot.lane.b32.xlu0 %v254, 48
    %v854 = vpop.permute.xlu0 %853
    %855 = vrot.lane.b32.xlu0 %v259, 48
    %v856 = vpop.permute.xlu0 %855
    %857 = vrot.lane.b32.xlu0 %v264, 48
    %v858 = vpop.permute.xlu0 %857
    %859 = vrot.lane.b32.xlu0 %v269, 48
    %v860 = vpop.permute.xlu0 %859
    %v866 = vsel %vm80, %v851, 0
    %v869 = vsel %vm80, %v852, 0
    %871 = vmatprep.subr.mxu0 0.0
    %872 = vmatpush1.msra.mxu0 %v854
    %873 = vmatprep.subr.mxu0 0.0
    %874 = vmatpush1.msra.mxu0 %v856
    %875 = vmatprep.subr.mxu0 0.0
    %876 = vmatpush1.msra.mxu0 %v858
    %877 = vmatprep.subr.mxu0 0.0
    %878 = vmatpush1.msra.mxu0 %v860
    %879 = vmatprep.subr.mxu0 0.0
    %880 = vmatpush1.msra.mxu0 0.0
    %881 = vmatprep.subr.mxu0 0.0
    %882 = vmatpush1.msra.mxu0 0.0
    %883 = vmatprep.subr.mxu0 0.0
    %884 = vmatpush1.msra.mxu0 0.0
    %885 = vmatprep.subr.mxu0 0.0
    %886 = vmatpush1.msra.mxu0 0.0
    %887 = vmatprep.subr.mxu0 0.0
    %888 = vmatpush1.msra.mxu0 0.0
    %889 = vmatprep.subr.mxu0 0.0
    %890 = vmatpush1.msra.mxu0 0.0
    %891 = vmatprep.subr.mxu0 0.0
    %892 = vmatpush1.msra.mxu0 0.0
    %893 = vmatprep.subr.mxu0 0.0
    %894 = vmatpush1.msra.mxu0 0.0
    %895 = vmatprep.subr.mxu0 0.0
    %896 = vmatpush1.msra.mxu0 0.0
    %897 = vmatprep.subr.mxu0 0.0
    %898 = vmatpush1.msra.mxu0 0.0
    %899 = vmatprep.subr.mxu0 0.0
    %900 = vmatpush1.msra.mxu0 0.0
    %901 = vmatprep.subr.mxu0 0.0
    %902 = vmatpush1.msra.mxu0 0.0
    %903 = vmatprep.subr.mxu0 0.0
    %904 = vmatpush1.msra.mxu0 0.0
    %905 = vmatprep.subr.mxu0 0.0
    %906 = vmatpush1.msra.mxu0 0.0
    %907 = vmatprep.subr.mxu0 0.0
    %908 = vmatpush1.msra.mxu0 0.0
    %909 = vmatprep.subr.mxu0 0.0
    %910 = vmatpush1.msra.mxu0 0.0
    %911 = vmatprep.subr.mxu0 0.0
    %912 = vmatpush1.msra.mxu0 0.0
    %913 = vmatprep.subr.mxu0 0.0
    %914 = vmatpush1.msra.mxu0 0.0
    %915 = vmatprep.subr.mxu0 0.0
    %916 = vmatpush1.msra.mxu0 0.0
    %917 = vmatprep.subr.mxu0 0.0
    %918 = vmatpush1.msra.mxu0 0.0
    %919 = vmatprep.subr.mxu0 0.0
    %920 = vmatpush1.msra.mxu0 0.0
    %921 = vmatprep.subr.mxu0 0.0
    %922 = vmatpush1.msra.mxu0 0.0
    %923 = vmatprep.subr.mxu0 0.0
    %924 = vmatpush1.msra.mxu0 0.0
    %925 = vmatprep.subr.mxu0 0.0
    %926 = vmatpush1.msra.mxu0 0.0
    %927 = vmatprep.subr.mxu0 0.0
    %928 = vmatpush1.msra.mxu0 0.0
    %929 = vmatprep.subr.mxu0 0.0
    %930 = vmatpush1.msra.mxu0 0.0
    %931 = vmatprep.subr.mxu0 0.0
    %932 = vmatpush1.msra.mxu0 0.0
    %933 = vmatprep.subr.mxu0 0.0
    %934 = vmatpush1.msra.mxu0 0.0
    %935 = vmatprep.mubr.f32.mxu0 0.0
    %936 = vmatmul.mubr.f32.gmra.mrb[0].mxu0 %v866
    %v937 = vpop.f32.mrb[0].mxu0
    %v938 = vadd.f32 0.0, %v937
    %v939 = vpop.f32.mrb[0].mxu0
    %940 = vmatprep.mubr.f32.mxu0 0.0
    %941 = vmatmul.mubr.f32.gmra.mrb[0].mxu0 %v869
    %v942 = vpop.f32.mrb[0].mxu0
    %v943 = vadd.f32 0.0, %v942
    %v944 = vpop.f32.mrb[0].mxu0
    %945 = vdwg.mxu0
    %946 = vrot.lane.b32.xlu0 %v154, 104
    %v947 = vpop.permute.xlu0 %946
    %948 = vrot.lane.b32.xlu0 %v159, 104
    %v949 = vpop.permute.xlu0 %948
    %950 = vrot.lane.b32.xlu0 %v254, 72
    %v951 = vpop.permute.xlu0 %950
    %952 = vrot.lane.b32.xlu0 %v259, 72
    %v953 = vpop.permute.xlu0 %952
    %954 = vrot.lane.b32.xlu0 %v264, 72
    %v955 = vpop.permute.xlu0 %954
    %956 = vrot.lane.b32.xlu0 %v269, 72
    %v957 = vpop.permute.xlu0 %956
    %v958 = vsel %vm295, %v947, 0
    %v960 = vsel %vm295, %v949, 0
    %v962 = vsel %vm295, %v951, 0
    %v964 = vsel %vm295, %v953, 0
    %v966 = vsel %vm295, %v955, 0
    %v968 = vsel %vm295, %v957, 0
    %970 = vmatprep.subr.mxu0 0.0
    %971 = vmatpush1.xpose.msra.mxu0 %v962
    %972 = vmatprep.subr.mxu0 0.0
    %973 = vmatpush1.xpose.msra.mxu0 %v964
    %974 = vmatprep.subr.mxu0 0.0
    %975 = vmatpush1.xpose.msra.mxu0 %v966
    %976 = vmatprep.subr.mxu0 0.0
    %977 = vmatpush1.xpose.msra.mxu0 %v968
    %978 = vmatprep.subr.mxu0 0.0
    %979 = vmatpush1.xpose.msra.mxu0 0.0
    %980 = vmatprep.subr.mxu0 0.0
    %981 = vmatpush1.xpose.msra.mxu0 0.0
    %982 = vmatprep.subr.mxu0 0.0
    %983 = vmatpush1.xpose.msra.mxu0 0.0
    %984 = vmatprep.subr.mxu0 0.0
    %985 = vmatpush1.xpose.msra.mxu0 0.0
    %986 = vmatprep.subr.mxu0 0.0
    %987 = vmatpush1.xpose.msra.mxu0 0.0
    %988 = vmatprep.subr.mxu0 0.0
    %989 = vmatpush1.xpose.msra.mxu0 0.0
    %990 = vmatprep.subr.mxu0 0.0
    %991 = vmatpush1.xpose.msra.mxu0 0.0
    %992 = vmatprep.subr.mxu0 0.0
    %993 = vmatpush1.xpose.msra.mxu0 0.0
    %994 = vmatprep.subr.mxu0 0.0
    %995 = vmatpush1.xpose.msra.mxu0 0.0
    %996 = vmatprep.subr.mxu0 0.0
    %997 = vmatpush1.xpose.msra.mxu0 0.0
    %998 = vmatprep.subr.mxu0 0.0
    %999 = vmatpush1.xpose.msra.mxu0 0.0
    %1000 = vmatprep.subr.mxu0 0.0
    %1001 = vmatpush1.xpose.msra.mxu0 0.0
    %1002 = vmatprep.subr.mxu0 0.0
    %1003 = vmatpush1.xpose.msra.mxu0 0.0
    %1004 = vmatprep.subr.mxu0 0.0
    %1005 = vmatpush1.xpose.msra.mxu0 0.0
    %1006 = vmatprep.subr.mxu0 0.0
    %1007 = vmatpush1.xpose.msra.mxu0 0.0
    %1008 = vmatprep.subr.mxu0 0.0
    %1009 = vmatpush1.xpose.msra.mxu0 0.0
    %1010 = vmatprep.subr.mxu0 0.0
    %1011 = vmatpush1.xpose.msra.mxu0 0.0
    %1012 = vmatprep.subr.mxu0 0.0
    %1013 = vmatpush1.xpose.msra.mxu0 0.0
    %1014 = vmatprep.subr.mxu0 0.0
    %1015 = vmatpush1.xpose.msra.mxu0 0.0
    %1016 = vmatprep.subr.mxu0 0.0
    %1017 = vmatpush1.xpose.msra.mxu0 0.0
    %1018 = vmatprep.subr.mxu0 0.0
    %1019 = vmatpush1.xpose.msra.mxu0 0.0
    %1020 = vmatprep.subr.mxu0 0.0
    %1021 = vmatpush1.xpose.msra.mxu0 0.0
    %1022 = vmatprep.subr.mxu0 0.0
    %1023 = vmatpush1.xpose.msra.mxu0 0.0
    %1024 = vmatprep.subr.mxu0 0.0
    %1025 = vmatpush1.xpose.msra.mxu0 0.0
    %1026 = vmatprep.subr.mxu0 0.0
    %1027 = vmatpush1.xpose.msra.mxu0 0.0
    %1028 = vmatprep.subr.mxu0 0.0
    %1029 = vmatpush1.xpose.msra.mxu0 0.0
    %1030 = vmatprep.subr.mxu0 0.0
    %1031 = vmatpush1.xpose.msra.mxu0 0.0
    %1032 = vmatprep.subr.mxu0 0.0
    %1033 = vmatpush1.xpose.msra.mxu0 0.0
    %1034 = vmatprep.mubr.f32.mxu0 0.0
    %1035 = vmatmul.mubr.f32.gmra.mrb[0].mxu0 %v958
    %v1036 = vpop.f32.mrb[0].mxu0
    %v1037 = vadd.f32 %v272, %v1036
    %v1038 = vpop.f32.mrb[0].mxu0
    %1039 = vmatprep.mubr.f32.mxu0 0.0
    %1040 = vmatmul.mubr.f32.gmra.mrb[0].mxu0 %v960
    %v1041 = vpop.f32.mrb[0].mxu0
    %v1042 = vadd.f32 %v273, %v1041
    %v1043 = vpop.f32.mrb[0].mxu0
    %1044 = vdwg.mxu0
    %v1045 = vsel %vm80, %v1037, -inf
    %1046 = vmax.xlane.f32.xlu0 %v1045
    %v1047 = vpop.xlane.xlu0 %1046
    %v1048 = vsel %vm80, %v1042, -inf
    %1049 = vmax.xlane.f32.xlu0 %v1048
    %v1050 = vpop.xlane.xlu0 %1049
    %v1051 = vsub.f32 %v1037, %v1047
    %v1052 = vsub.f32 %v1042, %v1050
    %v1053 = vmul.f32 %v1051, 1.442695
    %v1054 = vpow.pop %v1053
    %v1055 = vmul.f32 %v1052, 1.442695
    %v1056 = vpow.pop %v1055
    %v1057 = vsel %vm80, %v1054, 0.0
    %1058 = vadd.xlane.f32.xlu0 %v1057
    %v1059 = vpop.xlane.xlu0 %1058
    %v1060 = vsel %vm80, %v1056, 0.0
    %1061 = vadd.xlane.f32.xlu0 %v1060
    %v1062 = vpop.xlane.xlu0 %1061
    %v1063 = vrcp.pop %v1059
    %v1064 = vrcp.pop %v1062
    %v1065 = vmul.f32 %v1059, %v1063
    %v1066 = vmul.f32 %v1062, %v1064
    %v1067 = vsub.f32 2.0, %v1065
    %v1068 = vsub.f32 2.0, %v1066
    %v1069 = vmul.f32 %v1063, %v1067
    %v1070 = vmul.f32 %v1064, %v1068
    %v1071 = vmul.f32 %v1054, %v1069
    %v1072 = vmul.f32 %v1056, %v1070
    %1073 = vrot.lane.b32.xlu0 %v254, 40
    %v1074 = vpop.permute.xlu0 %1073
    %1075 = vrot.lane.b32.xlu0 %v259, 40
    %v1076 = vpop.permute.xlu0 %1075
    %1077 = vrot.lane.b32.xlu0 %v264, 40
    %v1078 = vpop.permute.xlu0 %1077
    %1079 = vrot.lane.b32.xlu0 %v269, 40
    %v1080 = vpop.permute.xlu0 %1079
    %v1086 = vsel %vm80, %v1071, 0
    %v1089 = vsel %vm80, %v1072, 0
    %1091 = vmatprep.subr.mxu0 0.0
    %1092 = vmatpush1.msra.mxu0 %v1074
    %1093 = vmatprep.subr.mxu0 0.0
    %1094 = vmatpush1.msra.mxu0 %v1076
    %1095 = vmatprep.subr.mxu0 0.0
    %1096 = vmatpush1.msra.mxu0 %v1078
    %1097 = vmatprep.subr.mxu0 0.0
    %1098 = vmatpush1.msra.mxu0 %v1080
    %1099 = vmatprep.subr.mxu0 0.0
    %1100 = vmatpush1.msra.mxu0 0.0
    %1101 = vmatprep.subr.mxu0 0.0
    %1102 = vmatpush1.msra.mxu0 0.0
    %1103 = vmatprep.subr.mxu0 0.0
    %1104 = vmatpush1.msra.mxu0 0.0
    %1105 = vmatprep.subr.mxu0 0.0
    %1106 = vmatpush1.msra.mxu0 0.0
    %1107 = vmatprep.subr.mxu0 0.0
    %1108 = vmatpush1.msra.mxu0 0.0
    %1109 = vmatprep.subr.mxu0 0.0
    %1110 = vmatpush1.msra.mxu0 0.0
    %1111 = vmatprep.subr.mxu0 0.0
    %1112 = vmatpush1.msra.mxu0 0.0
    %1113 = vmatprep.subr.mxu0 0.0
    %1114 = vmatpush1.msra.mxu0 0.0
    %1115 = vmatprep.subr.mxu0 0.0
    %1116 = vmatpush1.msra.mxu0 0.0
    %1117 = vmatprep.subr.mxu0 0.0
    %1118 = vmatpush1.msra.mxu0 0.0
    %1119 = vmatprep.subr.mxu0 0.0
    %1120 = vmatpush1.msra.mxu0 0.0
    %1121 = vmatprep.subr.mxu0 0.0
    %1122 = vmatpush1.msra.mxu0 0.0
    %1123 = vmatprep.subr.mxu0 0.0
    %1124 = vmatpush1.msra.mxu0 0.0
    %1125 = vmatprep.subr.mxu0 0.0
    %1126 = vmatpush1.msra.mxu0 0.0
    %1127 = vmatprep.subr.mxu0 0.0
    %1128 = vmatpush1.msra.mxu0 0.0
    %1129 = vmatprep.subr.mxu0 0.0
    %1130 = vmatpush1.msra.mxu0 0.0
    %1131 = vmatprep.subr.mxu0 0.0
    %1132 = vmatpush1.msra.mxu0 0.0
    %1133 = vmatprep.subr.mxu0 0.0
    %1134 = vmatpush1.msra.mxu0 0.0
    %1135 = vmatprep.subr.mxu0 0.0
    %1136 = vmatpush1.msra.mxu0 0.0
    %1137 = vmatprep.subr.mxu0 0.0
    %1138 = vmatpush1.msra.mxu0 0.0
    %1139 = vmatprep.subr.mxu0 0.0
    %1140 = vmatpush1.msra.mxu0 0.0
    %1141 = vmatprep.subr.mxu0 0.0
    %1142 = vmatpush1.msra.mxu0 0.0
    %1143 = vmatprep.subr.mxu0 0.0
    %1144 = vmatpush1.msra.mxu0 0.0
    %1145 = vmatprep.subr.mxu0 0.0
    %1146 = vmatpush1.msra.mxu0 0.0
    %1147 = vmatprep.subr.mxu0 0.0
    %1148 = vmatpush1.msra.mxu0 0.0
    %1149 = vmatprep.subr.mxu0 0.0
    %1150 = vmatpush1.msra.mxu0 0.0
    %1151 = vmatprep.subr.mxu0 0.0
    %1152 = vmatpush1.msra.mxu0 0.0
    %1153 = vmatprep.subr.mxu0 0.0
    %1154 = vmatpush1.msra.mxu0 0.0
    %1155 = vmatprep.mubr.f32.mxu0 0.0
    %1156 = vmatmul.mubr.f32.gmra.mrb[0].mxu0 %v1086
    %v1157 = vpop.f32.mrb[0].mxu0
    %v1158 = vadd.f32 0.0, %v1157
    %v1159 = vpop.f32.mrb[0].mxu0
    %1160 = vmatprep.mubr.f32.mxu0 0.0
    %1161 = vmatmul.mubr.f32.gmra.mrb[0].mxu0 %v1089
    %v1162 = vpop.f32.mrb[0].mxu0
    %v1163 = vadd.f32 0.0, %v1162
    %v1164 = vpop.f32.mrb[0].mxu0
    %1165 = vdwg.mxu0
    %1168 = vrot.lane.b32.xlu0 %v718, 8
    %v1169 = vpop.permute.xlu0 %1168
    %1170 = vrot.lane.b32.xlu0 %v723, 8
    %v1171 = vpop.permute.xlu0 %1170
    %1176 = vrot.lane.b32.xlu0 %v938, 16
    %v1177 = vpop.permute.xlu0 %1176
    %1178 = vrot.lane.b32.xlu0 %v943, 16
    %v1179 = vpop.permute.xlu0 %1178
    %1184 = vrot.lane.b32.xlu0 %v1158, 24
    %v1185 = vpop.permute.xlu0 %1184
    %1186 = vrot.lane.b32.xlu0 %v1163, 24
    %v1187 = vpop.permute.xlu0 %1186
    %v1190 = vsel %vm295, %v498, %v1169
    %v1191 = vsel %vm295, %v503, %v1171
    %vm1192 = vcmask 130048
    %v1193 = vsel %vm1192, %v1190, %v1177
    %v1194 = vsel %vm1192, %v1191, %v1179
    %vm1195 = vcmask 195584
    %v1196 = vsel %vm1195, %v1193, %v1185
    %v1197 = vsel %vm1195, %v1194, %v1187
    %v1199 = vlaneseq
    %v1200 = vshrl.u32 %v1199, 7
    %v1201 = vsub.s32 0, %v1200
    %v1202 = vrot.slane %v282, %v1201
    %v1205 = vsel %vm80, %v1196, 0
    %v1208 = vsel %vm80, %v1197, 0
    %1210 = vmatprep.subr.mxu0 0.0
    %1211 = vmatpush1.msra.mxu0 %v278
    %1212 = vmatprep.subr.mxu0 0.0
    %1213 = vmatpush1.msra.mxu0 %v279
    %1214 = vmatprep.subr.mxu0 0.0
    %1215 = vmatpush1.msra.mxu0 %v280
    %1216 = vmatprep.subr.mxu0 0.0
    %1217 = vmatpush1.msra.mxu0 %v281
    %1218 = vmatprep.subr.mxu0 0.0
    %1219 = vmatpush1.msra.mxu0 0.0
    %1220 = vmatprep.subr.mxu0 0.0
    %1221 = vmatpush1.msra.mxu0 0.0
    %1222 = vmatprep.subr.mxu0 0.0
    %1223 = vmatpush1.msra.mxu0 0.0
    %1224 = vmatprep.subr.mxu0 0.0
    %1225 = vmatpush1.msra.mxu0 0.0
    %1226 = vmatprep.subr.mxu0 0.0
    %1227 = vmatpush1.msra.mxu0 0.0
    %1228 = vmatprep.subr.mxu0 0.0
    %1229 = vmatpush1.msra.mxu0 0.0
    %1230 = vmatprep.subr.mxu0 0.0
    %1231 = vmatpush1.msra.mxu0 0.0
    %1232 = vmatprep.subr.mxu0 0.0
    %1233 = vmatpush1.msra.mxu0 0.0
    %1234 = vmatprep.subr.mxu0 0.0
    %1235 = vmatpush1.msra.mxu0 0.0
    %1236 = vmatprep.subr.mxu0 0.0
    %1237 = vmatpush1.msra.mxu0 0.0
    %1238 = vmatprep.subr.mxu0 0.0
    %1239 = vmatpush1.msra.mxu0 0.0
    %1240 = vmatprep.subr.mxu0 0.0
    %1241 = vmatpush1.msra.mxu0 0.0
    %1242 = vmatprep.subr.mxu0 0.0
    %1243 = vmatpush1.msra.mxu0 0.0
    %1244 = vmatprep.subr.mxu0 0.0
    %1245 = vmatpush1.msra.mxu0 0.0
    %1246 = vmatprep.subr.mxu0 0.0
    %1247 = vmatpush1.msra.mxu0 0.0
    %1248 = vmatprep.subr.mxu0 0.0
    %1249 = vmatpush1.msra.mxu0 0.0
    %1250 = vmatprep.subr.mxu0 0.0
    %1251 = vmatpush1.msra.mxu0 0.0
    %1252 = vmatprep.subr.mxu0 0.0
    %1253 = vmatpush1.msra.mxu0 0.0
    %1254 = vmatprep.subr.mxu0 0.0
    %1255 = vmatpush1.msra.mxu0 0.0
    %1256 = vmatprep.subr.mxu0 0.0
    %1257 = vmatpush1.msra.mxu0 0.0
    %1258 = vmatprep.subr.mxu0 0.0
    %1259 = vmatpush1.msra.mxu0 0.0
    %1260 = vmatprep.subr.mxu0 0.0
    %1261 = vmatpush1.msra.mxu0 0.0
    %1262 = vmatprep.subr.mxu0 0.0
    %1263 = vmatpush1.msra.mxu0 0.0
    %1264 = vmatprep.subr.mxu0 0.0
    %1265 = vmatpush1.msra.mxu0 0.0
    %1266 = vmatprep.subr.mxu0 0.0
    %1267 = vmatpush1.msra.mxu0 0.0
    %1268 = vmatprep.subr.mxu0 0.0
    %1269 = vmatpush1.msra.mxu0 0.0
    %1270 = vmatprep.subr.mxu0 0.0
    %1271 = vmatpush1.msra.mxu0 0.0
    %1272 = vmatprep.subr.mxu0 0.0
    %1273 = vmatpush1.msra.mxu0 0.0
    %1274 = vmatprep.mubr.f32.mxu0 0.0
    %1275 = vmatmul.mubr.f32.gmra.mrb[0].mxu0 %v1205
    %v1276 = vpop.f32.mrb[0].mxu0
    %v1277 = vadd.f32 %v1202, %v1276
    %v1278 = vpop.f32.mrb[0].mxu0
    %1279 = vmatprep.mubr.f32.mxu0 0.0
    %1280 = vmatmul.mubr.f32.gmra.mrb[0].mxu0 %v1208
    %v1281 = vpop.f32.mrb[0].mxu0
    %v1282 = vadd.f32 %v1202, %v1281
    %v1283 = vpop.f32.mrb[0].mxu0
    %1284 = vdwg.mxu0
    %s1285 = scalar_lea.vmem %s6, 32
    %v1286 = vld [vmem:[%s1285] sm:$0xff]
    %v1287 = vld [vmem:[%s1285 + $0x8] sm:$0xff]
    %v1288 = vld [vmem:[%s1285 + $0x10] sm:$0xff]
    %v1289 = vld [vmem:[%s1285 + $0x18] sm:$0xff]
    %s1290 = scalar_lea.vmem %s7, 1
    %v1291 = vld [vmem:[%s1290] sm:$0x1]
    %1292 = vrot.lane.b32.xlu0 %v154, 96
    %v1293 = vpop.permute.xlu0 %1292
    %1294 = vrot.lane.b32.xlu0 %v159, 96
    %v1295 = vpop.permute.xlu0 %1294
    %v1296 = vsel %vm295, %v254, 0
    %v1298 = vsel %vm295, %v259, 0
    %v1300 = vsel %vm295, %v264, 0
    %v1302 = vsel %vm295, %v269, 0
    %v1304 = vsel %vm295, %v1293, 0
    %v1306 = vsel %vm295, %v1295, 0
    %1308 = vmatprep.subr.mxu0 0.0
    %1309 = vmatpush1.xpose.msra.mxu0 %v1304
    %1310 = vmatprep.subr.mxu0 0.0
    %1311 = vmatpush1.xpose.msra.mxu0 %v1306
    %1312 = vmatprep.subr.mxu0 0.0
    %1313 = vmatpush1.xpose.msra.mxu0 0.0
    %1314 = vmatprep.subr.mxu0 0.0
    %1315 = vmatpush1.xpose.msra.mxu0 0.0
    %1316 = vmatprep.subr.mxu0 0.0
    %1317 = vmatpush1.xpose.msra.mxu0 0.0
    %1318 = vmatprep.subr.mxu0 0.0
    %1319 = vmatpush1.xpose.msra.mxu0 0.0
    %1320 = vmatprep.subr.mxu0 0.0
    %1321 = vmatpush1.xpose.msra.mxu0 0.0
    %1322 = vmatprep.subr.mxu0 0.0
    %1323 = vmatpush1.xpose.msra.mxu0 0.0
    %1324 = vmatprep.subr.mxu0 0.0
    %1325 = vmatpush1.xpose.msra.mxu0 0.0
    %1326 = vmatprep.subr.mxu0 0.0
    %1327 = vmatpush1.xpose.msra.mxu0 0.0
    %1328 = vmatprep.subr.mxu0 0.0
    %1329 = vmatpush1.xpose.msra.mxu0 0.0
    %1330 = vmatprep.subr.mxu0 0.0
    %1331 = vmatpush1.xpose.msra.mxu0 0.0
    %1332 = vmatprep.subr.mxu0 0.0
    %1333 = vmatpush1.xpose.msra.mxu0 0.0
    %1334 = vmatprep.subr.mxu0 0.0
    %1335 = vmatpush1.xpose.msra.mxu0 0.0
    %1336 = vmatprep.subr.mxu0 0.0
    %1337 = vmatpush1.xpose.msra.mxu0 0.0
    %1338 = vmatprep.subr.mxu0 0.0
    %1339 = vmatpush1.xpose.msra.mxu0 0.0
    %1340 = vmatprep.subr.mxu0 0.0
    %1341 = vmatpush1.xpose.msra.mxu0 0.0
    %1342 = vmatprep.subr.mxu0 0.0
    %1343 = vmatpush1.xpose.msra.mxu0 0.0
    %1344 = vmatprep.subr.mxu0 0.0
    %1345 = vmatpush1.xpose.msra.mxu0 0.0
    %1346 = vmatprep.subr.mxu0 0.0
    %1347 = vmatpush1.xpose.msra.mxu0 0.0
    %1348 = vmatprep.subr.mxu0 0.0
    %1349 = vmatpush1.xpose.msra.mxu0 0.0
    %1350 = vmatprep.subr.mxu0 0.0
    %1351 = vmatpush1.xpose.msra.mxu0 0.0
    %1352 = vmatprep.subr.mxu0 0.0
    %1353 = vmatpush1.xpose.msra.mxu0 0.0
    %1354 = vmatprep.subr.mxu0 0.0
    %1355 = vmatpush1.xpose.msra.mxu0 0.0
    %1356 = vmatprep.subr.mxu0 0.0
    %1357 = vmatpush1.xpose.msra.mxu0 0.0
    %1358 = vmatprep.subr.mxu0 0.0
    %1359 = vmatpush1.xpose.msra.mxu0 0.0
    %1360 = vmatprep.subr.mxu0 0.0
    %1361 = vmatpush1.xpose.msra.mxu0 0.0
    %1362 = vmatprep.subr.mxu0 0.0
    %1363 = vmatpush1.xpose.msra.mxu0 0.0
    %1364 = vmatprep.subr.mxu0 0.0
    %1365 = vmatpush1.xpose.msra.mxu0 0.0
    %1366 = vmatprep.subr.mxu0 0.0
    %1367 = vmatpush1.xpose.msra.mxu0 0.0
    %1368 = vmatprep.subr.mxu0 0.0
    %1369 = vmatpush1.xpose.msra.mxu0 0.0
    %1370 = vmatprep.subr.mxu0 0.0
    %1371 = vmatpush1.xpose.msra.mxu0 0.0
    %1372 = vmatprep.mubr.f32.mxu0 0.0
    %1373 = vmatmul.mubr.f32.gmra.mrb[0].mxu0 %v1296
    %v1374 = vpop.f32.mrb[0].mxu0
    %v1375 = vadd.f32 %v274, %v1374
    %v1376 = vpop.f32.mrb[0].mxu0
    %1377 = vmatprep.mubr.f32.mxu0 0.0
    %1378 = vmatmul.mubr.f32.gmra.mrb[0].mxu0 %v1298
    %v1379 = vpop.f32.mrb[0].mxu0
    %v1380 = vadd.f32 %v275, %v1379
    %v1381 = vpop.f32.mrb[0].mxu0
    %1382 = vmatprep.mubr.f32.mxu0 0.0
    %1383 = vmatmul.mubr.f32.gmra.mrb[0].mxu0 %v1300
    %v1384 = vpop.f32.mrb[0].mxu0
    %v1385 = vadd.f32 %v276, %v1384
    %v1386 = vpop.f32.mrb[0].mxu0
    %1387 = vmatprep.mubr.f32.mxu0 0.0
    %1388 = vmatmul.mubr.f32.gmra.mrb[0].mxu0 %v1302
    %v1389 = vpop.f32.mrb[0].mxu0
    %v1390 = vadd.f32 %v277, %v1389
    %v1391 = vpop.f32.mrb[0].mxu0
    %1392 = vdwg.mxu0
    %v1393 = vsel %vm1192, %v1375, -inf
    %1394 = vmax.xlane.f32.xlu0 %v1393
    %v1395 = vpop.xlane.xlu0 %1394
    %v1396 = vsel %vm1192, %v1380, -inf
    %1397 = vmax.xlane.f32.xlu0 %v1396
    %v1398 = vpop.xlane.xlu0 %1397
    %v1399 = vsel %vm1192, %v1385, -inf
    %1400 = vmax.xlane.f32.xlu0 %v1399
    %v1401 = vpop.xlane.xlu0 %1400
    %v1402 = vsel %vm1192, %v1390, -inf
    %1403 = vmax.xlane.f32.xlu0 %v1402
    %v1404 = vpop.xlane.xlu0 %1403
    %v1405 = vsub.f32 %v1375, %v1395
    %v1406 = vsub.f32 %v1380, %v1398
    %v1407 = vsub.f32 %v1385, %v1401
    %v1408 = vsub.f32 %v1390, %v1404
    %v1409 = vmul.f32 %v1405, 1.442695
    %v1410 = vpow.pop %v1409
    %v1411 = vmul.f32 %v1406, 1.442695
    %v1412 = vpow.pop %v1411
    %v1413 = vmul.f32 %v1407, 1.442695
    %v1414 = vpow.pop %v1413
    %v1415 = vmul.f32 %v1408, 1.442695
    %v1416 = vpow.pop %v1415
    %v1417 = vsel %vm1192, %v1410, 0.0
    %1418 = vadd.xlane.f32.xlu0 %v1417
    %v1419 = vpop.xlane.xlu0 %1418
    %v1420 = vsel %vm1192, %v1412, 0.0
    %1421 = vadd.xlane.f32.xlu0 %v1420
    %v1422 = vpop.xlane.xlu0 %1421
    %v1423 = vsel %vm1192, %v1414, 0.0
    %1424 = vadd.xlane.f32.xlu0 %v1423
    %v1425 = vpop.xlane.xlu0 %1424
    %v1426 = vsel %vm1192, %v1416, 0.0
    %1427 = vadd.xlane.f32.xlu0 %v1426
    %v1428 = vpop.xlane.xlu0 %1427
    %v1429 = vrcp.pop %v1419
    %v1430 = vrcp.pop %v1422
    %v1431 = vrcp.pop %v1425
    %v1432 = vrcp.pop %v1428
    %v1433 = vmul.f32 %v1419, %v1429
    %v1434 = vmul.f32 %v1422, %v1430
    %v1435 = vmul.f32 %v1425, %v1431
    %v1436 = vmul.f32 %v1428, %v1432
    %v1437 = vsub.f32 2.0, %v1433
    %v1438 = vsub.f32 2.0, %v1434
    %v1439 = vsub.f32 2.0, %v1435
    %v1440 = vsub.f32 2.0, %v1436
    %v1441 = vmul.f32 %v1429, %v1437
    %v1442 = vmul.f32 %v1430, %v1438
    %v1443 = vmul.f32 %v1431, %v1439
    %v1444 = vmul.f32 %v1432, %v1440
    %v1445 = vmul.f32 %v1410, %v1441
    %v1446 = vmul.f32 %v1412, %v1442
    %v1447 = vmul.f32 %v1414, %v1443
    %v1448 = vmul.f32 %v1416, %v1444
    %1449 = vrot.lane.b32.xlu0 %v154, 64
    %v1450 = vpop.permute.xlu0 %1449
    %1451 = vrot.lane.b32.xlu0 %v159, 64
    %v1452 = vpop.permute.xlu0 %1451
    %v1456 = vsel %vm1192, %v1445, 0
    %v1459 = vsel %vm1192, %v1446, 0
    %v1462 = vsel %vm1192, %v1447, 0
    %v1465 = vsel %vm1192, %v1448, 0
    %1467 = vmatprep.subr.mxu0 0.0
    %1468 = vmatpush1.msra.mxu0 %v1450
    %1469 = vmatprep.subr.mxu0 0.0
    %1470 = vmatpush1.msra.mxu0 %v1452
    %1471 = vmatprep.subr.mxu0 0.0
    %1472 = vmatpush1.msra.mxu0 0.0
    %1473 = vmatprep.subr.mxu0 0.0
    %1474 = vmatpush1.msra.mxu0 0.0
    %1475 = vmatprep.subr.mxu0 0.0
    %1476 = vmatpush1.msra.mxu0 0.0
    %1477 = vmatprep.subr.mxu0 0.0
    %1478 = vmatpush1.msra.mxu0 0.0
    %1479 = vmatprep.subr.mxu0 0.0
    %1480 = vmatpush1.msra.mxu0 0.0
    %1481 = vmatprep.subr.mxu0 0.0
    %1482 = vmatpush1.msra.mxu0 0.0
    %1483 = vmatprep.subr.mxu0 0.0
    %1484 = vmatpush1.msra.mxu0 0.0
    %1485 = vmatprep.subr.mxu0 0.0
    %1486 = vmatpush1.msra.mxu0 0.0
    %1487 = vmatprep.subr.mxu0 0.0
    %1488 = vmatpush1.msra.mxu0 0.0
    %1489 = vmatprep.subr.mxu0 0.0
    %1490 = vmatpush1.msra.mxu0 0.0
    %1491 = vmatprep.subr.mxu0 0.0
    %1492 = vmatpush1.msra.mxu0 0.0
    %1493 = vmatprep.subr.mxu0 0.0
    %1494 = vmatpush1.msra.mxu0 0.0
    %1495 = vmatprep.subr.mxu0 0.0
    %1496 = vmatpush1.msra.mxu0 0.0
    %1497 = vmatprep.subr.mxu0 0.0
    %1498 = vmatpush1.msra.mxu0 0.0
    %1499 = vmatprep.subr.mxu0 0.0
    %1500 = vmatpush1.msra.mxu0 0.0
    %1501 = vmatprep.subr.mxu0 0.0
    %1502 = vmatpush1.msra.mxu0 0.0
    %1503 = vmatprep.subr.mxu0 0.0
    %1504 = vmatpush1.msra.mxu0 0.0
    %1505 = vmatprep.subr.mxu0 0.0
    %1506 = vmatpush1.msra.mxu0 0.0
    %1507 = vmatprep.subr.mxu0 0.0
    %1508 = vmatpush1.msra.mxu0 0.0
    %1509 = vmatprep.subr.mxu0 0.0
    %1510 = vmatpush1.msra.mxu0 0.0
    %1511 = vmatprep.subr.mxu0 0.0
    %1512 = vmatpush1.msra.mxu0 0.0
    %1513 = vmatprep.subr.mxu0 0.0
    %1514 = vmatpush1.msra.mxu0 0.0
    %1515 = vmatprep.subr.mxu0 0.0
    %1516 = vmatpush1.msra.mxu0 0.0
    %1517 = vmatprep.subr.mxu0 0.0
    %1518 = vmatpush1.msra.mxu0 0.0
    %1519 = vmatprep.subr.mxu0 0.0
    %1520 = vmatpush1.msra.mxu0 0.0
    %1521 = vmatprep.subr.mxu0 0.0
    %1522 = vmatpush1.msra.mxu0 0.0
    %1523 = vmatprep.subr.mxu0 0.0
    %1524 = vmatpush1.msra.mxu0 0.0
    %1525 = vmatprep.subr.mxu0 0.0
    %1526 = vmatpush1.msra.mxu0 0.0
    %1527 = vmatprep.subr.mxu0 0.0
    %1528 = vmatpush1.msra.mxu0 0.0
    %1529 = vmatprep.subr.mxu0 0.0
    %1530 = vmatpush1.msra.mxu0 0.0
    %1531 = vmatprep.mubr.f32.mxu0 0.0
    %1532 = vmatmul.mubr.f32.gmra.mrb[0].mxu0 %v1456
    %v1533 = vpop.f32.mrb[0].mxu0
    %v1534 = vadd.f32 0.0, %v1533
    %v1535 = vpop.f32.mrb[0].mxu0
    %1536 = vmatprep.mubr.f32.mxu0 0.0
    %1537 = vmatmul.mubr.f32.gmra.mrb[0].mxu0 %v1459
    %v1538 = vpop.f32.mrb[0].mxu0
    %v1539 = vadd.f32 0.0, %v1538
    %v1540 = vpop.f32.mrb[0].mxu0
    %1541 = vmatprep.mubr.f32.mxu0 0.0
    %1542 = vmatmul.mubr.f32.gmra.mrb[0].mxu0 %v1462
    %v1543 = vpop.f32.mrb[0].mxu0
    %v1544 = vadd.f32 0.0, %v1543
    %v1545 = vpop.f32.mrb[0].mxu0
    %1546 = vmatprep.mubr.f32.mxu0 0.0
    %1547 = vmatmul.mubr.f32.gmra.mrb[0].mxu0 %v1465
    %v1548 = vpop.f32.mrb[0].mxu0
    %v1549 = vadd.f32 0.0, %v1548
    %v1550 = vpop.f32.mrb[0].mxu0
    %1551 = vdwg.mxu0
    %1552 = vrot.lane.b32.xlu0 %v254, 120
    %v1553 = vpop.permute.xlu0 %1552
    %1554 = vrot.lane.b32.xlu0 %v259, 120
    %v1555 = vpop.permute.xlu0 %1554
    %1556 = vrot.lane.b32.xlu0 %v264, 120
    %v1557 = vpop.permute.xlu0 %1556
    %1558 = vrot.lane.b32.xlu0 %v269, 120
    %v1559 = vpop.permute.xlu0 %1558
    %1560 = vrot.lane.b32.xlu0 %v154, 88
    %v1561 = vpop.permute.xlu0 %1560
    %1562 = vrot.lane.b32.xlu0 %v159, 88
    %v1563 = vpop.permute.xlu0 %1562
    %v1564 = vsel %vm295, %v1553, 0
    %v1566 = vsel %vm295, %v1555, 0
    %v1568 = vsel %vm295, %v1557, 0
    %v1570 = vsel %vm295, %v1559, 0
    %v1572 = vsel %vm295, %v1561, 0
    %v1574 = vsel %vm295, %v1563, 0
    %1576 = vmatprep.subr.mxu0 0.0
    %1577 = vmatpush1.xpose.msra.mxu0 %v1572
    %1578 = vmatprep.subr.mxu0 0.0
    %1579 = vmatpush1.xpose.msra.mxu0 %v1574
    %1580 = vmatprep.subr.mxu0 0.0
    %1581 = vmatpush1.xpose.msra.mxu0 0.0
    %1582 = vmatprep.subr.mxu0 0.0
    %1583 = vmatpush1.xpose.msra.mxu0 0.0
    %1584 = vmatprep.subr.mxu0 0.0
    %1585 = vmatpush1.xpose.msra.mxu0 0.0
    %1586 = vmatprep.subr.mxu0 0.0
    %1587 = vmatpush1.xpose.msra.mxu0 0.0
    %1588 = vmatprep.subr.mxu0 0.0
    %1589 = vmatpush1.xpose.msra.mxu0 0.0
    %1590 = vmatprep.subr.mxu0 0.0
    %1591 = vmatpush1.xpose.msra.mxu0 0.0
    %1592 = vmatprep.subr.mxu0 0.0
    %1593 = vmatpush1.xpose.msra.mxu0 0.0
    %1594 = vmatprep.subr.mxu0 0.0
    %1595 = vmatpush1.xpose.msra.mxu0 0.0
    %1596 = vmatprep.subr.mxu0 0.0
    %1597 = vmatpush1.xpose.msra.mxu0 0.0
    %1598 = vmatprep.subr.mxu0 0.0
    %1599 = vmatpush1.xpose.msra.mxu0 0.0
    %1600 = vmatprep.subr.mxu0 0.0
    %1601 = vmatpush1.xpose.msra.mxu0 0.0
    %1602 = vmatprep.subr.mxu0 0.0
    %1603 = vmatpush1.xpose.msra.mxu0 0.0
    %1604 = vmatprep.subr.mxu0 0.0
    %1605 = vmatpush1.xpose.msra.mxu0 0.0
    %1606 = vmatprep.subr.mxu0 0.0
    %1607 = vmatpush1.xpose.msra.mxu0 0.0
    %1608 = vmatprep.subr.mxu0 0.0
    %1609 = vmatpush1.xpose.msra.mxu0 0.0
    %1610 = vmatprep.subr.mxu0 0.0
    %1611 = vmatpush1.xpose.msra.mxu0 0.0
    %1612 = vmatprep.subr.mxu0 0.0
    %1613 = vmatpush1.xpose.msra.mxu0 0.0
    %1614 = vmatprep.subr.mxu0 0.0
    %1615 = vmatpush1.xpose.msra.mxu0 0.0
    %1616 = vmatprep.subr.mxu0 0.0
    %1617 = vmatpush1.xpose.msra.mxu0 0.0
    %1618 = vmatprep.subr.mxu0 0.0
    %1619 = vmatpush1.xpose.msra.mxu0 0.0
    %1620 = vmatprep.subr.mxu0 0.0
    %1621 = vmatpush1.xpose.msra.mxu0 0.0
    %1622 = vmatprep.subr.mxu0 0.0
    %1623 = vmatpush1.xpose.msra.mxu0 0.0
    %1624 = vmatprep.subr.mxu0 0.0
    %1625 = vmatpush1.xpose.msra.mxu0 0.0
    %1626 = vmatprep.subr.mxu0 0.0
    %1627 = vmatpush1.xpose.msra.mxu0 0.0
    %1628 = vmatprep.subr.mxu0 0.0
    %1629 = vmatpush1.xpose.msra.mxu0 0.0
    %1630 = vmatprep.subr.mxu0 0.0
    %1631 = vmatpush1.xpose.msra.mxu0 0.0
    %1632 = vmatprep.subr.mxu0 0.0
    %1633 = vmatpush1.xpose.msra.mxu0 0.0
    %1634 = vmatprep.subr.mxu0 0.0
    %1635 = vmatpush1.xpose.msra.mxu0 0.0
    %1636 = vmatprep.subr.mxu0 0.0
    %1637 = vmatpush1.xpose.msra.mxu0 0.0
    %1638 = vmatprep.subr.mxu0 0.0
    %1639 = vmatpush1.xpose.msra.mxu0 0.0
    %1640 = vmatprep.mubr.f32.mxu0 0.0
    %1641 = vmatmul.mubr.f32.gmra.mrb[0].mxu0 %v1564
    %v1642 = vpop.f32.mrb[0].mxu0
    %v1643 = vadd.f32 %v274, %v1642
    %v1644 = vpop.f32.mrb[0].mxu0
    %1645 = vmatprep.mubr.f32.mxu0 0.0
    %1646 = vmatmul.mubr.f32.gmra.mrb[0].mxu0 %v1566
    %v1647 = vpop.f32.mrb[0].mxu0
    %v1648 = vadd.f32 %v275, %v1647
    %v1649 = vpop.f32.mrb[0].mxu0
    %1650 = vmatprep.mubr.f32.mxu0 0.0
    %1651 = vmatmul.mubr.f32.gmra.mrb[0].mxu0 %v1568
    %v1652 = vpop.f32.mrb[0].mxu0
    %v1653 = vadd.f32 %v276, %v1652
    %v1654 = vpop.f32.mrb[0].mxu0
    %1655 = vmatprep.mubr.f32.mxu0 0.0
    %1656 = vmatmul.mubr.f32.gmra.mrb[0].mxu0 %v1570
    %v1657 = vpop.f32.mrb[0].mxu0
    %v1658 = vadd.f32 %v277, %v1657
    %v1659 = vpop.f32.mrb[0].mxu0
    %1660 = vdwg.mxu0
    %v1661 = vsel %vm1192, %v1643, -inf
    %1662 = vmax.xlane.f32.xlu0 %v1661
    %v1663 = vpop.xlane.xlu0 %1662
    %v1664 = vsel %vm1192, %v1648, -inf
    %1665 = vmax.xlane.f32.xlu0 %v1664
    %v1666 = vpop.xlane.xlu0 %1665
    %v1667 = vsel %vm1192, %v1653, -inf
    %1668 = vmax.xlane.f32.xlu0 %v1667
    %v1669 = vpop.xlane.xlu0 %1668
    %v1670 = vsel %vm1192, %v1658, -inf
    %1671 = vmax.xlane.f32.xlu0 %v1670
    %v1672 = vpop.xlane.xlu0 %1671
    %v1673 = vsub.f32 %v1643, %v1663
    %v1674 = vsub.f32 %v1648, %v1666
    %v1675 = vsub.f32 %v1653, %v1669
    %v1676 = vsub.f32 %v1658, %v1672
    %v1677 = vmul.f32 %v1673, 1.442695
    %v1678 = vpow.pop %v1677
    %v1679 = vmul.f32 %v1674, 1.442695
    %v1680 = vpow.pop %v1679
    %v1681 = vmul.f32 %v1675, 1.442695
    %v1682 = vpow.pop %v1681
    %v1683 = vmul.f32 %v1676, 1.442695
    %v1684 = vpow.pop %v1683
    %v1685 = vsel %vm1192, %v1678, 0.0
    %1686 = vadd.xlane.f32.xlu0 %v1685
    %v1687 = vpop.xlane.xlu0 %1686
    %v1688 = vsel %vm1192, %v1680, 0.0
    %1689 = vadd.xlane.f32.xlu0 %v1688
    %v1690 = vpop.xlane.xlu0 %1689
    %v1691 = vsel %vm1192, %v1682, 0.0
    %1692 = vadd.xlane.f32.xlu0 %v1691
    %v1693 = vpop.xlane.xlu0 %1692
    %v1694 = vsel %vm1192, %v1684, 0.0
    %1695 = vadd.xlane.f32.xlu0 %v1694
    %v1696 = vpop.xlane.xlu0 %1695
    %v1697 = vrcp.pop %v1687
    %v1698 = vrcp.pop %v1690
    %v1699 = vrcp.pop %v1693
    %v1700 = vrcp.pop %v1696
    %v1701 = vmul.f32 %v1687, %v1697
    %v1702 = vmul.f32 %v1690, %v1698
    %v1703 = vmul.f32 %v1693, %v1699
    %v1704 = vmul.f32 %v1696, %v1700
    %v1705 = vsub.f32 2.0, %v1701
    %v1706 = vsub.f32 2.0, %v1702
    %v1707 = vsub.f32 2.0, %v1703
    %v1708 = vsub.f32 2.0, %v1704
    %v1709 = vmul.f32 %v1697, %v1705
    %v1710 = vmul.f32 %v1698, %v1706
    %v1711 = vmul.f32 %v1699, %v1707
    %v1712 = vmul.f32 %v1700, %v1708
    %v1713 = vmul.f32 %v1678, %v1709
    %v1714 = vmul.f32 %v1680, %v1710
    %v1715 = vmul.f32 %v1682, %v1711
    %v1716 = vmul.f32 %v1684, %v1712
    %1717 = vrot.lane.b32.xlu0 %v154, 56
    %v1718 = vpop.permute.xlu0 %1717
    %1719 = vrot.lane.b32.xlu0 %v159, 56
    %v1720 = vpop.permute.xlu0 %1719
    %v1724 = vsel %vm1192, %v1713, 0
    %v1727 = vsel %vm1192, %v1714, 0
    %v1730 = vsel %vm1192, %v1715, 0
    %v1733 = vsel %vm1192, %v1716, 0
    %1735 = vmatprep.subr.mxu0 0.0
    %1736 = vmatpush1.msra.mxu0 %v1718
    %1737 = vmatprep.subr.mxu0 0.0
    %1738 = vmatpush1.msra.mxu0 %v1720
    %1739 = vmatprep.subr.mxu0 0.0
    %1740 = vmatpush1.msra.mxu0 0.0
    %1741 = vmatprep.subr.mxu0 0.0
    %1742 = vmatpush1.msra.mxu0 0.0
    %1743 = vmatprep.subr.mxu0 0.0
    %1744 = vmatpush1.msra.mxu0 0.0
    %1745 = vmatprep.subr.mxu0 0.0
    %1746 = vmatpush1.msra.mxu0 0.0
    %1747 = vmatprep.subr.mxu0 0.0
    %1748 = vmatpush1.msra.mxu0 0.0
    %1749 = vmatprep.subr.mxu0 0.0
    %1750 = vmatpush1.msra.mxu0 0.0
    %1751 = vmatprep.subr.mxu0 0.0
    %1752 = vmatpush1.msra.mxu0 0.0
    %1753 = vmatprep.subr.mxu0 0.0
    %1754 = vmatpush1.msra.mxu0 0.0
    %1755 = vmatprep.subr.mxu0 0.0
    %1756 = vmatpush1.msra.mxu0 0.0
    %1757 = vmatprep.subr.mxu0 0.0
    %1758 = vmatpush1.msra.mxu0 0.0
    %1759 = vmatprep.subr.mxu0 0.0
    %1760 = vmatpush1.msra.mxu0 0.0
    %1761 = vmatprep.subr.mxu0 0.0
    %1762 = vmatpush1.msra.mxu0 0.0
    %1763 = vmatprep.subr.mxu0 0.0
    %1764 = vmatpush1.msra.mxu0 0.0
    %1765 = vmatprep.subr.mxu0 0.0
    %1766 = vmatpush1.msra.mxu0 0.0
    %1767 = vmatprep.subr.mxu0 0.0
    %1768 = vmatpush1.msra.mxu0 0.0
    %1769 = vmatprep.subr.mxu0 0.0
    %1770 = vmatpush1.msra.mxu0 0.0
    %1771 = vmatprep.subr.mxu0 0.0
    %1772 = vmatpush1.msra.mxu0 0.0
    %1773 = vmatprep.subr.mxu0 0.0
    %1774 = vmatpush1.msra.mxu0 0.0
    %1775 = vmatprep.subr.mxu0 0.0
    %1776 = vmatpush1.msra.mxu0 0.0
    %1777 = vmatprep.subr.mxu0 0.0
    %1778 = vmatpush1.msra.mxu0 0.0
    %1779 = vmatprep.subr.mxu0 0.0
    %1780 = vmatpush1.msra.mxu0 0.0
    %1781 = vmatprep.subr.mxu0 0.0
    %1782 = vmatpush1.msra.mxu0 0.0
    %1783 = vmatprep.subr.mxu0 0.0
    %1784 = vmatpush1.msra.mxu0 0.0
    %1785 = vmatprep.subr.mxu0 0.0
    %1786 = vmatpush1.msra.mxu0 0.0
    %1787 = vmatprep.subr.mxu0 0.0
    %1788 = vmatpush1.msra.mxu0 0.0
    %1789 = vmatprep.subr.mxu0 0.0
    %1790 = vmatpush1.msra.mxu0 0.0
    %1791 = vmatprep.subr.mxu0 0.0
    %1792 = vmatpush1.msra.mxu0 0.0
    %1793 = vmatprep.subr.mxu0 0.0
    %1794 = vmatpush1.msra.mxu0 0.0
    %1795 = vmatprep.subr.mxu0 0.0
    %1796 = vmatpush1.msra.mxu0 0.0
    %1797 = vmatprep.subr.mxu0 0.0
    %1798 = vmatpush1.msra.mxu0 0.0
    %1799 = vmatprep.mubr.f32.mxu0 0.0
    %1800 = vmatmul.mubr.f32.gmra.mrb[0].mxu0 %v1724
    %v1801 = vpop.f32.mrb[0].mxu0
    %v1802 = vadd.f32 0.0, %v1801
    %v1803 = vpop.f32.mrb[0].mxu0
    %1804 = vmatprep.mubr.f32.mxu0 0.0
    %1805 = vmatmul.mubr.f32.gmra.mrb[0].mxu0 %v1727
    %v1806 = vpop.f32.mrb[0].mxu0
    %v1807 = vadd.f32 0.0, %v1806
    %v1808 = vpop.f32.mrb[0].mxu0
    %1809 = vmatprep.mubr.f32.mxu0 0.0
    %1810 = vmatmul.mubr.f32.gmra.mrb[0].mxu0 %v1730
    %v1811 = vpop.f32.mrb[0].mxu0
    %v1812 = vadd.f32 0.0, %v1811
    %v1813 = vpop.f32.mrb[0].mxu0
    %1814 = vmatprep.mubr.f32.mxu0 0.0
    %1815 = vmatmul.mubr.f32.gmra.mrb[0].mxu0 %v1733
    %v1816 = vpop.f32.mrb[0].mxu0
    %v1817 = vadd.f32 0.0, %v1816
    %v1818 = vpop.f32.mrb[0].mxu0
    %1819 = vdwg.mxu0
    %1820 = vrot.lane.b32.xlu0 %v254, 112
    %v1821 = vpop.permute.xlu0 %1820
    %1822 = vrot.lane.b32.xlu0 %v259, 112
    %v1823 = vpop.permute.xlu0 %1822
    %1824 = vrot.lane.b32.xlu0 %v264, 112
    %v1825 = vpop.permute.xlu0 %1824
    %1826 = vrot.lane.b32.xlu0 %v269, 112
    %v1827 = vpop.permute.xlu0 %1826
    %1828 = vrot.lane.b32.xlu0 %v154, 80
    %v1829 = vpop.permute.xlu0 %1828
    %1830 = vrot.lane.b32.xlu0 %v159, 80
    %v1831 = vpop.permute.xlu0 %1830
    %v1832 = vsel %vm295, %v1821, 0
    %v1834 = vsel %vm295, %v1823, 0
    %v1836 = vsel %vm295, %v1825, 0
    %v1838 = vsel %vm295, %v1827, 0
    %v1840 = vsel %vm295, %v1829, 0
    %v1842 = vsel %vm295, %v1831, 0
    %1844 = vmatprep.subr.mxu0 0.0
    %1845 = vmatpush1.xpose.msra.mxu0 %v1840
    %1846 = vmatprep.subr.mxu0 0.0
    %1847 = vmatpush1.xpose.msra.mxu0 %v1842
    %1848 = vmatprep.subr.mxu0 0.0
    %1849 = vmatpush1.xpose.msra.mxu0 0.0
    %1850 = vmatprep.subr.mxu0 0.0
    %1851 = vmatpush1.xpose.msra.mxu0 0.0
    %1852 = vmatprep.subr.mxu0 0.0
    %1853 = vmatpush1.xpose.msra.mxu0 0.0
    %1854 = vmatprep.subr.mxu0 0.0
    %1855 = vmatpush1.xpose.msra.mxu0 0.0
    %1856 = vmatprep.subr.mxu0 0.0
    %1857 = vmatpush1.xpose.msra.mxu0 0.0
    %1858 = vmatprep.subr.mxu0 0.0
    %1859 = vmatpush1.xpose.msra.mxu0 0.0
    %1860 = vmatprep.subr.mxu0 0.0
    %1861 = vmatpush1.xpose.msra.mxu0 0.0
    %1862 = vmatprep.subr.mxu0 0.0
    %1863 = vmatpush1.xpose.msra.mxu0 0.0
    %1864 = vmatprep.subr.mxu0 0.0
    %1865 = vmatpush1.xpose.msra.mxu0 0.0
    %1866 = vmatprep.subr.mxu0 0.0
    %1867 = vmatpush1.xpose.msra.mxu0 0.0
    %1868 = vmatprep.subr.mxu0 0.0
    %1869 = vmatpush1.xpose.msra.mxu0 0.0
    %1870 = vmatprep.subr.mxu0 0.0
    %1871 = vmatpush1.xpose.msra.mxu0 0.0
    %1872 = vmatprep.subr.mxu0 0.0
    %1873 = vmatpush1.xpose.msra.mxu0 0.0
    %1874 = vmatprep.subr.mxu0 0.0
    %1875 = vmatpush1.xpose.msra.mxu0 0.0
    %1876 = vmatprep.subr.mxu0 0.0
    %1877 = vmatpush1.xpose.msra.mxu0 0.0
    %1878 = vmatprep.subr.mxu0 0.0
    %1879 = vmatpush1.xpose.msra.mxu0 0.0
    %1880 = vmatprep.subr.mxu0 0.0
    %1881 = vmatpush1.xpose.msra.mxu0 0.0
    %1882 = vmatprep.subr.mxu0 0.0
    %1883 = vmatpush1.xpose.msra.mxu0 0.0
    %1884 = vmatprep.subr.mxu0 0.0
    %1885 = vmatpush1.xpose.msra.mxu0 0.0
    %1886 = vmatprep.subr.mxu0 0.0
    %1887 = vmatpush1.xpose.msra.mxu0 0.0
    %1888 = vmatprep.subr.mxu0 0.0
    %1889 = vmatpush1.xpose.msra.mxu0 0.0
    %1890 = vmatprep.subr.mxu0 0.0
    %1891 = vmatpush1.xpose.msra.mxu0 0.0
    %1892 = vmatprep.subr.mxu0 0.0
    %1893 = vmatpush1.xpose.msra.mxu0 0.0
    %1894 = vmatprep.subr.mxu0 0.0
    %1895 = vmatpush1.xpose.msra.mxu0 0.0
    %1896 = vmatprep.subr.mxu0 0.0
    %1897 = vmatpush1.xpose.msra.mxu0 0.0
    %1898 = vmatprep.subr.mxu0 0.0
    %1899 = vmatpush1.xpose.msra.mxu0 0.0
    %1900 = vmatprep.subr.mxu0 0.0
    %1901 = vmatpush1.xpose.msra.mxu0 0.0
    %1902 = vmatprep.subr.mxu0 0.0
    %1903 = vmatpush1.xpose.msra.mxu0 0.0
    %1904 = vmatprep.subr.mxu0 0.0
    %1905 = vmatpush1.xpose.msra.mxu0 0.0
    %1906 = vmatprep.subr.mxu0 0.0
    %1907 = vmatpush1.xpose.msra.mxu0 0.0
    %1908 = vmatprep.mubr.f32.mxu0 0.0
    %1909 = vmatmul.mubr.f32.gmra.mrb[0].mxu0 %v1832
    %v1910 = vpop.f32.mrb[0].mxu0
    %v1911 = vadd.f32 %v274, %v1910
    %v1912 = vpop.f32.mrb[0].mxu0
    %1913 = vmatprep.mubr.f32.mxu0 0.0
    %1914 = vmatmul.mubr.f32.gmra.mrb[0].mxu0 %v1834
    %v1915 = vpop.f32.mrb[0].mxu0
    %v1916 = vadd.f32 %v275, %v1915
    %v1917 = vpop.f32.mrb[0].mxu0
    %1918 = vmatprep.mubr.f32.mxu0 0.0
    %1919 = vmatmul.mubr.f32.gmra.mrb[0].mxu0 %v1836
    %v1920 = vpop.f32.mrb[0].mxu0
    %v1921 = vadd.f32 %v276, %v1920
    %v1922 = vpop.f32.mrb[0].mxu0
    %1923 = vmatprep.mubr.f32.mxu0 0.0
    %1924 = vmatmul.mubr.f32.gmra.mrb[0].mxu0 %v1838
    %v1925 = vpop.f32.mrb[0].mxu0
    %v1926 = vadd.f32 %v277, %v1925
    %v1927 = vpop.f32.mrb[0].mxu0
    %1928 = vdwg.mxu0
    %v1929 = vsel %vm1192, %v1911, -inf
    %1930 = vmax.xlane.f32.xlu0 %v1929
    %v1931 = vpop.xlane.xlu0 %1930
    %v1932 = vsel %vm1192, %v1916, -inf
    %1933 = vmax.xlane.f32.xlu0 %v1932
    %v1934 = vpop.xlane.xlu0 %1933
    %v1935 = vsel %vm1192, %v1921, -inf
    %1936 = vmax.xlane.f32.xlu0 %v1935
    %v1937 = vpop.xlane.xlu0 %1936
    %v1938 = vsel %vm1192, %v1926, -inf
    %1939 = vmax.xlane.f32.xlu0 %v1938
    %v1940 = vpop.xlane.xlu0 %1939
    %v1941 = vsub.f32 %v1911, %v1931
    %v1942 = vsub.f32 %v1916, %v1934
    %v1943 = vsub.f32 %v1921, %v1937
    %v1944 = vsub.f32 %v1926, %v1940
    %v1945 = vmul.f32 %v1941, 1.442695
    %v1946 = vpow.pop %v1945
    %v1947 = vmul.f32 %v1942, 1.442695
    %v1948 = vpow.pop %v1947
    %v1949 = vmul.f32 %v1943, 1.442695
    %v1950 = vpow.pop %v1949
    %v1951 = vmul.f32 %v1944, 1.442695
    %v1952 = vpow.pop %v1951
    %v1953 = vsel %vm1192, %v1946, 0.0
    %1954 = vadd.xlane.f32.xlu0 %v1953
    %v1955 = vpop.xlane.xlu0 %1954
    %v1956 = vsel %vm1192, %v1948, 0.0
    %1957 = vadd.xlane.f32.xlu0 %v1956
    %v1958 = vpop.xlane.xlu0 %1957
    %v1959 = vsel %vm1192, %v1950, 0.0
    %1960 = vadd.xlane.f32.xlu0 %v1959
    %v1961 = vpop.xlane.xlu0 %1960
    %v1962 = vsel %vm1192, %v1952, 0.0
    %1963 = vadd.xlane.f32.xlu0 %v1962
    %v1964 = vpop.xlane.xlu0 %1963
    %v1965 = vrcp.pop %v1955
    %v1966 = vrcp.pop %v1958
    %v1967 = vrcp.pop %v1961
    %v1968 = vrcp.pop %v1964
    %v1969 = vmul.f32 %v1955, %v1965
    %v1970 = vmul.f32 %v1958, %v1966
    %v1971 = vmul.f32 %v1961, %v1967
    %v1972 = vmul.f32 %v1964, %v1968
    %v1973 = vsub.f32 2.0, %v1969
    %v1974 = vsub.f32 2.0, %v1970
    %v1975 = vsub.f32 2.0, %v1971
    %v1976 = vsub.f32 2.0, %v1972
    %v1977 = vmul.f32 %v1965, %v1973
    %v1978 = vmul.f32 %v1966, %v1974
    %v1979 = vmul.f32 %v1967, %v1975
    %v1980 = vmul.f32 %v1968, %v1976
    %v1981 = vmul.f32 %v1946, %v1977
    %v1982 = vmul.f32 %v1948, %v1978
    %v1983 = vmul.f32 %v1950, %v1979
    %v1984 = vmul.f32 %v1952, %v1980
    %1985 = vrot.lane.b32.xlu0 %v154, 48
    %v1986 = vpop.permute.xlu0 %1985
    %1987 = vrot.lane.b32.xlu0 %v159, 48
    %v1988 = vpop.permute.xlu0 %1987
    %v1992 = vsel %vm1192, %v1981, 0
    %v1995 = vsel %vm1192, %v1982, 0
    %v1998 = vsel %vm1192, %v1983, 0
    %v2001 = vsel %vm1192, %v1984, 0
    %2003 = vmatprep.subr.mxu0 0.0
    %2004 = vmatpush1.msra.mxu0 %v1986
    %2005 = vmatprep.subr.mxu0 0.0
    %2006 = vmatpush1.msra.mxu0 %v1988
    %2007 = vmatprep.subr.mxu0 0.0
    %2008 = vmatpush1.msra.mxu0 0.0
    %2009 = vmatprep.subr.mxu0 0.0
    %2010 = vmatpush1.msra.mxu0 0.0
    %2011 = vmatprep.subr.mxu0 0.0
    %2012 = vmatpush1.msra.mxu0 0.0
    %2013 = vmatprep.subr.mxu0 0.0
    %2014 = vmatpush1.msra.mxu0 0.0
    %2015 = vmatprep.subr.mxu0 0.0
    %2016 = vmatpush1.msra.mxu0 0.0
    %2017 = vmatprep.subr.mxu0 0.0
    %2018 = vmatpush1.msra.mxu0 0.0
    %2019 = vmatprep.subr.mxu0 0.0
    %2020 = vmatpush1.msra.mxu0 0.0
    %2021 = vmatprep.subr.mxu0 0.0
    %2022 = vmatpush1.msra.mxu0 0.0
    %2023 = vmatprep.subr.mxu0 0.0
    %2024 = vmatpush1.msra.mxu0 0.0
    %2025 = vmatprep.subr.mxu0 0.0
    %2026 = vmatpush1.msra.mxu0 0.0
    %2027 = vmatprep.subr.mxu0 0.0
    %2028 = vmatpush1.msra.mxu0 0.0
    %2029 = vmatprep.subr.mxu0 0.0
    %2030 = vmatpush1.msra.mxu0 0.0
    %2031 = vmatprep.subr.mxu0 0.0
    %2032 = vmatpush1.msra.mxu0 0.0
    %2033 = vmatprep.subr.mxu0 0.0
    %2034 = vmatpush1.msra.mxu0 0.0
    %2035 = vmatprep.subr.mxu0 0.0
    %2036 = vmatpush1.msra.mxu0 0.0
    %2037 = vmatprep.subr.mxu0 0.0
    %2038 = vmatpush1.msra.mxu0 0.0
    %2039 = vmatprep.subr.mxu0 0.0
    %2040 = vmatpush1.msra.mxu0 0.0
    %2041 = vmatprep.subr.mxu0 0.0
    %2042 = vmatpush1.msra.mxu0 0.0
    %2043 = vmatprep.subr.mxu0 0.0
    %2044 = vmatpush1.msra.mxu0 0.0
    %2045 = vmatprep.subr.mxu0 0.0
    %2046 = vmatpush1.msra.mxu0 0.0
    %2047 = vmatprep.subr.mxu0 0.0
    %2048 = vmatpush1.msra.mxu0 0.0
    %2049 = vmatprep.subr.mxu0 0.0
    %2050 = vmatpush1.msra.mxu0 0.0
    %2051 = vmatprep.subr.mxu0 0.0
    %2052 = vmatpush1.msra.mxu0 0.0
    %2053 = vmatprep.subr.mxu0 0.0
    %2054 = vmatpush1.msra.mxu0 0.0
    %2055 = vmatprep.subr.mxu0 0.0
    %2056 = vmatpush1.msra.mxu0 0.0
    %2057 = vmatprep.subr.mxu0 0.0
    %2058 = vmatpush1.msra.mxu0 0.0
    %2059 = vmatprep.subr.mxu0 0.0
    %2060 = vmatpush1.msra.mxu0 0.0
    %2061 = vmatprep.subr.mxu0 0.0
    %2062 = vmatpush1.msra.mxu0 0.0
    %2063 = vmatprep.subr.mxu0 0.0
    %2064 = vmatpush1.msra.mxu0 0.0
    %2065 = vmatprep.subr.mxu0 0.0
    %2066 = vmatpush1.msra.mxu0 0.0
    %2067 = vmatprep.mubr.f32.mxu0 0.0
    %2068 = vmatmul.mubr.f32.gmra.mrb[0].mxu0 %v1992
    %v2069 = vpop.f32.mrb[0].mxu0
    %v2070 = vadd.f32 0.0, %v2069
    %v2071 = vpop.f32.mrb[0].mxu0
    %2072 = vmatprep.mubr.f32.mxu0 0.0
    %2073 = vmatmul.mubr.f32.gmra.mrb[0].mxu0 %v1995
    %v2074 = vpop.f32.mrb[0].mxu0
    %v2075 = vadd.f32 0.0, %v2074
    %v2076 = vpop.f32.mrb[0].mxu0
    %2077 = vmatprep.mubr.f32.mxu0 0.0
    %2078 = vmatmul.mubr.f32.gmra.mrb[0].mxu0 %v1998
    %v2079 = vpop.f32.mrb[0].mxu0
    %v2080 = vadd.f32 0.0, %v2079
    %v2081 = vpop.f32.mrb[0].mxu0
    %2082 = vmatprep.mubr.f32.mxu0 0.0
    %2083 = vmatmul.mubr.f32.gmra.mrb[0].mxu0 %v2001
    %v2084 = vpop.f32.mrb[0].mxu0
    %v2085 = vadd.f32 0.0, %v2084
    %v2086 = vpop.f32.mrb[0].mxu0
    %2087 = vdwg.mxu0
    %2088 = vrot.lane.b32.xlu0 %v254, 104
    %v2089 = vpop.permute.xlu0 %2088
    %2090 = vrot.lane.b32.xlu0 %v259, 104
    %v2091 = vpop.permute.xlu0 %2090
    %2092 = vrot.lane.b32.xlu0 %v264, 104
    %v2093 = vpop.permute.xlu0 %2092
    %2094 = vrot.lane.b32.xlu0 %v269, 104
    %v2095 = vpop.permute.xlu0 %2094
    %2096 = vrot.lane.b32.xlu0 %v154, 72
    %v2097 = vpop.permute.xlu0 %2096
    %2098 = vrot.lane.b32.xlu0 %v159, 72
    %v2099 = vpop.permute.xlu0 %2098
    %v2100 = vsel %vm295, %v2089, 0
    %v2102 = vsel %vm295, %v2091, 0
    %v2104 = vsel %vm295, %v2093, 0
    %v2106 = vsel %vm295, %v2095, 0
    %v2108 = vsel %vm295, %v2097, 0
    %v2110 = vsel %vm295, %v2099, 0
    %2112 = vmatprep.subr.mxu0 0.0
    %2113 = vmatpush1.xpose.msra.mxu0 %v2108
    %2114 = vmatprep.subr.mxu0 0.0
    %2115 = vmatpush1.xpose.msra.mxu0 %v2110
    %2116 = vmatprep.subr.mxu0 0.0
    %2117 = vmatpush1.xpose.msra.mxu0 0.0
    %2118 = vmatprep.subr.mxu0 0.0
    %2119 = vmatpush1.xpose.msra.mxu0 0.0
    %2120 = vmatprep.subr.mxu0 0.0
    %2121 = vmatpush1.xpose.msra.mxu0 0.0
    %2122 = vmatprep.subr.mxu0 0.0
    %2123 = vmatpush1.xpose.msra.mxu0 0.0
    %2124 = vmatprep.subr.mxu0 0.0
    %2125 = vmatpush1.xpose.msra.mxu0 0.0
    %2126 = vmatprep.subr.mxu0 0.0
    %2127 = vmatpush1.xpose.msra.mxu0 0.0
    %2128 = vmatprep.subr.mxu0 0.0
    %2129 = vmatpush1.xpose.msra.mxu0 0.0
    %2130 = vmatprep.subr.mxu0 0.0
    %2131 = vmatpush1.xpose.msra.mxu0 0.0
    %2132 = vmatprep.subr.mxu0 0.0
    %2133 = vmatpush1.xpose.msra.mxu0 0.0
    %2134 = vmatprep.subr.mxu0 0.0
    %2135 = vmatpush1.xpose.msra.mxu0 0.0
    %2136 = vmatprep.subr.mxu0 0.0
    %2137 = vmatpush1.xpose.msra.mxu0 0.0
    %2138 = vmatprep.subr.mxu0 0.0
    %2139 = vmatpush1.xpose.msra.mxu0 0.0
    %2140 = vmatprep.subr.mxu0 0.0
    %2141 = vmatpush1.xpose.msra.mxu0 0.0
    %2142 = vmatprep.subr.mxu0 0.0
    %2143 = vmatpush1.xpose.msra.mxu0 0.0
    %2144 = vmatprep.subr.mxu0 0.0
    %2145 = vmatpush1.xpose.msra.mxu0 0.0
    %2146 = vmatprep.subr.mxu0 0.0
    %2147 = vmatpush1.xpose.msra.mxu0 0.0
    %2148 = vmatprep.subr.mxu0 0.0
    %2149 = vmatpush1.xpose.msra.mxu0 0.0
    %2150 = vmatprep.subr.mxu0 0.0
    %2151 = vmatpush1.xpose.msra.mxu0 0.0
    %2152 = vmatprep.subr.mxu0 0.0
    %2153 = vmatpush1.xpose.msra.mxu0 0.0
    %2154 = vmatprep.subr.mxu0 0.0
    %2155 = vmatpush1.xpose.msra.mxu0 0.0
    %2156 = vmatprep.subr.mxu0 0.0
    %2157 = vmatpush1.xpose.msra.mxu0 0.0
    %2158 = vmatprep.subr.mxu0 0.0
    %2159 = vmatpush1.xpose.msra.mxu0 0.0
    %2160 = vmatprep.subr.mxu0 0.0
    %2161 = vmatpush1.xpose.msra.mxu0 0.0
    %2162 = vmatprep.subr.mxu0 0.0
    %2163 = vmatpush1.xpose.msra.mxu0 0.0
    %2164 = vmatprep.subr.mxu0 0.0
    %2165 = vmatpush1.xpose.msra.mxu0 0.0
    %2166 = vmatprep.subr.mxu0 0.0
    %2167 = vmatpush1.xpose.msra.mxu0 0.0
    %2168 = vmatprep.subr.mxu0 0.0
    %2169 = vmatpush1.xpose.msra.mxu0 0.0
    %2170 = vmatprep.subr.mxu0 0.0
    %2171 = vmatpush1.xpose.msra.mxu0 0.0
    %2172 = vmatprep.subr.mxu0 0.0
    %2173 = vmatpush1.xpose.msra.mxu0 0.0
    %2174 = vmatprep.subr.mxu0 0.0
    %2175 = vmatpush1.xpose.msra.mxu0 0.0
    %2176 = vmatprep.mubr.f32.mxu0 0.0
    %2177 = vmatmul.mubr.f32.gmra.mrb[0].mxu0 %v2100
    %v2178 = vpop.f32.mrb[0].mxu0
    %v2179 = vadd.f32 %v274, %v2178
    %v2180 = vpop.f32.mrb[0].mxu0
    %2181 = vmatprep.mubr.f32.mxu0 0.0
    %2182 = vmatmul.mubr.f32.gmra.mrb[0].mxu0 %v2102
    %v2183 = vpop.f32.mrb[0].mxu0
    %v2184 = vadd.f32 %v275, %v2183
    %v2185 = vpop.f32.mrb[0].mxu0
    %2186 = vmatprep.mubr.f32.mxu0 0.0
    %2187 = vmatmul.mubr.f32.gmra.mrb[0].mxu0 %v2104
    %v2188 = vpop.f32.mrb[0].mxu0
    %v2189 = vadd.f32 %v276, %v2188
    %v2190 = vpop.f32.mrb[0].mxu0
    %2191 = vmatprep.mubr.f32.mxu0 0.0
    %2192 = vmatmul.mubr.f32.gmra.mrb[0].mxu0 %v2106
    %v2193 = vpop.f32.mrb[0].mxu0
    %v2194 = vadd.f32 %v277, %v2193
    %v2195 = vpop.f32.mrb[0].mxu0
    %2196 = vdwg.mxu0
    %v2197 = vsel %vm1192, %v2179, -inf
    %2198 = vmax.xlane.f32.xlu0 %v2197
    %v2199 = vpop.xlane.xlu0 %2198
    %v2200 = vsel %vm1192, %v2184, -inf
    %2201 = vmax.xlane.f32.xlu0 %v2200
    %v2202 = vpop.xlane.xlu0 %2201
    %v2203 = vsel %vm1192, %v2189, -inf
    %2204 = vmax.xlane.f32.xlu0 %v2203
    %v2205 = vpop.xlane.xlu0 %2204
    %v2206 = vsel %vm1192, %v2194, -inf
    %2207 = vmax.xlane.f32.xlu0 %v2206
    %v2208 = vpop.xlane.xlu0 %2207
    %v2209 = vsub.f32 %v2179, %v2199
    %v2210 = vsub.f32 %v2184, %v2202
    %v2211 = vsub.f32 %v2189, %v2205
    %v2212 = vsub.f32 %v2194, %v2208
    %v2213 = vmul.f32 %v2209, 1.442695
    %v2214 = vpow.pop %v2213
    %v2215 = vmul.f32 %v2210, 1.442695
    %v2216 = vpow.pop %v2215
    %v2217 = vmul.f32 %v2211, 1.442695
    %v2218 = vpow.pop %v2217
    %v2219 = vmul.f32 %v2212, 1.442695
    %v2220 = vpow.pop %v2219
    %v2221 = vsel %vm1192, %v2214, 0.0
    %2222 = vadd.xlane.f32.xlu0 %v2221
    %v2223 = vpop.xlane.xlu0 %2222
    %v2224 = vsel %vm1192, %v2216, 0.0
    %2225 = vadd.xlane.f32.xlu0 %v2224
    %v2226 = vpop.xlane.xlu0 %2225
    %v2227 = vsel %vm1192, %v2218, 0.0
    %2228 = vadd.xlane.f32.xlu0 %v2227
    %v2229 = vpop.xlane.xlu0 %2228
    %v2230 = vsel %vm1192, %v2220, 0.0
    %2231 = vadd.xlane.f32.xlu0 %v2230
    %v2232 = vpop.xlane.xlu0 %2231
    %v2233 = vrcp.pop %v2223
    %v2234 = vrcp.pop %v2226
    %v2235 = vrcp.pop %v2229
    %v2236 = vrcp.pop %v2232
    %v2237 = vmul.f32 %v2223, %v2233
    %v2238 = vmul.f32 %v2226, %v2234
    %v2239 = vmul.f32 %v2229, %v2235
    %v2240 = vmul.f32 %v2232, %v2236
    %v2241 = vsub.f32 2.0, %v2237
    %v2242 = vsub.f32 2.0, %v2238
    %v2243 = vsub.f32 2.0, %v2239
    %v2244 = vsub.f32 2.0, %v2240
    %v2245 = vmul.f32 %v2233, %v2241
    %v2246 = vmul.f32 %v2234, %v2242
    %v2247 = vmul.f32 %v2235, %v2243
    %v2248 = vmul.f32 %v2236, %v2244
    %v2249 = vmul.f32 %v2214, %v2245
    %v2250 = vmul.f32 %v2216, %v2246
    %v2251 = vmul.f32 %v2218, %v2247
    %v2252 = vmul.f32 %v2220, %v2248
    %2253 = vrot.lane.b32.xlu0 %v154, 40
    %v2254 = vpop.permute.xlu0 %2253
    %2255 = vrot.lane.b32.xlu0 %v159, 40
    %v2256 = vpop.permute.xlu0 %2255
    %v2260 = vsel %vm1192, %v2249, 0
    %v2263 = vsel %vm1192, %v2250, 0
    %v2266 = vsel %vm1192, %v2251, 0
    %v2269 = vsel %vm1192, %v2252, 0
    %2271 = vmatprep.subr.mxu0 0.0
    %2272 = vmatpush1.msra.mxu0 %v2254
    %2273 = vmatprep.subr.mxu0 0.0
    %2274 = vmatpush1.msra.mxu0 %v2256
    %2275 = vmatprep.subr.mxu0 0.0
    %2276 = vmatpush1.msra.mxu0 0.0
    %2277 = vmatprep.subr.mxu0 0.0
    %2278 = vmatpush1.msra.mxu0 0.0
    %2279 = vmatprep.subr.mxu0 0.0
    %2280 = vmatpush1.msra.mxu0 0.0
    %2281 = vmatprep.subr.mxu0 0.0
    %2282 = vmatpush1.msra.mxu0 0.0
    %2283 = vmatprep.subr.mxu0 0.0
    %2284 = vmatpush1.msra.mxu0 0.0
    %2285 = vmatprep.subr.mxu0 0.0
    %2286 = vmatpush1.msra.mxu0 0.0
    %2287 = vmatprep.subr.mxu0 0.0
    %2288 = vmatpush1.msra.mxu0 0.0
    %2289 = vmatprep.subr.mxu0 0.0
    %2290 = vmatpush1.msra.mxu0 0.0
    %2291 = vmatprep.subr.mxu0 0.0
    %2292 = vmatpush1.msra.mxu0 0.0
    %2293 = vmatprep.subr.mxu0 0.0
    %2294 = vmatpush1.msra.mxu0 0.0
    %2295 = vmatprep.subr.mxu0 0.0
    %2296 = vmatpush1.msra.mxu0 0.0
    %2297 = vmatprep.subr.mxu0 0.0
    %2298 = vmatpush1.msra.mxu0 0.0
    %2299 = vmatprep.subr.mxu0 0.0
    %2300 = vmatpush1.msra.mxu0 0.0
    %2301 = vmatprep.subr.mxu0 0.0
    %2302 = vmatpush1.msra.mxu0 0.0
    %2303 = vmatprep.subr.mxu0 0.0
    %2304 = vmatpush1.msra.mxu0 0.0
    %2305 = vmatprep.subr.mxu0 0.0
    %2306 = vmatpush1.msra.mxu0 0.0
    %2307 = vmatprep.subr.mxu0 0.0
    %2308 = vmatpush1.msra.mxu0 0.0
    %2309 = vmatprep.subr.mxu0 0.0
    %2310 = vmatpush1.msra.mxu0 0.0
    %2311 = vmatprep.subr.mxu0 0.0
    %2312 = vmatpush1.msra.mxu0 0.0
    %2313 = vmatprep.subr.mxu0 0.0
    %2314 = vmatpush1.msra.mxu0 0.0
    %2315 = vmatprep.subr.mxu0 0.0
    %2316 = vmatpush1.msra.mxu0 0.0
    %2317 = vmatprep.subr.mxu0 0.0
    %2318 = vmatpush1.msra.mxu0 0.0
    %2319 = vmatprep.subr.mxu0 0.0
    %2320 = vmatpush1.msra.mxu0 0.0
    %2321 = vmatprep.subr.mxu0 0.0
    %2322 = vmatpush1.msra.mxu0 0.0
    %2323 = vmatprep.subr.mxu0 0.0
    %2324 = vmatpush1.msra.mxu0 0.0
    %2325 = vmatprep.subr.mxu0 0.0
    %2326 = vmatpush1.msra.mxu0 0.0
    %2327 = vmatprep.subr.mxu0 0.0
    %2328 = vmatpush1.msra.mxu0 0.0
    %2329 = vmatprep.subr.mxu0 0.0
    %2330 = vmatpush1.msra.mxu0 0.0
    %2331 = vmatprep.subr.mxu0 0.0
    %2332 = vmatpush1.msra.mxu0 0.0
    %2333 = vmatprep.subr.mxu0 0.0
    %2334 = vmatpush1.msra.mxu0 0.0
    %2335 = vmatprep.mubr.f32.mxu0 0.0
    %2336 = vmatmul.mubr.f32.gmra.mrb[0].mxu0 %v2260
    %v2337 = vpop.f32.mrb[0].mxu0
    %v2338 = vadd.f32 0.0, %v2337
    %v2339 = vpop.f32.mrb[0].mxu0
    %2340 = vmatprep.mubr.f32.mxu0 0.0
    %2341 = vmatmul.mubr.f32.gmra.mrb[0].mxu0 %v2263
    %v2342 = vpop.f32.mrb[0].mxu0
    %v2343 = vadd.f32 0.0, %v2342
    %v2344 = vpop.f32.mrb[0].mxu0
    %2345 = vmatprep.mubr.f32.mxu0 0.0
    %2346 = vmatmul.mubr.f32.gmra.mrb[0].mxu0 %v2266
    %v2347 = vpop.f32.mrb[0].mxu0
    %v2348 = vadd.f32 0.0, %v2347
    %v2349 = vpop.f32.mrb[0].mxu0
    %2350 = vmatprep.mubr.f32.mxu0 0.0
    %2351 = vmatmul.mubr.f32.gmra.mrb[0].mxu0 %v2269
    %v2352 = vpop.f32.mrb[0].mxu0
    %v2353 = vadd.f32 0.0, %v2352
    %v2354 = vpop.f32.mrb[0].mxu0
    %2355 = vdwg.mxu0
    %2360 = vrot.lane.b32.xlu0 %v1802, 8
    %v2361 = vpop.permute.xlu0 %2360
    %2362 = vrot.lane.b32.xlu0 %v1807, 8
    %v2363 = vpop.permute.xlu0 %2362
    %2364 = vrot.lane.b32.xlu0 %v1812, 8
    %v2365 = vpop.permute.xlu0 %2364
    %2366 = vrot.lane.b32.xlu0 %v1817, 8
    %v2367 = vpop.permute.xlu0 %2366
    %2376 = vrot.lane.b32.xlu0 %v2070, 16
    %v2377 = vpop.permute.xlu0 %2376
    %2378 = vrot.lane.b32.xlu0 %v2075, 16
    %v2379 = vpop.permute.xlu0 %2378
    %2380 = vrot.lane.b32.xlu0 %v2080, 16
    %v2381 = vpop.permute.xlu0 %2380
    %2382 = vrot.lane.b32.xlu0 %v2085, 16
    %v2383 = vpop.permute.xlu0 %2382
    %2392 = vrot.lane.b32.xlu0 %v2338, 24
    %v2393 = vpop.permute.xlu0 %2392
    %2394 = vrot.lane.b32.xlu0 %v2343, 24
    %v2395 = vpop.permute.xlu0 %2394
    %2396 = vrot.lane.b32.xlu0 %v2348, 24
    %v2397 = vpop.permute.xlu0 %2396
    %2398 = vrot.lane.b32.xlu0 %v2353, 24
    %v2399 = vpop.permute.xlu0 %2398
    %v2404 = vsel %vm295, %v1534, %v2361
    %v2405 = vsel %vm295, %v1539, %v2363
    %v2406 = vsel %vm295, %v1544, %v2365
    %v2407 = vsel %vm295, %v1549, %v2367
    %v2408 = vsel %vm1192, %v2404, %v2377
    %v2409 = vsel %vm1192, %v2405, %v2379
    %v2410 = vsel %vm1192, %v2406, %v2381
    %v2411 = vsel %vm1192, %v2407, %v2383
    %v2412 = vsel %vm1195, %v2408, %v2393
    %v2413 = vsel %vm1195, %v2409, %v2395
    %v2414 = vsel %vm1195, %v2410, %v2397
    %v2415 = vsel %vm1195, %v2411, %v2399
    %v2417 = vlaneseq
    %v2418 = vshrl.u32 %v2417, 7
    %v2419 = vsub.s32 0, %v2418
    %v2420 = vrot.slane %v1291, %v2419
    %v2423 = vsel %vm80, %v2412, 0
    %v2426 = vsel %vm80, %v2413, 0
    %v2429 = vsel %vm80, %v2414, 0
    %v2432 = vsel %vm80, %v2415, 0
    %2434 = vmatprep.subr.mxu0 0.0
    %2435 = vmatpush1.msra.mxu0 %v1286
    %2436 = vmatprep.subr.mxu0 0.0
    %2437 = vmatpush1.msra.mxu0 %v1287
    %2438 = vmatprep.subr.mxu0 0.0
    %2439 = vmatpush1.msra.mxu0 %v1288
    %2440 = vmatprep.subr.mxu0 0.0
    %2441 = vmatpush1.msra.mxu0 %v1289
    %2442 = vmatprep.subr.mxu0 0.0
    %2443 = vmatpush1.msra.mxu0 0.0
    %2444 = vmatprep.subr.mxu0 0.0
    %2445 = vmatpush1.msra.mxu0 0.0
    %2446 = vmatprep.subr.mxu0 0.0
    %2447 = vmatpush1.msra.mxu0 0.0
    %2448 = vmatprep.subr.mxu0 0.0
    %2449 = vmatpush1.msra.mxu0 0.0
    %2450 = vmatprep.subr.mxu0 0.0
    %2451 = vmatpush1.msra.mxu0 0.0
    %2452 = vmatprep.subr.mxu0 0.0
    %2453 = vmatpush1.msra.mxu0 0.0
    %2454 = vmatprep.subr.mxu0 0.0
    %2455 = vmatpush1.msra.mxu0 0.0
    %2456 = vmatprep.subr.mxu0 0.0
    %2457 = vmatpush1.msra.mxu0 0.0
    %2458 = vmatprep.subr.mxu0 0.0
    %2459 = vmatpush1.msra.mxu0 0.0
    %2460 = vmatprep.subr.mxu0 0.0
    %2461 = vmatpush1.msra.mxu0 0.0
    %2462 = vmatprep.subr.mxu0 0.0
    %2463 = vmatpush1.msra.mxu0 0.0
    %2464 = vmatprep.subr.mxu0 0.0
    %2465 = vmatpush1.msra.mxu0 0.0
    %2466 = vmatprep.subr.mxu0 0.0
    %2467 = vmatpush1.msra.mxu0 0.0
    %2468 = vmatprep.subr.mxu0 0.0
    %2469 = vmatpush1.msra.mxu0 0.0
    %2470 = vmatprep.subr.mxu0 0.0
    %2471 = vmatpush1.msra.mxu0 0.0
    %2472 = vmatprep.subr.mxu0 0.0
    %2473 = vmatpush1.msra.mxu0 0.0
    %2474 = vmatprep.subr.mxu0 0.0
    %2475 = vmatpush1.msra.mxu0 0.0
    %2476 = vmatprep.subr.mxu0 0.0
    %2477 = vmatpush1.msra.mxu0 0.0
    %2478 = vmatprep.subr.mxu0 0.0
    %2479 = vmatpush1.msra.mxu0 0.0
    %2480 = vmatprep.subr.mxu0 0.0
    %2481 = vmatpush1.msra.mxu0 0.0
    %2482 = vmatprep.subr.mxu0 0.0
    %2483 = vmatpush1.msra.mxu0 0.0
    %2484 = vmatprep.subr.mxu0 0.0
    %2485 = vmatpush1.msra.mxu0 0.0
    %2486 = vmatprep.subr.mxu0 0.0
    %2487 = vmatpush1.msra.mxu0 0.0
    %2488 = vmatprep.subr.mxu0 0.0
    %2489 = vmatpush1.msra.mxu0 0.0
    %2490 = vmatprep.subr.mxu0 0.0
    %2491 = vmatpush1.msra.mxu0 0.0
    %2492 = vmatprep.subr.mxu0 0.0
    %2493 = vmatpush1.msra.mxu0 0.0
    %2494 = vmatprep.subr.mxu0 0.0
    %2495 = vmatpush1.msra.mxu0 0.0
    %2496 = vmatprep.subr.mxu0 0.0
    %2497 = vmatpush1.msra.mxu0 0.0
    %2498 = vmatprep.mubr.f32.mxu0 0.0
    %2499 = vmatmul.mubr.f32.gmra.mrb[0].mxu0 %v2423
    %v2500 = vpop.f32.mrb[0].mxu0
    %v2501 = vadd.f32 %v2420, %v2500
    %v2502 = vpop.f32.mrb[0].mxu0
    %2503 = vmatprep.mubr.f32.mxu0 0.0
    %2504 = vmatmul.mubr.f32.gmra.mrb[0].mxu0 %v2426
    %v2505 = vpop.f32.mrb[0].mxu0
    %v2506 = vadd.f32 %v2420, %v2505
    %v2507 = vpop.f32.mrb[0].mxu0
    %2508 = vmatprep.mubr.f32.mxu0 0.0
    %2509 = vmatmul.mubr.f32.gmra.mrb[0].mxu0 %v2429
    %v2510 = vpop.f32.mrb[0].mxu0
    %v2511 = vadd.f32 %v2420, %v2510
    %v2512 = vpop.f32.mrb[0].mxu0
    %2513 = vmatprep.mubr.f32.mxu0 0.0
    %2514 = vmatmul.mubr.f32.gmra.mrb[0].mxu0 %v2432
    %v2515 = vpop.f32.mrb[0].mxu0
    %v2516 = vadd.f32 %v2420, %v2515
    %v2517 = vpop.f32.mrb[0].mxu0
    %2518 = vdwg.mxu0
    %v2519 = vld [vmem:[%s8] sm:$0xff]
    %v2520 = vld [vmem:[%s8 + $0x8] sm:$0xff]
    %v2521 = vld [vmem:[%s8 + $0x10] sm:$0xff]
    %v2522 = vld [vmem:[%s8 + $0x18] sm:$0xff]
    %v2524 = vsel %vm80, %v1277, 0
    %v2527 = vsel %vm80, %v1282, 0
    %2529 = vmatprep.subr.mxu0 0.0
    %2530 = vmatpush1.msra.mxu0 %v2519
    %2531 = vmatprep.subr.mxu0 0.0
    %2532 = vmatpush1.msra.mxu0 %v2520
    %2533 = vmatprep.subr.mxu0 0.0
    %2534 = vmatpush1.msra.mxu0 %v2521
    %2535 = vmatprep.subr.mxu0 0.0
    %2536 = vmatpush1.msra.mxu0 %v2522
    %2537 = vmatprep.subr.mxu0 0.0
    %2538 = vmatpush1.msra.mxu0 0.0
    %2539 = vmatprep.subr.mxu0 0.0
    %2540 = vmatpush1.msra.mxu0 0.0
    %2541 = vmatprep.subr.mxu0 0.0
    %2542 = vmatpush1.msra.mxu0 0.0
    %2543 = vmatprep.subr.mxu0 0.0
    %2544 = vmatpush1.msra.mxu0 0.0
    %2545 = vmatprep.subr.mxu0 0.0
    %2546 = vmatpush1.msra.mxu0 0.0
    %2547 = vmatprep.subr.mxu0 0.0
    %2548 = vmatpush1.msra.mxu0 0.0
    %2549 = vmatprep.subr.mxu0 0.0
    %2550 = vmatpush1.msra.mxu0 0.0
    %2551 = vmatprep.subr.mxu0 0.0
    %2552 = vmatpush1.msra.mxu0 0.0
    %2553 = vmatprep.subr.mxu0 0.0
    %2554 = vmatpush1.msra.mxu0 0.0
    %2555 = vmatprep.subr.mxu0 0.0
    %2556 = vmatpush1.msra.mxu0 0.0
    %2557 = vmatprep.subr.mxu0 0.0
    %2558 = vmatpush1.msra.mxu0 0.0
    %2559 = vmatprep.subr.mxu0 0.0
    %2560 = vmatpush1.msra.mxu0 0.0
    %2561 = vmatprep.subr.mxu0 0.0
    %2562 = vmatpush1.msra.mxu0 0.0
    %2563 = vmatprep.subr.mxu0 0.0
    %2564 = vmatpush1.msra.mxu0 0.0
    %2565 = vmatprep.subr.mxu0 0.0
    %2566 = vmatpush1.msra.mxu0 0.0
    %2567 = vmatprep.subr.mxu0 0.0
    %2568 = vmatpush1.msra.mxu0 0.0
    %2569 = vmatprep.subr.mxu0 0.0
    %2570 = vmatpush1.msra.mxu0 0.0
    %2571 = vmatprep.subr.mxu0 0.0
    %2572 = vmatpush1.msra.mxu0 0.0
    %2573 = vmatprep.subr.mxu0 0.0
    %2574 = vmatpush1.msra.mxu0 0.0
    %2575 = vmatprep.subr.mxu0 0.0
    %2576 = vmatpush1.msra.mxu0 0.0
    %2577 = vmatprep.subr.mxu0 0.0
    %2578 = vmatpush1.msra.mxu0 0.0
    %2579 = vmatprep.subr.mxu0 0.0
    %2580 = vmatpush1.msra.mxu0 0.0
    %2581 = vmatprep.subr.mxu0 0.0
    %2582 = vmatpush1.msra.mxu0 0.0
    %2583 = vmatprep.subr.mxu0 0.0
    %2584 = vmatpush1.msra.mxu0 0.0
    %2585 = vmatprep.subr.mxu0 0.0
    %2586 = vmatpush1.msra.mxu0 0.0
    %2587 = vmatprep.subr.mxu0 0.0
    %2588 = vmatpush1.msra.mxu0 0.0
    %2589 = vmatprep.subr.mxu0 0.0
    %2590 = vmatpush1.msra.mxu0 0.0
    %2591 = vmatprep.subr.mxu0 0.0
    %2592 = vmatpush1.msra.mxu0 0.0
    %2593 = vmatprep.mubr.f32.mxu0 0.0
    %2594 = vmatmul.mubr.f32.gmra.mrb[0].mxu0 %v2524
    %v2595 = vpop.f32.mrb[0].mxu0
    %v2596 = vadd.f32 0.0, %v2595
    %v2597 = vpop.f32.mrb[0].mxu0
    %2598 = vmatprep.mubr.f32.mxu0 0.0
    %2599 = vmatmul.mubr.f32.gmra.mrb[0].mxu0 %v2527
    %v2600 = vpop.f32.mrb[0].mxu0
    %v2601 = vadd.f32 0.0, %v2600
    %v2602 = vpop.f32.mrb[0].mxu0
    %2603 = vdwg.mxu0
    %v2604 = vadd.f32 %v63, %v2596
    %v2605 = vadd.f32 %v64, %v2601
    %v2606 = vld [vmem:[%s9] sm:$0x1]
    %v2608 = vlaneseq
    %v2609 = vshrl.u32 %v2608, 7
    %v2610 = vsub.s32 0, %v2609
    %v2611 = vrot.slane %v2606, %v2610
    %v2613 = vadd.f32 %v2604, %v2611
    %v2614 = vadd.f32 %v2605, %v2611
    %v2615 = vld [vmem:[%s10] sm:$0x1]
    %v2616 = vld [vmem:[%s11] sm:$0x1]
    %v2617 = vsel %vm80, %v2613, 0.0
    %2618 = vadd.xlane.f32.xlu0 %v2617
    %v2619 = vpop.xlane.xlu0 %2618
    %v2620 = vsel %vm80, %v2614, 0.0
    %2621 = vadd.xlane.f32.xlu0 %v2620
    %v2622 = vpop.xlane.xlu0 %2621
    %v2623 = vrcp.pop 32.0
    %v2624 = vmul.f32 %v2619, %v2623
    %v2625 = vmul.f32 %v2622, %v2623
    %v2626 = vsub.f32 %v2613, %v2624
    %v2627 = vsub.f32 %v2614, %v2625
    %v2628 = vmul.f32 %v2626, %v2626
    %v2629 = vmul.f32 %v2627, %v2627
    %v2630 = vsel %vm80, %v2628, 0.0
    %2631 = vadd.xlane.f32.xlu0 %v2630
    %v2632 = vpop.xlane.xlu0 %2631
    %v2633 = vsel %vm80, %v2629, 0.0
    %2634 = vadd.xlane.f32.xlu0 %v2633
    %v2635 = vpop.xlane.xlu0 %2634
    %v2636 = vmul.f32 %v2632, %v2623
    %v2637 = vmul.f32 %v2635, %v2623
    %v2638 = vadd.f32 %v2636, 1e-05
    %v2639 = vadd.f32 %v2637, 1e-05
    %v2640 = vrsqrt.pop %v2638
    %v2641 = vrsqrt.pop %v2639
    %v2642 = vmul.f32 %v2626, %v2640
    %v2643 = vmul.f32 %v2627, %v2641
    %v2645 = vlaneseq
    %v2646 = vshrl.u32 %v2645, 7
    %v2647 = vsub.s32 0, %v2646
    %v2648 = vrot.slane %v2615, %v2647
    %v2650 = vmul.f32 %v2642, %v2648
    %v2651 = vmul.f32 %v2643, %v2648
    %v2653 = vlaneseq
    %v2654 = vshrl.u32 %v2653, 7
    %v2655 = vsub.s32 0, %v2654
    %v2656 = vrot.slane %v2616, %v2655
    %v2658 = vadd.f32 %v2650, %v2656
    %v2659 = vadd.f32 %v2651, %v2656
    %s2660 = scalar_lea.vmem %s8, 32
    %v2661 = vld [vmem:[%s2660] sm:$0xff]
    %v2662 = vld [vmem:[%s2660 + $0x8] sm:$0xff]
    %v2663 = vld [vmem:[%s2660 + $0x10] sm:$0xff]
    %v2664 = vld [vmem:[%s2660 + $0x18] sm:$0xff]
    %v2666 = vsel %vm80, %v2501, 0
    %v2669 = vsel %vm80, %v2506, 0
    %v2672 = vsel %vm80, %v2511, 0
    %v2675 = vsel %vm80, %v2516, 0
    %2677 = vmatprep.subr.mxu0 0.0
    %2678 = vmatpush1.msra.mxu0 %v2661
    %2679 = vmatprep.subr.mxu0 0.0
    %2680 = vmatpush1.msra.mxu0 %v2662
    %2681 = vmatprep.subr.mxu0 0.0
    %2682 = vmatpush1.msra.mxu0 %v2663
    %2683 = vmatprep.subr.mxu0 0.0
    %2684 = vmatpush1.msra.mxu0 %v2664
    %2685 = vmatprep.subr.mxu0 0.0
    %2686 = vmatpush1.msra.mxu0 0.0
    %2687 = vmatprep.subr.mxu0 0.0
    %2688 = vmatpush1.msra.mxu0 0.0
    %2689 = vmatprep.subr.mxu0 0.0
    %2690 = vmatpush1.msra.mxu0 0.0
    %2691 = vmatprep.subr.mxu0 0.0
    %2692 = vmatpush1.msra.mxu0 0.0
    %2693 = vmatprep.subr.mxu0 0.0
    %2694 = vmatpush1.msra.mxu0 0.0
    %2695 = vmatprep.subr.mxu0 0.0
    %2696 = vmatpush1.msra.mxu0 0.0
    %2697 = vmatprep.subr.mxu0 0.0
    %2698 = vmatpush1.msra.mxu0 0.0
    %2699 = vmatprep.subr.mxu0 0.0
    %2700 = vmatpush1.msra.mxu0 0.0
    %2701 = vmatprep.subr.mxu0 0.0
    %2702 = vmatpush1.msra.mxu0 0.0
    %2703 = vmatprep.subr.mxu0 0.0
    %2704 = vmatpush1.msra.mxu0 0.0
    %2705 = vmatprep.subr.mxu0 0.0
    %2706 = vmatpush1.msra.mxu0 0.0
    %2707 = vmatprep.subr.mxu0 0.0
    %2708 = vmatpush1.msra.mxu0 0.0
    %2709 = vmatprep.subr.mxu0 0.0
    %2710 = vmatpush1.msra.mxu0 0.0
    %2711 = vmatprep.subr.mxu0 0.0
    %2712 = vmatpush1.msra.mxu0 0.0
    %2713 = vmatprep.subr.mxu0 0.0
    %2714 = vmatpush1.msra.mxu0 0.0
    %2715 = vmatprep.subr.mxu0 0.0
    %2716 = vmatpush1.msra.mxu0 0.0
    %2717 = vmatprep.subr.mxu0 0.0
    %2718 = vmatpush1.msra.mxu0 0.0
    %2719 = vmatprep.subr.mxu0 0.0
    %2720 = vmatpush1.msra.mxu0 0.0
    %2721 = vmatprep.subr.mxu0 0.0
    %2722 = vmatpush1.msra.mxu0 0.0
    %2723 = vmatprep.subr.mxu0 0.0
    %2724 = vmatpush1.msra.mxu0 0.0
    %2725 = vmatprep.subr.mxu0 0.0
    %2726 = vmatpush1.msra.mxu0 0.0
    %2727 = vmatprep.subr.mxu0 0.0
    %2728 = vmatpush1.msra.mxu0 0.0
    %2729 = vmatprep.subr.mxu0 0.0
    %2730 = vmatpush1.msra.mxu0 0.0
    %2731 = vmatprep.subr.mxu0 0.0
    %2732 = vmatpush1.msra.mxu0 0.0
    %2733 = vmatprep.subr.mxu0 0.0
    %2734 = vmatpush1.msra.mxu0 0.0
    %2735 = vmatprep.subr.mxu0 0.0
    %2736 = vmatpush1.msra.mxu0 0.0
    %2737 = vmatprep.subr.mxu0 0.0
    %2738 = vmatpush1.msra.mxu0 0.0
    %2739 = vmatprep.subr.mxu0 0.0
    %2740 = vmatpush1.msra.mxu0 0.0
    %2741 = vmatprep.mubr.f32.mxu0 0.0
    %2742 = vmatmul.mubr.f32.gmra.mrb[0].mxu0 %v2666
    %v2743 = vpop.f32.mrb[0].mxu0
    %v2744 = vadd.f32 0.0, %v2743
    %v2745 = vpop.f32.mrb[0].mxu0
    %2746 = vmatprep.mubr.f32.mxu0 0.0
    %2747 = vmatmul.mubr.f32.gmra.mrb[0].mxu0 %v2669
    %v2748 = vpop.f32.mrb[0].mxu0
    %v2749 = vadd.f32 0.0, %v2748
    %v2750 = vpop.f32.mrb[0].mxu0
    %2751 = vmatprep.mubr.f32.mxu0 0.0
    %2752 = vmatmul.mubr.f32.gmra.mrb[0].mxu0 %v2672
    %v2753 = vpop.f32.mrb[0].mxu0
    %v2754 = vadd.f32 0.0, %v2753
    %v2755 = vpop.f32.mrb[0].mxu0
    %2756 = vmatprep.mubr.f32.mxu0 0.0
    %2757 = vmatmul.mubr.f32.gmra.mrb[0].mxu0 %v2675
    %v2758 = vpop.f32.mrb[0].mxu0
    %v2759 = vadd.f32 0.0, %v2758
    %v2760 = vpop.f32.mrb[0].mxu0
    %2761 = vdwg.mxu0
    %v2762 = vadd.f32 %v65, %v2744
    %v2763 = vadd.f32 %v66, %v2749
    %v2764 = vadd.f32 %v67, %v2754
    %v2765 = vadd.f32 %v68, %v2759
    %s2766 = scalar_lea.vmem %s9, 1
    %v2767 = vld [vmem:[%s2766] sm:$0x1]
    %v2769 = vlaneseq
    %v2770 = vshrl.u32 %v2769, 7
    %v2771 = vsub.s32 0, %v2770
    %v2772 = vrot.slane %v2767, %v2771
    %v2774 = vadd.f32 %v2762, %v2772
    %v2775 = vadd.f32 %v2763, %v2772
    %v2776 = vadd.f32 %v2764, %v2772
    %v2777 = vadd.f32 %v2765, %v2772
    %s2778 = scalar_lea.vmem %s10, 1
    %v2779 = vld [vmem:[%s2778] sm:$0x1]
    %s2780 = scalar_lea.vmem %s11, 1
    %v2781 = vld [vmem:[%s2780] sm:$0x1]
    %v2782 = vsel %vm80, %v2774, 0.0
    %2783 = vadd.xlane.f32.xlu0 %v2782
    %v2784 = vpop.xlane.xlu0 %2783
    %v2785 = vsel %vm80, %v2775, 0.0
    %2786 = vadd.xlane.f32.xlu0 %v2785
    %v2787 = vpop.xlane.xlu0 %2786
    %v2788 = vsel %vm80, %v2776, 0.0
    %2789 = vadd.xlane.f32.xlu0 %v2788
    %v2790 = vpop.xlane.xlu0 %2789
    %v2791 = vsel %vm80, %v2777, 0.0
    %2792 = vadd.xlane.f32.xlu0 %v2791
    %v2793 = vpop.xlane.xlu0 %2792
    %v2794 = vmul.f32 %v2784, %v2623
    %v2795 = vmul.f32 %v2787, %v2623
    %v2796 = vmul.f32 %v2790, %v2623
    %v2797 = vmul.f32 %v2793, %v2623
    %v2798 = vsub.f32 %v2774, %v2794
    %v2799 = vsub.f32 %v2775, %v2795
    %v2800 = vsub.f32 %v2776, %v2796
    %v2801 = vsub.f32 %v2777, %v2797
    %v2802 = vmul.f32 %v2798, %v2798
    %v2803 = vmul.f32 %v2799, %v2799
    %v2804 = vmul.f32 %v2800, %v2800
    %v2805 = vmul.f32 %v2801, %v2801
    %v2806 = vsel %vm80, %v2802, 0.0
    %2807 = vadd.xlane.f32.xlu0 %v2806
    %v2808 = vpop.xlane.xlu0 %2807
    %v2809 = vsel %vm80, %v2803, 0.0
    %2810 = vadd.xlane.f32.xlu0 %v2809
    %v2811 = vpop.xlane.xlu0 %2810
    %v2812 = vsel %vm80, %v2804, 0.0
    %2813 = vadd.xlane.f32.xlu0 %v2812
    %v2814 = vpop.xlane.xlu0 %2813
    %v2815 = vsel %vm80, %v2805, 0.0
    %2816 = vadd.xlane.f32.xlu0 %v2815
    %v2817 = vpop.xlane.xlu0 %2816
    %v2818 = vmul.f32 %v2808, %v2623
    %v2819 = vmul.f32 %v2811, %v2623
    %v2820 = vmul.f32 %v2814, %v2623
    %v2821 = vmul.f32 %v2817, %v2623
    %v2822 = vadd.f32 %v2818, 1e-05
    %v2823 = vadd.f32 %v2819, 1e-05
    %v2824 = vadd.f32 %v2820, 1e-05
    %v2825 = vadd.f32 %v2821, 1e-05
    %v2826 = vrsqrt.pop %v2822
    %v2827 = vrsqrt.pop %v2823
    %v2828 = vrsqrt.pop %v2824
    %v2829 = vrsqrt.pop %v2825
    %v2830 = vmul.f32 %v2798, %v2826
    %v2831 = vmul.f32 %v2799, %v2827
    %v2832 = vmul.f32 %v2800, %v2828
    %v2833 = vmul.f32 %v2801, %v2829
    %v2835 = vlaneseq
    %v2836 = vshrl.u32 %v2835, 7
    %v2837 = vsub.s32 0, %v2836
    %v2838 = vrot.slane %v2779, %v2837
    %v2840 = vmul.f32 %v2830, %v2838
    %v2841 = vmul.f32 %v2831, %v2838
    %v2842 = vmul.f32 %v2832, %v2838
    %v2843 = vmul.f32 %v2833, %v2838
    %v2845 = vlaneseq
    %v2846 = vshrl.u32 %v2845, 7
    %v2847 = vsub.s32 0, %v2846
    %v2848 = vrot.slane %v2781, %v2847
    %v2850 = vadd.f32 %v2840, %v2848
    %v2851 = vadd.f32 %v2841, %v2848
    %v2852 = vadd.f32 %v2842, %v2848
    %v2853 = vadd.f32 %v2843, %v2848
    %v2854 = vld [vmem:[%s12] sm:$0xff]
    %v2855 = vld [vmem:[%s12 + $0x8] sm:$0xff]
    %v2856 = vld [vmem:[%s12 + $0x10] sm:$0xff]
    %v2857 = vld [vmem:[%s12 + $0x18] sm:$0xff]
    %v2858 = vld [vmem:[%s13] sm:$0x1]
    %v2860 = vlaneseq
    %v2861 = vshrl.u32 %v2860, 7
    %v2862 = vsub.s32 0, %v2861
    %v2863 = vrot.slane %v2858, %v2862
    %v2866 = vsel %vm80, %v2658, 0
    %v2869 = vsel %vm80, %v2659, 0
    %2871 = vmatprep.subr.mxu0 0.0
    %2872 = vmatpush1.msra.mxu0 %v2854
    %2873 = vmatprep.subr.mxu0 0.0
    %2874 = vmatpush1.msra.mxu0 %v2855
    %2875 = vmatprep.subr.mxu0 0.0
    %2876 = vmatpush1.msra.mxu0 %v2856
    %2877 = vmatprep.subr.mxu0 0.0
    %2878 = vmatpush1.msra.mxu0 %v2857
    %2879 = vmatprep.subr.mxu0 0.0
    %2880 = vmatpush1.msra.mxu0 0.0
    %2881 = vmatprep.subr.mxu0 0.0
    %2882 = vmatpush1.msra.mxu0 0.0
    %2883 = vmatprep.subr.mxu0 0.0
    %2884 = vmatpush1.msra.mxu0 0.0
    %2885 = vmatprep.subr.mxu0 0.0
    %2886 = vmatpush1.msra.mxu0 0.0
    %2887 = vmatprep.subr.mxu0 0.0
    %2888 = vmatpush1.msra.mxu0 0.0
    %2889 = vmatprep.subr.mxu0 0.0
    %2890 = vmatpush1.msra.mxu0 0.0
    %2891 = vmatprep.subr.mxu0 0.0
    %2892 = vmatpush1.msra.mxu0 0.0
    %2893 = vmatprep.subr.mxu0 0.0
    %2894 = vmatpush1.msra.mxu0 0.0
    %2895 = vmatprep.subr.mxu0 0.0
    %2896 = vmatpush1.msra.mxu0 0.0
    %2897 = vmatprep.subr.mxu0 0.0
    %2898 = vmatpush1.msra.mxu0 0.0
    %2899 = vmatprep.subr.mxu0 0.0
    %2900 = vmatpush1.msra.mxu0 0.0
    %2901 = vmatprep.subr.mxu0 0.0
    %2902 = vmatpush1.msra.mxu0 0.0
    %2903 = vmatprep.subr.mxu0 0.0
    %2904 = vmatpush1.msra.mxu0 0.0
    %2905 = vmatprep.subr.mxu0 0.0
    %2906 = vmatpush1.msra.mxu0 0.0
    %2907 = vmatprep.subr.mxu0 0.0
    %2908 = vmatpush1.msra.mxu0 0.0
    %2909 = vmatprep.subr.mxu0 0.0
    %2910 = vmatpush1.msra.mxu0 0.0
    %2911 = vmatprep.subr.mxu0 0.0
    %2912 = vmatpush1.msra.mxu0 0.0
    %2913 = vmatprep.subr.mxu0 0.0
    %2914 = vmatpush1.msra.mxu0 0.0
    %2915 = vmatprep.subr.mxu0 0.0
    %2916 = vmatpush1.msra.mxu0 0.0
    %2917 = vmatprep.subr.mxu0 0.0
    %2918 = vmatpush1.msra.mxu0 0.0
    %2919 = vmatprep.subr.mxu0 0.0
    %2920 = vmatpush1.msra.mxu0 0.0
    %2921 = vmatprep.subr.mxu0 0.0
    %2922 = vmatpush1.msra.mxu0 0.0
    %2923 = vmatprep.subr.mxu0 0.0
    %2924 = vmatpush1.msra.mxu0 0.0
    %2925 = vmatprep.subr.mxu0 0.0
    %2926 = vmatpush1.msra.mxu0 0.0
    %2927 = vmatprep.subr.mxu0 0.0
    %2928 = vmatpush1.msra.mxu0 0.0
    %2929 = vmatprep.subr.mxu0 0.0
    %2930 = vmatpush1.msra.mxu0 0.0
    %2931 = vmatprep.subr.mxu0 0.0
    %2932 = vmatpush1.msra.mxu0 0.0
    %2933 = vmatprep.subr.mxu0 0.0
    %2934 = vmatpush1.msra.mxu0 0.0
    %2935 = vmatprep.mubr.f32.mxu0 0.0
    %2936 = vmatmul.mubr.f32.gmra.mrb[0].mxu0 %v2866
    %v2937 = vpop.f32.mrb[0].mxu0
    %v2938 = vadd.f32 %v2863, %v2937
    %v2939 = vpop.f32.mrb[0].mxu0
    %2940 = vmatprep.mubr.f32.mxu0 0.0
    %2941 = vmatmul.mubr.f32.gmra.mrb[0].mxu0 %v2869
    %v2942 = vpop.f32.mrb[0].mxu0
    %v2943 = vadd.f32 %v2863, %v2942
    %v2944 = vpop.f32.mrb[0].mxu0
    %2945 = vdwg.mxu0
    %v2946 = vmul.f32 %v2938, 0.5
    %v2947 = vmul.f32 %v2943, 0.5
    %v2948 = vmul.f32 %v2938, 0.70710677
    %v2949 = vmul.f32 %v2943, 0.70710677
    %vm2950 = vcmp.ge.f32.partialorder %v2948, 0.0
    %vm2951 = vcmp.ge.f32.partialorder %v2949, 0.0
    %v2952 = vsel %vm2950, 1.0, -1.0
    %v2953 = vsel %vm2951, 1.0, -1.0
    %v2954 = vand.u32 2147483647, %v2948
    %v2955 = vand.u32 2147483647, %v2949
    %v2956 = vmul.f32 %v2954, 0.3275911
    %v2957 = vmul.f32 %v2955, 0.3275911
    %v2958 = vadd.f32 %v2956, 1.0
    %v2959 = vadd.f32 %v2957, 1.0
    %v2960 = vrcp.pop %v2958
    %v2961 = vrcp.pop %v2959
    %v2962 = vmul.f32 %v2958, %v2960
    %v2963 = vmul.f32 %v2959, %v2961
    %v2964 = vsub.f32 2.0, %v2962
    %v2965 = vsub.f32 2.0, %v2963
    %v2966 = vmul.f32 %v2960, %v2964
    %v2967 = vmul.f32 %v2961, %v2965
    %v2968 = vmul.f32 %v2966, 1.0614054
    %v2969 = vmul.f32 %v2967, 1.0614054
    %v2970 = vadd.f32 %v2968, -1.4531521
    %v2971 = vadd.f32 %v2969, -1.4531521
    %v2972 = vmul.f32 %v2970, %v2966
    %v2973 = vmul.f32 %v2971, %v2967
    %v2974 = vadd.f32 %v2972, 1.4214138
    %v2975 = vadd.f32 %v2973, 1.4214138
    %v2976 = vmul.f32 %v2974, %v2966
    %v2977 = vmul.f32 %v2975, %v2967
    %v2978 = vadd.f32 %v2976, -0.28449672
    %v2979 = vadd.f32 %v2977, -0.28449672
    %v2980 = vmul.f32 %v2978, %v2966
    %v2981 = vmul.f32 %v2979, %v2967
    %v2982 = vadd.f32 %v2980, 0.2548296
    %v2983 = vadd.f32 %v2981, 0.2548296
    %v2984 = vmul.f32 %v2982, %v2966
    %v2985 = vmul.f32 %v2983, %v2967
    %v2986 = vsub.f32 0.0, %v2954
    %v2987 = vsub.f32 0.0, %v2955
    %v2988 = vmul.f32 %v2986, %v2954
    %v2989 = vmul.f32 %v2987, %v2955
    %v2990 = vmul.f32 %v2988, 1.442695
    %v2991 = vpow.pop %v2990
    %v2992 = vmul.f32 %v2989, 1.442695
    %v2993 = vpow.pop %v2992
    %v2994 = vmul.f32 %v2984, %v2991
    %v2995 = vmul.f32 %v2985, %v2993
    %v2996 = vsub.f32 1.0, %v2994
    %v2997 = vsub.f32 1.0, %v2995
    %v2998 = vmul.f32 %v2952, %v2996
    %v2999 = vmul.f32 %v2953, %v2997
    %v3000 = vadd.f32 %v2998, 1.0
    %v3001 = vadd.f32 %v2999, 1.0
    %v3002 = vmul.f32 %v2946, %v3000
    %v3003 = vmul.f32 %v2947, %v3001
    %s3004 = scalar_lea.vmem %s12, 32
    %v3005 = vld [vmem:[%s3004] sm:$0xff]
    %v3006 = vld [vmem:[%s3004 + $0x8] sm:$0xff]
    %v3007 = vld [vmem:[%s3004 + $0x10] sm:$0xff]
    %v3008 = vld [vmem:[%s3004 + $0x18] sm:$0xff]
    %s3009 = scalar_lea.vmem %s13, 1
    %v3010 = vld [vmem:[%s3009] sm:$0x1]
    %v3012 = vlaneseq
    %v3013 = vshrl.u32 %v3012, 7
    %v3014 = vsub.s32 0, %v3013
    %v3015 = vrot.slane %v3010, %v3014
    %v3018 = vsel %vm80, %v2850, 0
    %v3021 = vsel %vm80, %v2851, 0
    %v3024 = vsel %vm80, %v2852, 0
    %v3027 = vsel %vm80, %v2853, 0
    %3029 = vmatprep.subr.mxu0 0.0
    %3030 = vmatpush1.msra.mxu0 %v3005
    %3031 = vmatprep.subr.mxu0 0.0
    %3032 = vmatpush1.msra.mxu0 %v3006
    %3033 = vmatprep.subr.mxu0 0.0
    %3034 = vmatpush1.msra.mxu0 %v3007
    %3035 = vmatprep.subr.mxu0 0.0
    %3036 = vmatpush1.msra.mxu0 %v3008
    %3037 = vmatprep.subr.mxu0 0.0
    %3038 = vmatpush1.msra.mxu0 0.0
    %3039 = vmatprep.subr.mxu0 0.0
    %3040 = vmatpush1.msra.mxu0 0.0
    %3041 = vmatprep.subr.mxu0 0.0
    %3042 = vmatpush1.msra.mxu0 0.0
    %3043 = vmatprep.subr.mxu0 0.0
    %3044 = vmatpush1.msra.mxu0 0.0
    %3045 = vmatprep.subr.mxu0 0.0
    %3046 = vmatpush1.msra.mxu0 0.0
    %3047 = vmatprep.subr.mxu0 0.0
    %3048 = vmatpush1.msra.mxu0 0.0
    %3049 = vmatprep.subr.mxu0 0.0
    %3050 = vmatpush1.msra.mxu0 0.0
    %3051 = vmatprep.subr.mxu0 0.0
    %3052 = vmatpush1.msra.mxu0 0.0
    %3053 = vmatprep.subr.mxu0 0.0
    %3054 = vmatpush1.msra.mxu0 0.0
    %3055 = vmatprep.subr.mxu0 0.0
    %3056 = vmatpush1.msra.mxu0 0.0
    %3057 = vmatprep.subr.mxu0 0.0
    %3058 = vmatpush1.msra.mxu0 0.0
    %3059 = vmatprep.subr.mxu0 0.0
    %3060 = vmatpush1.msra.mxu0 0.0
    %3061 = vmatprep.subr.mxu0 0.0
    %3062 = vmatpush1.msra.mxu0 0.0
    %3063 = vmatprep.subr.mxu0 0.0
    %3064 = vmatpush1.msra.mxu0 0.0
    %3065 = vmatprep.subr.mxu0 0.0
    %3066 = vmatpush1.msra.mxu0 0.0
    %3067 = vmatprep.subr.mxu0 0.0
    %3068 = vmatpush1.msra.mxu0 0.0
    %3069 = vmatprep.subr.mxu0 0.0
    %3070 = vmatpush1.msra.mxu0 0.0
    %3071 = vmatprep.subr.mxu0 0.0
    %3072 = vmatpush1.msra.mxu0 0.0
    %3073 = vmatprep.subr.mxu0 0.0
    %3074 = vmatpush1.msra.mxu0 0.0
    %3075 = vmatprep.subr.mxu0 0.0
    %3076 = vmatpush1.msra.mxu0 0.0
    %3077 = vmatprep.subr.mxu0 0.0
    %3078 = vmatpush1.msra.mxu0 0.0
    %3079 = vmatprep.subr.mxu0 0.0
    %3080 = vmatpush1.msra.mxu0 0.0
    %3081 = vmatprep.subr.mxu0 0.0
    %3082 = vmatpush1.msra.mxu0 0.0
    %3083 = vmatprep.subr.mxu0 0.0
    %3084 = vmatpush1.msra.mxu0 0.0
    %3085 = vmatprep.subr.mxu0 0.0
    %3086 = vmatpush1.msra.mxu0 0.0
    %3087 = vmatprep.subr.mxu0 0.0
    %3088 = vmatpush1.msra.mxu0 0.0
    %3089 = vmatprep.subr.mxu0 0.0
    %3090 = vmatpush1.msra.mxu0 0.0
    %3091 = vmatprep.subr.mxu0 0.0
    %3092 = vmatpush1.msra.mxu0 0.0
    %3093 = vmatprep.mubr.f32.mxu0 0.0
    %3094 = vmatmul.mubr.f32.gmra.mrb[0].mxu0 %v3018
    %v3095 = vpop.f32.mrb[0].mxu0
    %v3096 = vadd.f32 %v3015, %v3095
    %v3097 = vpop.f32.mrb[0].mxu0
    %3098 = vmatprep.mubr.f32.mxu0 0.0
    %3099 = vmatmul.mubr.f32.gmra.mrb[0].mxu0 %v3021
    %v3100 = vpop.f32.mrb[0].mxu0
    %v3101 = vadd.f32 %v3015, %v3100
    %v3102 = vpop.f32.mrb[0].mxu0
    %3103 = vmatprep.mubr.f32.mxu0 0.0
    %3104 = vmatmul.mubr.f32.gmra.mrb[0].mxu0 %v3024
    %v3105 = vpop.f32.mrb[0].mxu0
    %v3106 = vadd.f32 %v3015, %v3105
    %v3107 = vpop.f32.mrb[0].mxu0
    %3108 = vmatprep.mubr.f32.mxu0 0.0
    %3109 = vmatmul.mubr.f32.gmra.mrb[0].mxu0 %v3027
    %v3110 = vpop.f32.mrb[0].mxu0
    %v3111 = vadd.f32 %v3015, %v3110
    %v3112 = vpop.f32.mrb[0].mxu0
    %3113 = vdwg.mxu0
    %v3114 = vmul.f32 %v3096, 0.5
    %v3115 = vmul.f32 %v3101, 0.5
    %v3116 = vmul.f32 %v3106, 0.5
    %v3117 = vmul.f32 %v3111, 0.5
    %v3118 = vmul.f32 %v3096, 0.70710677
    %v3119 = vmul.f32 %v3101, 0.70710677
    %v3120 = vmul.f32 %v3106, 0.70710677
    %v3121 = vmul.f32 %v3111, 0.70710677
    %vm3122 = vcmp.ge.f32.partialorder %v3118, 0.0
    %vm3123 = vcmp.ge.f32.partialorder %v3119, 0.0
    %vm3124 = vcmp.ge.f32.partialorder %v3120, 0.0
    %vm3125 = vcmp.ge.f32.partialorder %v3121, 0.0
    %v3126 = vsel %vm3122, 1.0, -1.0
    %v3127 = vsel %vm3123, 1.0, -1.0
    %v3128 = vsel %vm3124, 1.0, -1.0
    %v3129 = vsel %vm3125, 1.0, -1.0
    %v3130 = vand.u32 2147483647, %v3118
    %v3131 = vand.u32 2147483647, %v3119
    %v3132 = vand.u32 2147483647, %v3120
    %v3133 = vand.u32 2147483647, %v3121
    %v3134 = vmul.f32 %v3130, 0.3275911
    %v3135 = vmul.f32 %v3131, 0.3275911
    %v3136 = vmul.f32 %v3132, 0.3275911
    %v3137 = vmul.f32 %v3133, 0.3275911
    %v3138 = vadd.f32 %v3134, 1.0
    %v3139 = vadd.f32 %v3135, 1.0
    %v3140 = vadd.f32 %v3136, 1.0
    %v3141 = vadd.f32 %v3137, 1.0
    %v3142 = vrcp.pop %v3138
    %v3143 = vrcp.pop %v3139
    %v3144 = vrcp.pop %v3140
    %v3145 = vrcp.pop %v3141
    %v3146 = vmul.f32 %v3138, %v3142
    %v3147 = vmul.f32 %v3139, %v3143
    %v3148 = vmul.f32 %v3140, %v3144
    %v3149 = vmul.f32 %v3141, %v3145
    %v3150 = vsub.f32 2.0, %v3146
    %v3151 = vsub.f32 2.0, %v3147
    %v3152 = vsub.f32 2.0, %v3148
    %v3153 = vsub.f32 2.0, %v3149
    %v3154 = vmul.f32 %v3142, %v3150
    %v3155 = vmul.f32 %v3143, %v3151
    %v3156 = vmul.f32 %v3144, %v3152
    %v3157 = vmul.f32 %v3145, %v3153
    %v3158 = vmul.f32 %v3154, 1.0614054
    %v3159 = vmul.f32 %v3155, 1.0614054
    %v3160 = vmul.f32 %v3156, 1.0614054
    %v3161 = vmul.f32 %v3157, 1.0614054
    %v3162 = vadd.f32 %v3158, -1.4531521
    %v3163 = vadd.f32 %v3159, -1.4531521
    %v3164 = vadd.f32 %v3160, -1.4531521
    %v3165 = vadd.f32 %v3161, -1.4531521
    %v3166 = vmul.f32 %v3162, %v3154
    %v3167 = vmul.f32 %v3163, %v3155
    %v3168 = vmul.f32 %v3164, %v3156
    %v3169 = vmul.f32 %v3165, %v3157
    %v3170 = vadd.f32 %v3166, 1.4214138
    %v3171 = vadd.f32 %v3167, 1.4214138
    %v3172 = vadd.f32 %v3168, 1.4214138
    %v3173 = vadd.f32 %v3169, 1.4214138
    %v3174 = vmul.f32 %v3170, %v3154
    %v3175 = vmul.f32 %v3171, %v3155
    %v3176 = vmul.f32 %v3172, %v3156
    %v3177 = vmul.f32 %v3173, %v3157
    %v3178 = vadd.f32 %v3174, -0.28449672
    %v3179 = vadd.f32 %v3175, -0.28449672
    %v3180 = vadd.f32 %v3176, -0.28449672
    %v3181 = vadd.f32 %v3177, -0.28449672
    %v3182 = vmul.f32 %v3178, %v3154
    %v3183 = vmul.f32 %v3179, %v3155
    %v3184 = vmul.f32 %v3180, %v3156
    %v3185 = vmul.f32 %v3181, %v3157
    %v3186 = vadd.f32 %v3182, 0.2548296
    %v3187 = vadd.f32 %v3183, 0.2548296
    %v3188 = vadd.f32 %v3184, 0.2548296
    %v3189 = vadd.f32 %v3185, 0.2548296
    %v3190 = vmul.f32 %v3186, %v3154
    %v3191 = vmul.f32 %v3187, %v3155
    %v3192 = vmul.f32 %v3188, %v3156
    %v3193 = vmul.f32 %v3189, %v3157
    %v3194 = vsub.f32 0.0, %v3130
    %v3195 = vsub.f32 0.0, %v3131
    %v3196 = vsub.f32 0.0, %v3132
    %v3197 = vsub.f32 0.0, %v3133
    %v3198 = vmul.f32 %v3194, %v3130
    %v3199 = vmul.f32 %v3195, %v3131
    %v3200 = vmul.f32 %v3196, %v3132
    %v3201 = vmul.f32 %v3197, %v3133
    %v3202 = vmul.f32 %v3198, 1.442695
    %v3203 = vpow.pop %v3202
    %v3204 = vmul.f32 %v3199, 1.442695
    %v3205 = vpow.pop %v3204
    %v3206 = vmul.f32 %v3200, 1.442695
    %v3207 = vpow.pop %v3206
    %v3208 = vmul.f32 %v3201, 1.442695
    %v3209 = vpow.pop %v3208
    %v3210 = vmul.f32 %v3190, %v3203
    %v3211 = vmul.f32 %v3191, %v3205
    %v3212 = vmul.f32 %v3192, %v3207
    %v3213 = vmul.f32 %v3193, %v3209
    %v3214 = vsub.f32 1.0, %v3210
    %v3215 = vsub.f32 1.0, %v3211
    %v3216 = vsub.f32 1.0, %v3212
    %v3217 = vsub.f32 1.0, %v3213
    %v3218 = vmul.f32 %v3126, %v3214
    %v3219 = vmul.f32 %v3127, %v3215
    %v3220 = vmul.f32 %v3128, %v3216
    %v3221 = vmul.f32 %v3129, %v3217
    %v3222 = vadd.f32 %v3218, 1.0
    %v3223 = vadd.f32 %v3219, 1.0
    %v3224 = vadd.f32 %v3220, 1.0
    %v3225 = vadd.f32 %v3221, 1.0
    %v3226 = vmul.f32 %v3114, %v3222
    %v3227 = vmul.f32 %v3115, %v3223
    %v3228 = vmul.f32 %v3116, %v3224
    %v3229 = vmul.f32 %v3117, %v3225
    %v3230 = vld [vmem:[%s14] sm:$0xff]
    %v3231 = vld [vmem:[%s14 + $0x8] sm:$0xff]
    %v3232 = vld [vmem:[%s14 + $0x10] sm:$0xff]
    %v3233 = vld [vmem:[%s14 + $0x18] sm:$0xff]
    %v3234 = vld [vmem:[%s14 + $0x20] sm:$0xff]
    %v3235 = vld [vmem:[%s14 + $0x28] sm:$0xff]
    %v3236 = vld [vmem:[%s14 + $0x30] sm:$0xff]
    %v3237 = vld [vmem:[%s14 + $0x38] sm:$0xff]
    %vm3238 = vcmask 523264
    %v3240 = vsel %vm3238, %v3002, 0
    %v3243 = vsel %vm3238, %v3003, 0
    %3245 = vmatprep.subr.mxu0 0.0
    %3246 = vmatpush1.msra.mxu0 %v3230
    %3247 = vmatprep.subr.mxu0 0.0
    %3248 = vmatpush1.msra.mxu0 %v3231
    %3249 = vmatprep.subr.mxu0 0.0
    %3250 = vmatpush1.msra.mxu0 %v3232
    %3251 = vmatprep.subr.mxu0 0.0
    %3252 = vmatpush1.msra.mxu0 %v3233
    %3253 = vmatprep.subr.mxu0 0.0
    %3254 = vmatpush1.msra.mxu0 %v3234
    %3255 = vmatprep.subr.mxu0 0.0
    %3256 = vmatpush1.msra.mxu0 %v3235
    %3257 = vmatprep.subr.mxu0 0.0
    %3258 = vmatpush1.msra.mxu0 %v3236
    %3259 = vmatprep.subr.mxu0 0.0
    %3260 = vmatpush1.msra.mxu0 %v3237
    %3261 = vmatprep.subr.mxu0 0.0
    %3262 = vmatpush1.msra.mxu0 0.0
    %3263 = vmatprep.subr.mxu0 0.0
    %3264 = vmatpush1.msra.mxu0 0.0
    %3265 = vmatprep.subr.mxu0 0.0
    %3266 = vmatpush1.msra.mxu0 0.0
    %3267 = vmatprep.subr.mxu0 0.0
    %3268 = vmatpush1.msra.mxu0 0.0
    %3269 = vmatprep.subr.mxu0 0.0
    %3270 = vmatpush1.msra.mxu0 0.0
    %3271 = vmatprep.subr.mxu0 0.0
    %3272 = vmatpush1.msra.mxu0 0.0
    %3273 = vmatprep.subr.mxu0 0.0
    %3274 = vmatpush1.msra.mxu0 0.0
    %3275 = vmatprep.subr.mxu0 0.0
    %3276 = vmatpush1.msra.mxu0 0.0
    %3277 = vmatprep.subr.mxu0 0.0
    %3278 = vmatpush1.msra.mxu0 0.0
    %3279 = vmatprep.subr.mxu0 0.0
    %3280 = vmatpush1.msra.mxu0 0.0
    %3281 = vmatprep.subr.mxu0 0.0
    %3282 = vmatpush1.msra.mxu0 0.0
    %3283 = vmatprep.subr.mxu0 0.0
    %3284 = vmatpush1.msra.mxu0 0.0
    %3285 = vmatprep.subr.mxu0 0.0
    %3286 = vmatpush1.msra.mxu0 0.0
    %3287 = vmatprep.subr.mxu0 0.0
    %3288 = vmatpush1.msra.mxu0 0.0
    %3289 = vmatprep.subr.mxu0 0.0
    %3290 = vmatpush1.msra.mxu0 0.0
    %3291 = vmatprep.subr.mxu0 0.0
    %3292 = vmatpush1.msra.mxu0 0.0
    %3293 = vmatprep.subr.mxu0 0.0
    %3294 = vmatpush1.msra.mxu0 0.0
    %3295 = vmatprep.subr.mxu0 0.0
    %3296 = vmatpush1.msra.mxu0 0.0
    %3297 = vmatprep.subr.mxu0 0.0
    %3298 = vmatpush1.msra.mxu0 0.0
    %3299 = vmatprep.subr.mxu0 0.0
    %3300 = vmatpush1.msra.mxu0 0.0
    %3301 = vmatprep.subr.mxu0 0.0
    %3302 = vmatpush1.msra.mxu0 0.0
    %3303 = vmatprep.subr.mxu0 0.0
    %3304 = vmatpush1.msra.mxu0 0.0
    %3305 = vmatprep.subr.mxu0 0.0
    %3306 = vmatpush1.msra.mxu0 0.0
    %3307 = vmatprep.subr.mxu0 0.0
    %3308 = vmatpush1.msra.mxu0 0.0
    %3309 = vmatprep.mubr.f32.mxu0 0.0
    %3310 = vmatmul.mubr.f32.gmra.mrb[0].mxu0 %v3240
    %v3311 = vpop.f32.mrb[0].mxu0
    %v3312 = vadd.f32 0.0, %v3311
    %v3313 = vpop.f32.mrb[0].mxu0
    %3314 = vmatprep.mubr.f32.mxu0 0.0
    %3315 = vmatmul.mubr.f32.gmra.mrb[0].mxu0 %v3243
    %v3316 = vpop.f32.mrb[0].mxu0
    %v3317 = vadd.f32 0.0, %v3316
    %v3318 = vpop.f32.mrb[0].mxu0
    %3319 = vdwg.mxu0
    %v3320 = vadd.f32 %v2658, %v3312
    %v3321 = vadd.f32 %v2659, %v3317
    %v3322 = vld [vmem:[%s15] sm:$0x1]
    %v3324 = vlaneseq
    %v3325 = vshrl.u32 %v3324, 7
    %v3326 = vsub.s32 0, %v3325
    %v3327 = vrot.slane %v3322, %v3326
    %v3329 = vadd.f32 %v3320, %v3327
    %v3330 = vadd.f32 %v3321, %v3327
    %v3331 = vld [vmem:[%s16] sm:$0x1]
    %v3332 = vld [vmem:[%s17] sm:$0x1]
    %v3333 = vsel %vm80, %v3329, 0.0
    %3334 = vadd.xlane.f32.xlu0 %v3333
    %v3335 = vpop.xlane.xlu0 %3334
    %v3336 = vsel %vm80, %v3330, 0.0
    %3337 = vadd.xlane.f32.xlu0 %v3336
    %v3338 = vpop.xlane.xlu0 %3337
    %v3339 = vmul.f32 %v3335, %v2623
    %v3340 = vmul.f32 %v3338, %v2623
    %v3341 = vsub.f32 %v3329, %v3339
    %v3342 = vsub.f32 %v3330, %v3340
    %v3343 = vmul.f32 %v3341, %v3341
    %v3344 = vmul.f32 %v3342, %v3342
    %v3345 = vsel %vm80, %v3343, 0.0
    %3346 = vadd.xlane.f32.xlu0 %v3345
    %v3347 = vpop.xlane.xlu0 %3346
    %v3348 = vsel %vm80, %v3344, 0.0
    %3349 = vadd.xlane.f32.xlu0 %v3348
    %v3350 = vpop.xlane.xlu0 %3349
    %v3351 = vmul.f32 %v3347, %v2623
    %v3352 = vmul.f32 %v3350, %v2623
    %v3353 = vadd.f32 %v3351, 1e-05
    %v3354 = vadd.f32 %v3352, 1e-05
    %v3355 = vrsqrt.pop %v3353
    %v3356 = vrsqrt.pop %v3354
    %v3357 = vmul.f32 %v3341, %v3355
    %v3358 = vmul.f32 %v3342, %v3356
    %v3360 = vlaneseq
    %v3361 = vshrl.u32 %v3360, 7
    %v3362 = vsub.s32 0, %v3361
    %v3363 = vrot.slane %v3331, %v3362
    %v3365 = vmul.f32 %v3357, %v3363
    %v3366 = vmul.f32 %v3358, %v3363
    %v3368 = vlaneseq
    %v3369 = vshrl.u32 %v3368, 7
    %v3370 = vsub.s32 0, %v3369
    %v3371 = vrot.slane %v3332, %v3370
    %v3373 = vadd.f32 %v3365, %v3371
    %v3374 = vadd.f32 %v3366, %v3371
    %s3375 = scalar_lea.vmem %s14, 64
    %v3376 = vld [vmem:[%s3375] sm:$0xff]
    %v3377 = vld [vmem:[%s3375 + $0x8] sm:$0xff]
    %v3378 = vld [vmem:[%s3375 + $0x10] sm:$0xff]
    %v3379 = vld [vmem:[%s3375 + $0x18] sm:$0xff]
    %v3380 = vld [vmem:[%s3375 + $0x20] sm:$0xff]
    %v3381 = vld [vmem:[%s3375 + $0x28] sm:$0xff]
    %v3382 = vld [vmem:[%s3375 + $0x30] sm:$0xff]
    %v3383 = vld [vmem:[%s3375 + $0x38] sm:$0xff]
    %v3385 = vsel %vm3238, %v3226, 0
    %v3388 = vsel %vm3238, %v3227, 0
    %v3391 = vsel %vm3238, %v3228, 0
    %v3394 = vsel %vm3238, %v3229, 0
    %3396 = vmatprep.subr.mxu0 0.0
    %3397 = vmatpush1.msra.mxu0 %v3376
    %3398 = vmatprep.subr.mxu0 0.0
    %3399 = vmatpush1.msra.mxu0 %v3377
    %3400 = vmatprep.subr.mxu0 0.0
    %3401 = vmatpush1.msra.mxu0 %v3378
    %3402 = vmatprep.subr.mxu0 0.0
    %3403 = vmatpush1.msra.mxu0 %v3379
    %3404 = vmatprep.subr.mxu0 0.0
    %3405 = vmatpush1.msra.mxu0 %v3380
    %3406 = vmatprep.subr.mxu0 0.0
    %3407 = vmatpush1.msra.mxu0 %v3381
    %3408 = vmatprep.subr.mxu0 0.0
    %3409 = vmatpush1.msra.mxu0 %v3382
    %3410 = vmatprep.subr.mxu0 0.0
    %3411 = vmatpush1.msra.mxu0 %v3383
    %3412 = vmatprep.subr.mxu0 0.0
    %3413 = vmatpush1.msra.mxu0 0.0
    %3414 = vmatprep.subr.mxu0 0.0
    %3415 = vmatpush1.msra.mxu0 0.0
    %3416 = vmatprep.subr.mxu0 0.0
    %3417 = vmatpush1.msra.mxu0 0.0
    %3418 = vmatprep.subr.mxu0 0.0
    %3419 = vmatpush1.msra.mxu0 0.0
    %3420 = vmatprep.subr.mxu0 0.0
    %3421 = vmatpush1.msra.mxu0 0.0
    %3422 = vmatprep.subr.mxu0 0.0
    %3423 = vmatpush1.msra.mxu0 0.0
    %3424 = vmatprep.subr.mxu0 0.0
    %3425 = vmatpush1.msra.mxu0 0.0
    %3426 = vmatprep.subr.mxu0 0.0
    %3427 = vmatpush1.msra.mxu0 0.0
    %3428 = vmatprep.subr.mxu0 0.0
    %3429 = vmatpush1.msra.mxu0 0.0
    %3430 = vmatprep.subr.mxu0 0.0
    %3431 = vmatpush1.msra.mxu0 0.0
    %3432 = vmatprep.subr.mxu0 0.0
    %3433 = vmatpush1.msra.mxu0 0.0
    %3434 = vmatprep.subr.mxu0 0.0
    %3435 = vmatpush1.msra.mxu0 0.0
    %3436 = vmatprep.subr.mxu0 0.0
    %3437 = vmatpush1.msra.mxu0 0.0
    %3438 = vmatprep.subr.mxu0 0.0
    %3439 = vmatpush1.msra.mxu0 0.0
    %3440 = vmatprep.subr.mxu0 0.0
    %3441 = vmatpush1.msra.mxu0 0.0
    %3442 = vmatprep.subr.mxu0 0.0
    %3443 = vmatpush1.msra.mxu0 0.0
    %3444 = vmatprep.subr.mxu0 0.0
    %3445 = vmatpush1.msra.mxu0 0.0
    %3446 = vmatprep.subr.mxu0 0.0
    %3447 = vmatpush1.msra.mxu0 0.0
    %3448 = vmatprep.subr.mxu0 0.0
    %3449 = vmatpush1.msra.mxu0 0.0
    %3450 = vmatprep.subr.mxu0 0.0
    %3451 = vmatpush1.msra.mxu0 0.0
    %3452 = vmatprep.subr.mxu0 0.0
    %3453 = vmatpush1.msra.mxu0 0.0
    %3454 = vmatprep.subr.mxu0 0.0
    %3455 = vmatpush1.msra.mxu0 0.0
    %3456 = vmatprep.subr.mxu0 0.0
    %3457 = vmatpush1.msra.mxu0 0.0
    %3458 = vmatprep.subr.mxu0 0.0
    %3459 = vmatpush1.msra.mxu0 0.0
    %3460 = vmatprep.mubr.f32.mxu0 0.0
    %3461 = vmatmul.mubr.f32.gmra.mrb[0].mxu0 %v3385
    %v3462 = vpop.f32.mrb[0].mxu0
    %v3463 = vadd.f32 0.0, %v3462
    %v3464 = vpop.f32.mrb[0].mxu0
    %3465 = vmatprep.mubr.f32.mxu0 0.0
    %3466 = vmatmul.mubr.f32.gmra.mrb[0].mxu0 %v3388
    %v3467 = vpop.f32.mrb[0].mxu0
    %v3468 = vadd.f32 0.0, %v3467
    %v3469 = vpop.f32.mrb[0].mxu0
    %3470 = vmatprep.mubr.f32.mxu0 0.0
    %3471 = vmatmul.mubr.f32.gmra.mrb[0].mxu0 %v3391
    %v3472 = vpop.f32.mrb[0].mxu0
    %v3473 = vadd.f32 0.0, %v3472
    %v3474 = vpop.f32.mrb[0].mxu0
    %3475 = vmatprep.mubr.f32.mxu0 0.0
    %3476 = vmatmul.mubr.f32.gmra.mrb[0].mxu0 %v3394
    %v3477 = vpop.f32.mrb[0].mxu0
    %v3478 = vadd.f32 0.0, %v3477
    %v3479 = vpop.f32.mrb[0].mxu0
    %3480 = vdwg.mxu0
    %v3481 = vadd.f32 %v2850, %v3463
    %v3482 = vadd.f32 %v2851, %v3468
    %v3483 = vadd.f32 %v2852, %v3473
    %v3484 = vadd.f32 %v2853, %v3478
    %s3485 = scalar_lea.vmem %s15, 1
    %v3486 = vld [vmem:[%s3485] sm:$0x1]
    %v3488 = vlaneseq
    %v3489 = vshrl.u32 %v3488, 7
    %v3490 = vsub.s32 0, %v3489
    %v3491 = vrot.slane %v3486, %v3490
    %v3493 = vadd.f32 %v3481, %v3491
    %v3494 = vadd.f32 %v3482, %v3491
    %v3495 = vadd.f32 %v3483, %v3491
    %v3496 = vadd.f32 %v3484, %v3491
    %s3497 = scalar_lea.vmem %s16, 1
    %v3498 = vld [vmem:[%s3497] sm:$0x1]
    %s3499 = scalar_lea.vmem %s17, 1
    %v3500 = vld [vmem:[%s3499] sm:$0x1]
    %v3501 = vsel %vm80, %v3493, 0.0
    %3502 = vadd.xlane.f32.xlu0 %v3501
    %v3503 = vpop.xlane.xlu0 %3502
    %v3504 = vsel %vm80, %v3494, 0.0
    %3505 = vadd.xlane.f32.xlu0 %v3504
    %v3506 = vpop.xlane.xlu0 %3505
    %v3507 = vsel %vm80, %v3495, 0.0
    %3508 = vadd.xlane.f32.xlu0 %v3507
    %v3509 = vpop.xlane.xlu0 %3508
    %v3510 = vsel %vm80, %v3496, 0.0
    %3511 = vadd.xlane.f32.xlu0 %v3510
    %v3512 = vpop.xlane.xlu0 %3511
    %v3513 = vmul.f32 %v3503, %v2623
    %v3514 = vmul.f32 %v3506, %v2623
    %v3515 = vmul.f32 %v3509, %v2623
    %v3516 = vmul.f32 %v3512, %v2623
    %v3517 = vsub.f32 %v3493, %v3513
    %v3518 = vsub.f32 %v3494, %v3514
    %v3519 = vsub.f32 %v3495, %v3515
    %v3520 = vsub.f32 %v3496, %v3516
    %v3521 = vmul.f32 %v3517, %v3517
    %v3522 = vmul.f32 %v3518, %v3518
    %v3523 = vmul.f32 %v3519, %v3519
    %v3524 = vmul.f32 %v3520, %v3520
    %v3525 = vsel %vm80, %v3521, 0.0
    %3526 = vadd.xlane.f32.xlu0 %v3525
    %v3527 = vpop.xlane.xlu0 %3526
    %v3528 = vsel %vm80, %v3522, 0.0
    %3529 = vadd.xlane.f32.xlu0 %v3528
    %v3530 = vpop.xlane.xlu0 %3529
    %v3531 = vsel %vm80, %v3523, 0.0
    %3532 = vadd.xlane.f32.xlu0 %v3531
    %v3533 = vpop.xlane.xlu0 %3532
    %v3534 = vsel %vm80, %v3524, 0.0
    %3535 = vadd.xlane.f32.xlu0 %v3534
    %v3536 = vpop.xlane.xlu0 %3535
    %v3537 = vmul.f32 %v3527, %v2623
    %v3538 = vmul.f32 %v3530, %v2623
    %v3539 = vmul.f32 %v3533, %v2623
    %v3540 = vmul.f32 %v3536, %v2623
    %v3541 = vadd.f32 %v3537, 1e-05
    %v3542 = vadd.f32 %v3538, 1e-05
    %v3543 = vadd.f32 %v3539, 1e-05
    %v3544 = vadd.f32 %v3540, 1e-05
    %v3545 = vrsqrt.pop %v3541
    %v3546 = vrsqrt.pop %v3542
    %v3547 = vrsqrt.pop %v3543
    %v3548 = vrsqrt.pop %v3544
    %v3549 = vmul.f32 %v3517, %v3545
    %v3550 = vmul.f32 %v3518, %v3546
    %v3551 = vmul.f32 %v3519, %v3547
    %v3552 = vmul.f32 %v3520, %v3548
    %v3554 = vlaneseq
    %v3555 = vshrl.u32 %v3554, 7
    %v3556 = vsub.s32 0, %v3555
    %v3557 = vrot.slane %v3498, %v3556
    %v3559 = vmul.f32 %v3549, %v3557
    %v3560 = vmul.f32 %v3550, %v3557
    %v3561 = vmul.f32 %v3551, %v3557
    %v3562 = vmul.f32 %v3552, %v3557
    %v3564 = vlaneseq
    %v3565 = vshrl.u32 %v3564, 7
    %v3566 = vsub.s32 0, %v3565
    %v3567 = vrot.slane %v3500, %v3566
    %v3569 = vadd.f32 %v3559, %v3567
    %v3570 = vadd.f32 %v3560, %v3567
    %v3571 = vadd.f32 %v3561, %v3567
    %v3572 = vadd.f32 %v3562, %v3567
    %3573 = vst.msk [vmem:[#allocation2] sm:$0xff] %vm80, %v3373
    %3574 = vst.msk [vmem:[#allocation2 + $0x8] sm:$0xff] %vm80, %v3374
    %3575 = vst.msk [vmem:[#allocation4] sm:$0xff] %vm80, %v3569
    %3576 = vst.msk [vmem:[#allocation4 + $0x8] sm:$0xff] %vm80, %v3570
    %3577 = vst.msk [vmem:[#allocation4 + $0x10] sm:$0xff] %vm80, %v3571
    %3578 = vst.msk [vmem:[#allocation4 + $0x18] sm:$0xff] %vm80, %v3572
    // Predicated region
    $region74: #{combined_encoder_layer.1} parent=1 // pred_check
      _
    $region75: #{combined_encoder_layer.1} parent=1 // pred_check_branch
      %3580 = sbr.rel (0) target = $region77
    $region76: #{combined_encoder_layer.1} parent=1 // pred_region
      %s3582 = ssub.s32 256, 256
      %3583 = vsyncadd [#allocation3], %s3582
      %s3584 = sshll.u32 [#allocation2], 4
      %s3585 = int_to_ptr.vmem [resolvable:$true] %s3584
      %3590 = dma.vmem_to_hbm [thread:$0]  %s3585, 256, %s18, [#allocation3], 128, 128, 8
    $region77: #{combined_encoder_layer.1} parent=1 // pred_fallthru
      _
    // Predicated region
    $region78: #{combined_encoder_layer.1} parent=1 // pred_check
      _
    $region79: #{combined_encoder_layer.1} parent=1 // pred_check_branch
      %3592 = sbr.rel (0) target = $region81
    $region80: #{combined_encoder_layer.1} parent=1 // pred_region
      %s3594 = ssub.s32 512, 512
      %3595 = vsyncadd [#allocation5], %s3594
      %s3596 = sshll.u32 [#allocation4], 4
      %s3597 = int_to_ptr.vmem [resolvable:$true] %s3596
      %3602 = dma.vmem_to_hbm [thread:$0]  %s3597, 512, %s19, [#allocation5], 128, 128, 8
    $region81: #{combined_encoder_layer.1} parent=1 // pred_fallthru
      _
    // Predicated region
    $region82: #{combined_encoder_layer.1} parent=1 // pred_check
      _
    $region83: #{combined_encoder_layer.1} parent=1 // pred_check_branch
      %3604 = sbr.rel (0) target = $region85
    $region84: #{combined_encoder_layer.1} parent=1 // pred_region
      %3605 = dma.done [#allocation3], 256
    $region85: #{combined_encoder_layer.1} parent=1 // pred_fallthru
      _
    // Predicated region
    $region86: #{combined_encoder_layer.1} parent=1 // pred_check
      _
    $region87: #{combined_encoder_layer.1} parent=1 // pred_check_branch
      %3607 = sbr.rel (0) target = $region89
    $region88: #{combined_encoder_layer.1} parent=1 // pred_region
      %3608 = dma.done [#allocation5], 512
    $region89: #{combined_encoder_layer.1} parent=1 // pred_fallthru
      _
    %3609 = vsyncpa [#allocation3], 1
    %3610 = vsyncpa [#allocation5], 1

</llo_original>
